<compile_context>
chip_gen: v6e
topology: v6e:2x2x1
jax: 0.10.0
libtpu: 0.0.40
codegen_flags: <defaults>
</compile_context>

<pallas_src>
import jax
import jax.numpy as jnp
from jax import lax
from jax.experimental import pallas as pl
from jax.experimental.pallas import tpu as pltpu


# ----------------------------------------------------------------------------
# Kernel 1: fused per-hand GCN network.  grid = (2 hands,), whole batch/program
# ----------------------------------------------------------------------------

def _make_gcn_kernel(B, T, J, D, R):
    S = 2 * T
    ln_cnt = float(J * D * S)          # nn.LayerNorm([D, J, 2T]) element count

    def kernel(x_ref, wls_ref, wts_ref, bs_ref,
               wlr_ref, wtr_ref, br_ref, gr_ref, ber_ref,
               wle_ref, wte_ref, be_ref, o_ref):
        f32 = jnp.float32

        def mm(a, b):
            return jnp.dot(a, b, preferred_element_type=f32)

        def per_sample_ln_scale(g, blk, n_elem):
            # Single-pass per-sample stats over the whole (rows x blk) slab;
            # columns are batch-major blocks of width `blk`.
            means, rstds = [], []
            for b in range(B):
                slab = g[:, b * blk:(b + 1) * blk]
                s1 = jnp.sum(slab)
                s2 = jnp.sum(slab * slab)
                m = s1 / n_elem
                v = s2 / n_elem - m * m
                means.append(jnp.broadcast_to(m, (1, blk)))
                rstds.append(jnp.broadcast_to(lax.rsqrt(v + 1e-5), (1, blk)))
            return (jnp.concatenate(means, axis=1),
                    jnp.concatenate(rstds, axis=1))

        x = x_ref[0]                                              # (J*3, B*T)

        # start GCN: spatial+feature fused left matmul, batch-block-diag
        # temporal right matmul, time bias broadcast over rows.
        y0 = mm(mm(wls_ref[0], x), wts_ref[0]) + bs_ref[0]        # (J*D, B*T)

        # duplicate along time, per sample -> (J*D, B*2T)
        y = jnp.concatenate(
            [y0[:, b * T:(b + 1) * T] for b in range(B) for _ in range(2)],
            axis=1)

        # residual GCN blocks: gcn -> LayerNorm([D,J,2T]) -> tanh -> +residual
        for r in range(R):
            g = mm(mm(wlr_ref[0, r], y), wtr_ref[0, r]) + br_ref[0, r]
            mean, rstd = per_sample_ln_scale(g, S, ln_cnt)
            g = (g - mean) * rstd * gr_ref[0, r] + ber_ref[0, r]
            # TODO(synk): gcn_dropout is eval-mode identity (inference parity).
            y = jnp.tanh(g) + y                                   # (J*D, B*2T)

        # first T timesteps of each sample, then concat with start features
        y_t = jnp.concatenate([y[:, b * S:b * S + T] for b in range(B)],
                              axis=1)                             # (J*D, B*T)
        cat = jnp.concatenate([y_t, y0], axis=0)                  # (2*J*D, B*T)

        # end GCN -> output already in kernel-2 layout: rows (j, d), cols (b, t)
        out = mm(mm(wle_ref[0], cat), wte_ref[0]) + be_ref[0]     # (J*D, B*T)
        o_ref[0] = out

    return kernel


def _hand_spec(a):
    nd = a.ndim
    return pl.BlockSpec((1,) + tuple(a.shape[1:]),
                        lambda h, _nd=nd: (h,) + (0,) * (_nd - 1))


def hand_gcn_forward(x_hands, gp, *, B, T, J, D, R):
    """x_hands: (2, J*3, B*T) -> per-hand GCN features (2, J*D, B*T)."""
    names = ("wls", "wts", "bs", "wlr", "wtr", "br", "gr", "ber",
             "wle", "wte", "be")
    arrs = [x_hands] + [gp[k] for k in names]
    return pl.pallas_call(
        _make_gcn_kernel(B, T, J, D, R),
        grid=(2,),
        in_specs=[_hand_spec(a) for a in arrs],
        out_specs=pl.BlockSpec((1, J * D, B * T), lambda h: (h, 0, 0)),
        out_shape=jax.ShapeDtypeStruct((2, J * D, B * T), jnp.float32),
        compiler_params=pltpu.CompilerParams(
            dimension_semantics=("parallel",)),
    )(*arrs)


# ----------------------------------------------------------------------------
# Kernel 2: head CNN + [lf, rf, hf] concat + recognition CNN, whole batch,
#           single program, activations laid out as (channels, B*T).
# ----------------------------------------------------------------------------

def _make_rec_kernel(B, T):
    BT = B * T

    def kernel(hf_ref, head_ref,
               hw1, hb1, hg1, hbe1, hw2, hb2, hg2, hbe2, hw3, hb3,
               rw1, rb1, rg1, rbe1, rw2, rb2, o_ref):
        f32 = jnp.float32
        tpos = lax.broadcasted_iota(jnp.int32, (1, BT), 1) % T
        first = tpos == 0
        last = tpos == (T - 1)

        def conv(x, w_ref, b_ref):
            # Conv1d(k=3, padding=1, padding_mode='replicate').  Per-sample
            # boundaries fixed with iota masks; one (3*Cin, Cout) matmul.
            lft = jnp.concatenate([x[:, :1], x[:, :BT - 1]], axis=1)
            rgt = jnp.concatenate([x[:, 1:], x[:, BT - 1:]], axis=1)
            lft = jnp.where(first, x, lft)
            rgt = jnp.where(last, x, rgt)
            stk = jnp.concatenate([lft, x, rgt], axis=0)          # (3*Cin, BT)
            return lax.dot_general(w_ref[...], stk, (((0,), (0,)), ((), ())),
                                   preferred_element_type=f32) + b_ref[...]

        def ln(x, g_ref, b_ref):
            # nn.LayerNorm([C, T]) applied per sample on (C, B*T) columns;
            # single-pass stats (sum + sum of squares).
            gamma = g_ref[...]
            n_elem = float(gamma.shape[0] * T)
            means, rstds = [], []
            for b in range(B):
                slab = x[:, b * T:(b + 1) * T]
                s1 = jnp.sum(slab)
                s2 = jnp.sum(slab * slab)
                m = s1 / n_elem
                v = s2 / n_elem - m * m
                means.append(jnp.broadcast_to(m, (1, T)))
                rstds.append(jnp.broadcast_to(lax.rsqrt(v + 1e-5), (1, T)))
            mean = jnp.concatenate(means, axis=1)
            rstd = jnp.concatenate(rstds, axis=1)
            return (x - mean) * rstd * gamma + b_ref[...]

        # head CNN
        h = jnp.tanh(ln(conv(head_ref[...], hw1, hb1), hg1, hbe1))
        h = jnp.tanh(ln(conv(h, hw2, hb2), hg2, hbe2))
        h = jnp.tanh(conv(h, hw3, hb3))                           # (Ch, B*T)

        # channel concat: [left hand J*D, right hand J*D, head Ch]
        feats = jnp.concatenate([hf_ref[0], hf_ref[1], h], axis=0)

        # recognition CNN
        z = jnp.tanh(ln(conv(feats, rw1, rb1), rg1, rbe1))
        z = conv(z, rw2, rb2)                                     # (2, B*T)
        o_ref[...] = z

    return kernel


def _full_spec(a):
    nd = a.ndim
    return pl.BlockSpec(tuple(a.shape), lambda i, _nd=nd: (0,) * _nd)


def rec_forward(hand_feats, head_bt, cp, *, B, T):
    """hand_feats: (2, J*D, B*T); head_bt: (3, B*T) -> logits (2, B*T)."""
    wkeys = ("hw1", "hb1", "hg1", "hbe1", "hw2", "hb2", "hg2", "hbe2",
             "hw3", "hb3", "rw1", "rb1", "rg1", "rbe1", "rw2", "rb2")
    arrs = [hand_feats, head_bt] + [cp[k] for k in wkeys]
    return pl.pallas_call(
        _make_rec_kernel(B, T),
        grid=(1,),
        in_specs=[_full_spec(a) for a in arrs],
        out_specs=pl.BlockSpec((2, B * T), lambda i: (0, 0)),
        out_shape=jax.ShapeDtypeStruct((2, B * T), jnp.float32),
        compiler_params=pltpu.CompilerParams(
            dimension_semantics=("arbitrary",)),
    )(*arrs)


# ----------------------------------------------------------------------------
# Forward pass (host side only slices / stacks inputs; no inter-kernel permute)
# ----------------------------------------------------------------------------

def attended_hand_recognition_forward(src, params, cfg):
    B, T, _ = src.shape
    bj, hj = cfg["body_joint_number"], cfg["hand_joint_number"]
    J = bj + hj
    D = cfg["gcn_latent_features"]
    R = cfg["residual_gcns_num"]

    body = src[:, :, :bj * 3]
    left = src[:, :, bj * 3:(bj + hj) * 3]
    right = src[:, :, (bj + hj) * 3:(bj + 2 * hj) * 3]
    head = src[:, :, (bj + 2 * hj) * 3:(bj + 2 * hj + 1) * 3]

    def prep(hand):
        joints = jnp.concatenate([hand, body], axis=2)            # (B, T, J*3)
        # rows = (joint, xyz), columns = (batch, time)  [kernel-1 layout]
        return jnp.transpose(joints, (2, 0, 1)).reshape(J * 3, B * T)

    x_hands = jnp.stack([prep(left), prep(right)], axis=0)        # (2, J*3, B*T)
    hf = hand_gcn_forward(x_hands, params["gcn"], B=B, T=T, J=J, D=D, R=R)
    head_bt = jnp.transpose(head, (2, 0, 1)).reshape(3, B * T)    # (3, B*T)
    pred = rec_forward(hf, head_bt, params["cnn"], B=B, T=T)      # (2, B*T)
    return jnp.transpose(pred.reshape(2, B, T), (1, 2, 0))        # (B, T, 2)


# ----------------------------------------------------------------------------
# Deterministic parameter init + host-side packing into kernel layouts.
# (Packed weights are prepared for a fixed batch size; re-packing is a cheap,
#  host-side, one-time operation.)
# ----------------------------------------------------------------------------

def init_params(key, cfg, batch_size):
    T = cfg["seq_len"]
    S = 2 * T
    J = cfg["body_joint_number"] + cfg["hand_joint_number"]
    D = cfg["gcn_latent_features"]
    R = cfg["residual_gcns_num"]
    Ch = cfg["head_cnn_channels"]
    Cr = cfg["recognition_cnn_channels"]
    B = batch_size

    kit = iter(jax.random.split(key, 128))

    def u(shape):
        return jax.random.uniform(next(kit), shape, jnp.float32,
                                  minval=-0.1, maxval=0.1)

    eye_b = jnp.eye(B, dtype=jnp.float32)

    def pack_left(ws, wf):
        # combined spatial(+)feature contraction: rows (j, d_out) <- (j, c_in)
        return jnp.kron(ws.T, wf.T)

    def pack_time(wt):
        # temporal contraction, block-diagonal over batch-major column blocks
        return jnp.kron(eye_b, wt)

    def tile_cols(x):
        return jnp.tile(x, (1, B))

    # --- per-hand GCN parameters (structure assumed; see TODO at top) -------
    gcn = {k: [] for k in ("wls", "wts", "bs", "wlr", "wtr", "br",
                           "gr", "ber", "wle", "wte", "be")}
    for _hand in range(2):
        ws_s, wf_s, wt_s, b_s = u((J, J)), u((3, D)), u((T, T)), u((1, T))
        gcn["wls"].append(pack_left(ws_s, wf_s))                  # (J*D, J*3)
        gcn["wts"].append(pack_time(wt_s))                        # (B*T, B*T)
        gcn["bs"].append(tile_cols(b_s))                          # (1, B*T)

        wlr, wtr, br, gr, ber = [], [], [], [], []
        for _r in range(R):
            ws_r, wf_r, wt_r, b_r = u((J, J)), u((D, D)), u((S, S)), u((1, S))
            wlr.append(pack_left(ws_r, wf_r))                     # (J*D, J*D)
            wtr.append(pack_time(wt_r))                           # (B*S, B*S)
            br.append(tile_cols(b_r))                             # (1, B*S)
            # LayerNorm([D, J, 2T]) affine (ones/zeros), batch-column tiled
            gr.append(jnp.ones((J * D, B * S), jnp.float32))
            ber.append(jnp.zeros((J * D, B * S), jnp.float32))
        gcn["wlr"].append(jnp.stack(wlr))
        gcn["wtr"].append(jnp.stack(wtr))
        gcn["br"].append(jnp.stack(br))
        gcn["gr"].append(jnp.stack(gr))
        gcn["ber"].append(jnp.stack(ber))

        ws_e, wf_e, wt_e, b_e = u((J, J)), u((2 * D, D)), u((T, T)), u((1, T))
        # end-GCN left matmul columns = [residual-stream (j,d); start (j,d)]
        wle = jnp.concatenate([pack_left(ws_e, wf_e[:D]),
                               pack_left(ws_e, wf_e[D:])], axis=1)
        gcn["wle"].append(wle)                                    # (J*D, 2*J*D)
        gcn["wte"].append(pack_time(wt_e))                        # (B*T, B*T)
        gcn["be"].append(tile_cols(b_e))                          # (1, B*T)
    gcn = {k: jnp.stack(v) for k, v in gcn.items()}               # leading dim 2

    # --- CNN parameters ------------------------------------------------------
    def conv_w(cout, cin):
        # PyTorch Conv1d weight (Cout, Cin, 3) -> (3*Cin, Cout) slab,
        # rows ordered tap-major (t-1, t, t+1), input-channel minor.
        w = u((cout, cin, 3))
        return jnp.transpose(w, (2, 1, 0)).reshape(3 * cin, cout)

    cin_rec = 2 * J * D + Ch
    cnn = dict(
        hw1=conv_w(Ch, 3), hb1=u((Ch, 1)),
        hg1=jnp.ones((Ch, B * T), jnp.float32),
        hbe1=jnp.zeros((Ch, B * T), jnp.float32),
        hw2=conv_w(Ch, Ch), hb2=u((Ch, 1)),
        hg2=jnp.ones((Ch, B * T), jnp.float32),
        hbe2=jnp.zeros((Ch, B * T), jnp.float32),
        hw3=conv_w(Ch, Ch), hb3=u((Ch, 1)),
        rw1=conv_w(Cr, cin_rec), rb1=u((Cr, 1)),
        rg1=jnp.ones((Cr, B * T), jnp.float32),
        rbe1=jnp.zeros((Cr, B * T), jnp.float32),
        rw2=conv_w(2, Cr), rb2=u((2, 1)),
    )
    return dict(gcn=gcn, cnn=cnn)


# ----------------------------------------------------------------------------
# Main
# ----------------------------------------------------------------------------

if __name__ == "__main__":
    cfg = dict(
        body_joint_number=3,
        hand_joint_number=2,
        seq_len=8,
        gcn_latent_features=8,
        residual_gcns_num=2,
        gcn_dropout=0.3,           # eval-mode identity
        head_cnn_channels=16,
        recognition_cnn_channels=16,
    )
    B = 2
    T = cfg["seq_len"]
    F = (cfg["body_joint_number"] + 2 * cfg["hand_joint_number"] + 1) * 3   # 24

    key = jax.random.PRNGKey(0)
    k_src, k_params = jax.random.split(key)
    src = jax.random.normal(k_src, (B, T, F), jnp.float32)
    params = init_params(k_params, cfg, batch_size=B)

    fwd = jax.jit(lambda s, p: attended_hand_recognition_forward(s, p, cfg))
    out = jax.block_until_ready(fwd(src, params))
    assert out.shape == (B, T, 2), out.shape
    assert bool(jnp.all(jnp.isfinite(out)))
    print("KERNEL_OK")
</pallas_src>

<mosaic_0001>
module attributes {stable_mosaic.version = 11 : i64} {
  func.func @kernel(%arg0: i32, %arg1: memref<1x15x16xf32, #tpu.memory_space<vmem>>, %arg2: memref<1x40x15xf32, #tpu.memory_space<vmem>>, %arg3: memref<1x16x16xf32, #tpu.memory_space<vmem>>, %arg4: memref<1x1x16xf32, #tpu.memory_space<vmem>>, %arg5: memref<1x2x40x40xf32, #tpu.memory_space<vmem>>, %arg6: memref<1x2x32x32xf32, #tpu.memory_space<vmem>>, %arg7: memref<1x2x1x32xf32, #tpu.memory_space<vmem>>, %arg8: memref<1x2x40x32xf32, #tpu.memory_space<vmem>>, %arg9: memref<1x2x40x32xf32, #tpu.memory_space<vmem>>, %arg10: memref<1x40x80xf32, #tpu.memory_space<vmem>>, %arg11: memref<1x16x16xf32, #tpu.memory_space<vmem>>, %arg12: memref<1x1x16xf32, #tpu.memory_space<vmem>>, %arg13: memref<1x40x16xf32, #tpu.memory_space<vmem>>) attributes {dimension_semantics = [#tpu.dimension_semantics<parallel>], iteration_bounds = array<i64: 2>, scalar_prefetch = 0 : i64, scratch_operands = 0 : i64, tpu.core_type = #tpu.core_type<tc>, window_params = [{transform_indices = @transform_0, window_bounds = array<i64: 1, 15, 16>}, {transform_indices = @transform_1, window_bounds = array<i64: 1, 40, 15>}, {transform_indices = @transform_2, window_bounds = array<i64: 1, 16, 16>}, {transform_indices = @transform_3, window_bounds = array<i64: 1, 1, 16>}, {transform_indices = @transform_4, window_bounds = array<i64: 1, 2, 40, 40>}, {transform_indices = @transform_5, window_bounds = array<i64: 1, 2, 32, 32>}, {transform_indices = @transform_6, window_bounds = array<i64: 1, 2, 1, 32>}, {transform_indices = @transform_7, window_bounds = array<i64: 1, 2, 40, 32>}, {transform_indices = @transform_8, window_bounds = array<i64: 1, 2, 40, 32>}, {transform_indices = @transform_9, window_bounds = array<i64: 1, 40, 80>}, {transform_indices = @transform_10, window_bounds = array<i64: 1, 16, 16>}, {transform_indices = @transform_11, window_bounds = array<i64: 1, 1, 16>}, {transform_indices = @transform_12, window_bounds = array<i64: 1, 40, 16>}]} {
    %c0 = arith.constant 0 : index
    %c0_0 = arith.constant 0 : index
    %c0_1 = arith.constant 0 : index
    %0 = vector.load %arg1[%c0, %c0_0, %c0_1] : memref<1x15x16xf32, #tpu.memory_space<vmem>>, vector<1x15x16xf32>
    %1 = vector.shape_cast %0 : vector<1x15x16xf32> to vector<15x16xf32>
    %c0_2 = arith.constant 0 : index
    %c0_3 = arith.constant 0 : index
    %c0_4 = arith.constant 0 : index
    %2 = vector.load %arg2[%c0_2, %c0_3, %c0_4] : memref<1x40x15xf32, #tpu.memory_space<vmem>>, vector<1x40x15xf32>
    %3 = vector.shape_cast %2 : vector<1x40x15xf32> to vector<40x15xf32>
    %cst = arith.constant dense<0.000000e+00> : vector<40x16xf32>
    %4 = tpu.matmul %3, %1, %cst {dimension_numbers = #tpu.dot_dimension_numbers<[1], [0], [0], [1], [0, 0, 1, 1], [], []>} : vector<40x15xf32>, vector<15x16xf32>, vector<40x16xf32> -> vector<40x16xf32>
    %c0_5 = arith.constant 0 : index
    %c0_6 = arith.constant 0 : index
    %c0_7 = arith.constant 0 : index
    %5 = vector.load %arg3[%c0_5, %c0_6, %c0_7] : memref<1x16x16xf32, #tpu.memory_space<vmem>>, vector<1x16x16xf32>
    %6 = vector.shape_cast %5 : vector<1x16x16xf32> to vector<16x16xf32>
    %cst_8 = arith.constant dense<0.000000e+00> : vector<40x16xf32>
    %7 = tpu.matmul %4, %6, %cst_8 {dimension_numbers = #tpu.dot_dimension_numbers<[1], [0], [0], [1], [0, 0, 1, 1], [], []>} : vector<40x16xf32>, vector<16x16xf32>, vector<40x16xf32> -> vector<40x16xf32>
    %c0_9 = arith.constant 0 : index
    %c0_10 = arith.constant 0 : index
    %c0_11 = arith.constant 0 : index
    %8 = vector.load %arg4[%c0_9, %c0_10, %c0_11] : memref<1x1x16xf32, #tpu.memory_space<vmem>>, vector<1x1x16xf32>
    %9 = vector.shape_cast %8 : vector<1x1x16xf32> to vector<1x16xf32>
    %10 = vector.broadcast %9 : vector<1x16xf32> to vector<40x16xf32>
    %11 = arith.addf %7, %10 : vector<40x16xf32>
    %12 = vector.extract_strided_slice %11 {offsets = [0, 0], sizes = [40, 8], strides = [1, 1]} : vector<40x16xf32> to vector<40x8xf32>
    %13 = vector.extract_strided_slice %11 {offsets = [0, 0], sizes = [40, 8], strides = [1, 1]} : vector<40x16xf32> to vector<40x8xf32>
    %14 = vector.extract_strided_slice %11 {offsets = [0, 8], sizes = [40, 8], strides = [1, 1]} : vector<40x16xf32> to vector<40x8xf32>
    %15 = vector.extract_strided_slice %11 {offsets = [0, 8], sizes = [40, 8], strides = [1, 1]} : vector<40x16xf32> to vector<40x8xf32>
    %16 = tpu.concatenate %12, %13, %14, %15 in 1 : vector<40x8xf32>, vector<40x8xf32>, vector<40x8xf32>, vector<40x8xf32> -> vector<40x32xf32>
    %c0_12 = arith.constant 0 : index
    %c0_13 = arith.constant 0 : index
    %c0_14 = arith.constant 0 : index
    %c0_15 = arith.constant 0 : index
    %17 = vector.load %arg5[%c0_12, %c0_13, %c0_14, %c0_15] : memref<1x2x40x40xf32, #tpu.memory_space<vmem>>, vector<1x1x40x40xf32>
    %18 = vector.shape_cast %17 : vector<1x1x40x40xf32> to vector<40x40xf32>
    %cst_16 = arith.constant dense<0.000000e+00> : vector<40x32xf32>
    %19 = tpu.matmul %18, %16, %cst_16 {dimension_numbers = #tpu.dot_dimension_numbers<[1], [0], [0], [1], [0, 0, 1, 1], [], []>} : vector<40x40xf32>, vector<40x32xf32>, vector<40x32xf32> -> vector<40x32xf32>
    %c0_17 = arith.constant 0 : index
    %c0_18 = arith.constant 0 : index
    %c0_19 = arith.constant 0 : index
    %c0_20 = arith.constant 0 : index
    %20 = vector.load %arg6[%c0_17, %c0_18, %c0_19, %c0_20] : memref<1x2x32x32xf32, #tpu.memory_space<vmem>>, vector<1x1x32x32xf32>
    %21 = vector.shape_cast %20 : vector<1x1x32x32xf32> to vector<32x32xf32>
    %cst_21 = arith.constant dense<0.000000e+00> : vector<40x32xf32>
    %22 = tpu.matmul %19, %21, %cst_21 {dimension_numbers = #tpu.dot_dimension_numbers<[1], [0], [0], [1], [0, 0, 1, 1], [], []>} : vector<40x32xf32>, vector<32x32xf32>, vector<40x32xf32> -> vector<40x32xf32>
    %c0_22 = arith.constant 0 : index
    %c0_23 = arith.constant 0 : index
    %c0_24 = arith.constant 0 : index
    %c0_25 = arith.constant 0 : index
    %23 = vector.load %arg7[%c0_22, %c0_23, %c0_24, %c0_25] : memref<1x2x1x32xf32, #tpu.memory_space<vmem>>, vector<1x1x1x32xf32>
    %24 = vector.shape_cast %23 : vector<1x1x1x32xf32> to vector<1x32xf32>
    %25 = vector.broadcast %24 : vector<1x32xf32> to vector<40x32xf32>
    %26 = arith.addf %22, %25 : vector<40x32xf32>
    %27 = vector.extract_strided_slice %26 {offsets = [0, 0], sizes = [40, 16], strides = [1, 1]} : vector<40x32xf32> to vector<40x16xf32>
    %28 = vector.shape_cast %27 : vector<40x16xf32> to vector<1x40x16xf32>
    %cst_26 = arith.constant dense<0.000000e+00> : vector<1xf32>
    %29 = vector.multi_reduction <add>, %28, %cst_26 [1, 2] : vector<1x40x16xf32> to vector<1xf32>
    %30 = vector.shape_cast %29 : vector<1xf32> to vector<1x1x1xf32>
    %31 = vector.extract %30[0, 0, 0] : f32 from vector<1x1x1xf32>
    %32 = arith.mulf %27, %27 : vector<40x16xf32>
    %33 = vector.shape_cast %32 : vector<40x16xf32> to vector<1x40x16xf32>
    %cst_27 = arith.constant dense<0.000000e+00> : vector<1xf32>
    %34 = vector.multi_reduction <add>, %33, %cst_27 [1, 2] : vector<1x40x16xf32> to vector<1xf32>
    %35 = vector.shape_cast %34 : vector<1xf32> to vector<1x1x1xf32>
    %36 = vector.extract %35[0, 0, 0] : f32 from vector<1x1x1xf32>
    %cst_28 = arith.constant 6.400000e+02 : f32
    %37 = arith.divf %31, %cst_28 : f32
    %cst_29 = arith.constant 6.400000e+02 : f32
    %38 = arith.divf %36, %cst_29 : f32
    %39 = arith.mulf %37, %37 : f32
    %40 = arith.subf %38, %39 : f32
    %41 = vector.broadcast %37 : f32 to vector<1x16xf32>
    %cst_30 = arith.constant 9.99999974E-6 : f32
    %42 = arith.addf %40, %cst_30 : f32
    %43 = math.rsqrt %42 : f32
    %44 = vector.broadcast %43 : f32 to vector<1x16xf32>
    %45 = vector.extract_strided_slice %26 {offsets = [0, 16], sizes = [40, 16], strides = [1, 1]} : vector<40x32xf32> to vector<40x16xf32>
    %46 = vector.shape_cast %45 : vector<40x16xf32> to vector<1x40x16xf32>
    %cst_31 = arith.constant dense<0.000000e+00> : vector<1xf32>
    %47 = vector.multi_reduction <add>, %46, %cst_31 [1, 2] : vector<1x40x16xf32> to vector<1xf32>
    %48 = vector.shape_cast %47 : vector<1xf32> to vector<1x1x1xf32>
    %49 = vector.extract %48[0, 0, 0] : f32 from vector<1x1x1xf32>
    %50 = arith.mulf %45, %45 : vector<40x16xf32>
    %51 = vector.shape_cast %50 : vector<40x16xf32> to vector<1x40x16xf32>
    %cst_32 = arith.constant dense<0.000000e+00> : vector<1xf32>
    %52 = vector.multi_reduction <add>, %51, %cst_32 [1, 2] : vector<1x40x16xf32> to vector<1xf32>
    %53 = vector.shape_cast %52 : vector<1xf32> to vector<1x1x1xf32>
    %54 = vector.extract %53[0, 0, 0] : f32 from vector<1x1x1xf32>
    %cst_33 = arith.constant 6.400000e+02 : f32
    %55 = arith.divf %49, %cst_33 : f32
    %cst_34 = arith.constant 6.400000e+02 : f32
    %56 = arith.divf %54, %cst_34 : f32
    %57 = arith.mulf %55, %55 : f32
    %58 = arith.subf %56, %57 : f32
    %59 = vector.broadcast %55 : f32 to vector<1x16xf32>
    %cst_35 = arith.constant 9.99999974E-6 : f32
    %60 = arith.addf %58, %cst_35 : f32
    %61 = math.rsqrt %60 : f32
    %62 = vector.broadcast %61 : f32 to vector<1x16xf32>
    %63 = tpu.concatenate %41, %59 in 1 : vector<1x16xf32>, vector<1x16xf32> -> vector<1x32xf32>
    %64 = tpu.concatenate %44, %62 in 1 : vector<1x16xf32>, vector<1x16xf32> -> vector<1x32xf32>
    %65 = vector.broadcast %63 : vector<1x32xf32> to vector<40x32xf32>
    %66 = arith.subf %26, %65 : vector<40x32xf32>
    %67 = vector.broadcast %64 : vector<1x32xf32> to vector<40x32xf32>
    %68 = arith.mulf %66, %67 : vector<40x32xf32>
    %c0_36 = arith.constant 0 : index
    %c0_37 = arith.constant 0 : index
    %c0_38 = arith.constant 0 : index
    %c0_39 = arith.constant 0 : index
    %69 = vector.load %arg8[%c0_36, %c0_37, %c0_38, %c0_39] : memref<1x2x40x32xf32, #tpu.memory_space<vmem>>, vector<1x1x40x32xf32>
    %70 = vector.shape_cast %69 : vector<1x1x40x32xf32> to vector<40x32xf32>
    %71 = arith.mulf %68, %70 : vector<40x32xf32>
    %c0_40 = arith.constant 0 : index
    %c0_41 = arith.constant 0 : index
    %c0_42 = arith.constant 0 : index
    %c0_43 = arith.constant 0 : index
    %72 = vector.load %arg9[%c0_40, %c0_41, %c0_42, %c0_43] : memref<1x2x40x32xf32, #tpu.memory_space<vmem>>, vector<1x1x40x32xf32>
    %73 = vector.shape_cast %72 : vector<1x1x40x32xf32> to vector<40x32xf32>
    %74 = arith.addf %71, %73 : vector<40x32xf32>
    %75 = math.tanh %74 : vector<40x32xf32>
    %76 = arith.addf %75, %16 : vector<40x32xf32>
    %c0_44 = arith.constant 0 : index
    %c1 = arith.constant 1 : index
    %c0_45 = arith.constant 0 : index
    %c0_46 = arith.constant 0 : index
    %77 = vector.load %arg5[%c0_44, %c1, %c0_45, %c0_46] : memref<1x2x40x40xf32, #tpu.memory_space<vmem>>, vector<1x1x40x40xf32>
    %78 = vector.shape_cast %77 : vector<1x1x40x40xf32> to vector<40x40xf32>
    %cst_47 = arith.constant dense<0.000000e+00> : vector<40x32xf32>
    %79 = tpu.matmul %78, %76, %cst_47 {dimension_numbers = #tpu.dot_dimension_numbers<[1], [0], [0], [1], [0, 0, 1, 1], [], []>} : vector<40x40xf32>, vector<40x32xf32>, vector<40x32xf32> -> vector<40x32xf32>
    %c0_48 = arith.constant 0 : index
    %c1_49 = arith.constant 1 : index
    %c0_50 = arith.constant 0 : index
    %c0_51 = arith.constant 0 : index
    %80 = vector.load %arg6[%c0_48, %c1_49, %c0_50, %c0_51] : memref<1x2x32x32xf32, #tpu.memory_space<vmem>>, vector<1x1x32x32xf32>
    %81 = vector.shape_cast %80 : vector<1x1x32x32xf32> to vector<32x32xf32>
    %cst_52 = arith.constant dense<0.000000e+00> : vector<40x32xf32>
    %82 = tpu.matmul %79, %81, %cst_52 {dimension_numbers = #tpu.dot_dimension_numbers<[1], [0], [0], [1], [0, 0, 1, 1], [], []>} : vector<40x32xf32>, vector<32x32xf32>, vector<40x32xf32> -> vector<40x32xf32>
    %c0_53 = arith.constant 0 : index
    %c1_54 = arith.constant 1 : index
    %c0_55 = arith.constant 0 : index
    %c0_56 = arith.constant 0 : index
    %83 = vector.load %arg7[%c0_53, %c1_54, %c0_55, %c0_56] : memref<1x2x1x32xf32, #tpu.memory_space<vmem>>, vector<1x1x1x32xf32>
    %84 = vector.shape_cast %83 : vector<1x1x1x32xf32> to vector<1x32xf32>
    %85 = vector.broadcast %84 : vector<1x32xf32> to vector<40x32xf32>
    %86 = arith.addf %82, %85 : vector<40x32xf32>
    %87 = vector.extract_strided_slice %86 {offsets = [0, 0], sizes = [40, 16], strides = [1, 1]} : vector<40x32xf32> to vector<40x16xf32>
    %88 = vector.shape_cast %87 : vector<40x16xf32> to vector<1x40x16xf32>
    %cst_57 = arith.constant dense<0.000000e+00> : vector<1xf32>
    %89 = vector.multi_reduction <add>, %88, %cst_57 [1, 2] : vector<1x40x16xf32> to vector<1xf32>
    %90 = vector.shape_cast %89 : vector<1xf32> to vector<1x1x1xf32>
    %91 = vector.extract %90[0, 0, 0] : f32 from vector<1x1x1xf32>
    %92 = arith.mulf %87, %87 : vector<40x16xf32>
    %93 = vector.shape_cast %92 : vector<40x16xf32> to vector<1x40x16xf32>
    %cst_58 = arith.constant dense<0.000000e+00> : vector<1xf32>
    %94 = vector.multi_reduction <add>, %93, %cst_58 [1, 2] : vector<1x40x16xf32> to vector<1xf32>
    %95 = vector.shape_cast %94 : vector<1xf32> to vector<1x1x1xf32>
    %96 = vector.extract %95[0, 0, 0] : f32 from vector<1x1x1xf32>
    %cst_59 = arith.constant 6.400000e+02 : f32
    %97 = arith.divf %91, %cst_59 : f32
    %cst_60 = arith.constant 6.400000e+02 : f32
    %98 = arith.divf %96, %cst_60 : f32
    %99 = arith.mulf %97, %97 : f32
    %100 = arith.subf %98, %99 : f32
    %101 = vector.broadcast %97 : f32 to vector<1x16xf32>
    %cst_61 = arith.constant 9.99999974E-6 : f32
    %102 = arith.addf %100, %cst_61 : f32
    %103 = math.rsqrt %102 : f32
    %104 = vector.broadcast %103 : f32 to vector<1x16xf32>
    %105 = vector.extract_strided_slice %86 {offsets = [0, 16], sizes = [40, 16], strides = [1, 1]} : vector<40x32xf32> to vector<40x16xf32>
    %106 = vector.shape_cast %105 : vector<40x16xf32> to vector<1x40x16xf32>
    %cst_62 = arith.constant dense<0.000000e+00> : vector<1xf32>
    %107 = vector.multi_reduction <add>, %106, %cst_62 [1, 2] : vector<1x40x16xf32> to vector<1xf32>
    %108 = vector.shape_cast %107 : vector<1xf32> to vector<1x1x1xf32>
    %109 = vector.extract %108[0, 0, 0] : f32 from vector<1x1x1xf32>
    %110 = arith.mulf %105, %105 : vector<40x16xf32>
    %111 = vector.shape_cast %110 : vector<40x16xf32> to vector<1x40x16xf32>
    %cst_63 = arith.constant dense<0.000000e+00> : vector<1xf32>
    %112 = vector.multi_reduction <add>, %111, %cst_63 [1, 2] : vector<1x40x16xf32> to vector<1xf32>
    %113 = vector.shape_cast %112 : vector<1xf32> to vector<1x1x1xf32>
    %114 = vector.extract %113[0, 0, 0] : f32 from vector<1x1x1xf32>
    %cst_64 = arith.constant 6.400000e+02 : f32
    %115 = arith.divf %109, %cst_64 : f32
    %cst_65 = arith.constant 6.400000e+02 : f32
    %116 = arith.divf %114, %cst_65 : f32
    %117 = arith.mulf %115, %115 : f32
    %118 = arith.subf %116, %117 : f32
    %119 = vector.broadcast %115 : f32 to vector<1x16xf32>
    %cst_66 = arith.constant 9.99999974E-6 : f32
    %120 = arith.addf %118, %cst_66 : f32
    %121 = math.rsqrt %120 : f32
    %122 = vector.broadcast %121 : f32 to vector<1x16xf32>
    %123 = tpu.concatenate %101, %119 in 1 : vector<1x16xf32>, vector<1x16xf32> -> vector<1x32xf32>
    %124 = tpu.concatenate %104, %122 in 1 : vector<1x16xf32>, vector<1x16xf32> -> vector<1x32xf32>
    %125 = vector.broadcast %123 : vector<1x32xf32> to vector<40x32xf32>
    %126 = arith.subf %86, %125 : vector<40x32xf32>
    %127 = vector.broadcast %124 : vector<1x32xf32> to vector<40x32xf32>
    %128 = arith.mulf %126, %127 : vector<40x32xf32>
    %c0_67 = arith.constant 0 : index
    %c1_68 = arith.constant 1 : index
    %c0_69 = arith.constant 0 : index
    %c0_70 = arith.constant 0 : index
    %129 = vector.load %arg8[%c0_67, %c1_68, %c0_69, %c0_70] : memref<1x2x40x32xf32, #tpu.memory_space<vmem>>, vector<1x1x40x32xf32>
    %130 = vector.shape_cast %129 : vector<1x1x40x32xf32> to vector<40x32xf32>
    %131 = arith.mulf %128, %130 : vector<40x32xf32>
    %c0_71 = arith.constant 0 : index
    %c1_72 = arith.constant 1 : index
    %c0_73 = arith.constant 0 : index
    %c0_74 = arith.constant 0 : index
    %132 = vector.load %arg9[%c0_71, %c1_72, %c0_73, %c0_74] : memref<1x2x40x32xf32, #tpu.memory_space<vmem>>, vector<1x1x40x32xf32>
    %133 = vector.shape_cast %132 : vector<1x1x40x32xf32> to vector<40x32xf32>
    %134 = arith.addf %131, %133 : vector<40x32xf32>
    %135 = math.tanh %134 : vector<40x32xf32>
    %136 = arith.addf %135, %76 : vector<40x32xf32>
    %137 = vector.extract_strided_slice %136 {offsets = [0, 0], sizes = [40, 8], strides = [1, 1]} : vector<40x32xf32> to vector<40x8xf32>
    %138 = vector.extract_strided_slice %136 {offsets = [0, 16], sizes = [40, 8], strides = [1, 1]} : vector<40x32xf32> to vector<40x8xf32>
    %139 = tpu.concatenate %137, %138 in 1 : vector<40x8xf32>, vector<40x8xf32> -> vector<40x16xf32>
    %140 = tpu.concatenate %139, %11 in 0 : vector<40x16xf32>, vector<40x16xf32> -> vector<80x16xf32>
    %c0_75 = arith.constant 0 : index
    %c0_76 = arith.constant 0 : index
    %c0_77 = arith.constant 0 : index
    %141 = vector.load %arg10[%c0_75, %c0_76, %c0_77] : memref<1x40x80xf32, #tpu.memory_space<vmem>>, vector<1x40x80xf32>
    %142 = vector.shape_cast %141 : vector<1x40x80xf32> to vector<40x80xf32>
    %cst_78 = arith.constant dense<0.000000e+00> : vector<40x16xf32>
    %143 = tpu.matmul %142, %140, %cst_78 {dimension_numbers = #tpu.dot_dimension_numbers<[1], [0], [0], [1], [0, 0, 1, 1], [], []>} : vector<40x80xf32>, vector<80x16xf32>, vector<40x16xf32> -> vector<40x16xf32>
    %c0_79 = arith.constant 0 : index
    %c0_80 = arith.constant 0 : index
    %c0_81 = arith.constant 0 : index
    %144 = vector.load %arg11[%c0_79, %c0_80, %c0_81] : memref<1x16x16xf32, #tpu.memory_space<vmem>>, vector<1x16x16xf32>
    %145 = vector.shape_cast %144 : vector<1x16x16xf32> to vector<16x16xf32>
    %cst_82 = arith.constant dense<0.000000e+00> : vector<40x16xf32>
    %146 = tpu.matmul %143, %145, %cst_82 {dimension_numbers = #tpu.dot_dimension_numbers<[1], [0], [0], [1], [0, 0, 1, 1], [], []>} : vector<40x16xf32>, vector<16x16xf32>, vector<40x16xf32> -> vector<40x16xf32>
    %c0_83 = arith.constant 0 : index
    %c0_84 = arith.constant 0 : index
    %c0_85 = arith.constant 0 : index
    %147 = vector.load %arg12[%c0_83, %c0_84, %c0_85] : memref<1x1x16xf32, #tpu.memory_space<vmem>>, vector<1x1x16xf32>
    %148 = vector.shape_cast %147 : vector<1x1x16xf32> to vector<1x16xf32>
    %149 = vector.broadcast %148 : vector<1x16xf32> to vector<40x16xf32>
    %150 = arith.addf %146, %149 : vector<40x16xf32>
    %c0_86 = arith.constant 0 : index
    %c0_87 = arith.constant 0 : index
    %c0_88 = arith.constant 0 : index
    %151 = vector.load %arg13[%c0_86, %c0_87, %c0_88] : memref<1x40x16xf32, #tpu.memory_space<vmem>>, vector<1x40x16xf32>
    %152 = vector.shape_cast %151 : vector<1x40x16xf32> to vector<40x16xf32>
    %153 = vector.shape_cast %150 : vector<40x16xf32> to vector<1x40x16xf32>
    tpu.vector_store %arg13[%c0_86, %c0_87, %c0_88], %153 {strides = array<i32>} : memref<1x40x16xf32, #tpu.memory_space<vmem>>, vector<1x40x16xf32>,
    return
  }
  func.func @transform_0(%arg0: i32) -> (i32, i32, i32) {
    %c0_i32 = arith.constant 0 : i32
    %c0_i32_0 = arith.constant 0 : i32
    %c0_i32_1 = arith.constant 0 : i32
    return %arg0, %c0_i32, %c0_i32_0 : i32, i32, i32
  }
  func.func @transform_1(%arg0: i32) -> (i32, i32, i32) {
    %c0_i32 = arith.constant 0 : i32
    %c0_i32_0 = arith.constant 0 : i32
    %c0_i32_1 = arith.constant 0 : i32
    return %arg0, %c0_i32, %c0_i32_0 : i32, i32, i32
  }
  func.func @transform_2(%arg0: i32) -> (i32, i32, i32) {
    %c0_i32 = arith.constant 0 : i32
    %c0_i32_0 = arith.constant 0 : i32
    %c0_i32_1 = arith.constant 0 : i32
    return %arg0, %c0_i32, %c0_i32_0 : i32, i32, i32
  }
  func.func @transform_3(%arg0: i32) -> (i32, i32, i32) {
    %c0_i32 = arith.constant 0 : i32
    %c0_i32_0 = arith.constant 0 : i32
    %c0_i32_1 = arith.constant 0 : i32
    return %arg0, %c0_i32, %c0_i32_0 : i32, i32, i32
  }
  func.func @transform_4(%arg0: i32) -> (i32, i32, i32, i32) {
    %c0_i32 = arith.constant 0 : i32
    %c0_i32_0 = arith.constant 0 : i32
    %c0_i32_1 = arith.constant 0 : i32
    %c0_i32_2 = arith.constant 0 : i32
    return %arg0, %c0_i32, %c0_i32_0, %c0_i32_1 : i32, i32, i32, i32
  }
  func.func @transform_5(%arg0: i32) -> (i32, i32, i32, i32) {
    %c0_i32 = arith.constant 0 : i32
    %c0_i32_0 = arith.constant 0 : i32
    %c0_i32_1 = arith.constant 0 : i32
    %c0_i32_2 = arith.constant 0 : i32
    return %arg0, %c0_i32, %c0_i32_0, %c0_i32_1 : i32, i32, i32, i32
  }
  func.func @transform_6(%arg0: i32) -> (i32, i32, i32, i32) {
    %c0_i32 = arith.constant 0 : i32
    %c0_i32_0 = arith.constant 0 : i32
    %c0_i32_1 = arith.constant 0 : i32
    %c0_i32_2 = arith.constant 0 : i32
    return %arg0, %c0_i32, %c0_i32_0, %c0_i32_1 : i32, i32, i32, i32
  }
  func.func @transform_7(%arg0: i32) -> (i32, i32, i32, i32) {
    %c0_i32 = arith.constant 0 : i32
    %c0_i32_0 = arith.constant 0 : i32
    %c0_i32_1 = arith.constant 0 : i32
    %c0_i32_2 = arith.constant 0 : i32
    return %arg0, %c0_i32, %c0_i32_0, %c0_i32_1 : i32, i32, i32, i32
  }
  func.func @transform_8(%arg0: i32) -> (i32, i32, i32, i32) {
    %c0_i32 = arith.constant 0 : i32
    %c0_i32_0 = arith.constant 0 : i32
    %c0_i32_1 = arith.constant 0 : i32
    %c0_i32_2 = arith.constant 0 : i32
    return %arg0, %c0_i32, %c0_i32_0, %c0_i32_1 : i32, i32, i32, i32
  }
  func.func @transform_9(%arg0: i32) -> (i32, i32, i32) {
    %c0_i32 = arith.constant 0 : i32
    %c0_i32_0 = arith.constant 0 : i32
    %c0_i32_1 = arith.constant 0 : i32
    return %arg0, %c0_i32, %c0_i32_0 : i32, i32, i32
  }
  func.func @transform_10(%arg0: i32) -> (i32, i32, i32) {
    %c0_i32 = arith.constant 0 : i32
    %c0_i32_0 = arith.constant 0 : i32
    %c0_i32_1 = arith.constant 0 : i32
    return %arg0, %c0_i32, %c0_i32_0 : i32, i32, i32
  }
  func.func @transform_11(%arg0: i32) -> (i32, i32, i32) {
    %c0_i32 = arith.constant 0 : i32
    %c0_i32_0 = arith.constant 0 : i32
    %c0_i32_1 = arith.constant 0 : i32
    return %arg0, %c0_i32, %c0_i32_0 : i32, i32, i32
  }
  func.func @transform_12(%arg0: i32) -> (i32, i32, i32) {
    %c0_i32 = arith.constant 0 : i32
    %c0_i32_0 = arith.constant 0 : i32
    %c0_i32_1 = arith.constant 0 : i32
    return %arg0, %c0_i32, %c0_i32_0 : i32, i32, i32
  }
}

module attributes {stable_mosaic.version = 11 : i64} {
  func.func @kernel(%arg0: i32, %arg1: memref<2x40x16xf32, #tpu.memory_space<vmem>>, %arg2: memref<3x16xf32, #tpu.memory_space<vmem>>, %arg3: memref<9x16xf32, #tpu.memory_space<vmem>>, %arg4: memref<16x1xf32, #tpu.memory_space<vmem>>, %arg5: memref<16x16xf32, #tpu.memory_space<vmem>>, %arg6: memref<16x16xf32, #tpu.memory_space<vmem>>, %arg7: memref<48x16xf32, #tpu.memory_space<vmem>>, %arg8: memref<16x1xf32, #tpu.memory_space<vmem>>, %arg9: memref<16x16xf32, #tpu.memory_space<vmem>>, %arg10: memref<16x16xf32, #tpu.memory_space<vmem>>, %arg11: memref<48x16xf32, #tpu.memory_space<vmem>>, %arg12: memref<16x1xf32, #tpu.memory_space<vmem>>, %arg13: memref<288x16xf32, #tpu.memory_space<vmem>>, %arg14: memref<16x1xf32, #tpu.memory_space<vmem>>, %arg15: memref<16x16xf32, #tpu.memory_space<vmem>>, %arg16: memref<16x16xf32, #tpu.memory_space<vmem>>, %arg17: memref<48x2xf32, #tpu.memory_space<vmem>>, %arg18: memref<2x1xf32, #tpu.memory_space<vmem>>, %arg19: memref<2x16xf32, #tpu.memory_space<vmem>>) attributes {dimension_semantics = [#tpu.dimension_semantics<arbitrary>], iteration_bounds = array<i64: 1>, scalar_prefetch = 0 : i64, scratch_operands = 0 : i64, tpu.core_type = #tpu.core_type<tc>, window_params = [{pipeline_mode = #tpu.pipeline_mode<synchronous>, transform_indices = @transform_0, window_bounds = array<i64: 2, 40, 16>}, {pipeline_mode = #tpu.pipeline_mode<synchronous>, transform_indices = @transform_1, window_bounds = array<i64: 3, 16>}, {pipeline_mode = #tpu.pipeline_mode<synchronous>, transform_indices = @transform_2, window_bounds = array<i64: 9, 16>}, {pipeline_mode = #tpu.pipeline_mode<synchronous>, transform_indices = @transform_3, window_bounds = array<i64: 16, 1>}, {pipeline_mode = #tpu.pipeline_mode<synchronous>, transform_indices = @transform_4, window_bounds = array<i64: 16, 16>}, {pipeline_mode = #tpu.pipeline_mode<synchronous>, transform_indices = @transform_5, window_bounds = array<i64: 16, 16>}, {pipeline_mode = #tpu.pipeline_mode<synchronous>, transform_indices = @transform_6, window_bounds = array<i64: 48, 16>}, {pipeline_mode = #tpu.pipeline_mode<synchronous>, transform_indices = @transform_7, window_bounds = array<i64: 16, 1>}, {pipeline_mode = #tpu.pipeline_mode<synchronous>, transform_indices = @transform_8, window_bounds = array<i64: 16, 16>}, {pipeline_mode = #tpu.pipeline_mode<synchronous>, transform_indices = @transform_9, window_bounds = array<i64: 16, 16>}, {pipeline_mode = #tpu.pipeline_mode<synchronous>, transform_indices = @transform_10, window_bounds = array<i64: 48, 16>}, {pipeline_mode = #tpu.pipeline_mode<synchronous>, transform_indices = @transform_11, window_bounds = array<i64: 16, 1>}, {pipeline_mode = #tpu.pipeline_mode<synchronous>, transform_indices = @transform_12, window_bounds = array<i64: 288, 16>}, {pipeline_mode = #tpu.pipeline_mode<synchronous>, transform_indices = @transform_13, window_bounds = array<i64: 16, 1>}, {pipeline_mode = #tpu.pipeline_mode<synchronous>, transform_indices = @transform_14, window_bounds = array<i64: 16, 16>}, {pipeline_mode = #tpu.pipeline_mode<synchronous>, transform_indices = @transform_15, window_bounds = array<i64: 16, 16>}, {pipeline_mode = #tpu.pipeline_mode<synchronous>, transform_indices = @transform_16, window_bounds = array<i64: 48, 2>}, {pipeline_mode = #tpu.pipeline_mode<synchronous>, transform_indices = @transform_17, window_bounds = array<i64: 2, 1>}, {pipeline_mode = #tpu.pipeline_mode<synchronous>, transform_indices = @transform_18, window_bounds = array<i64: 2, 16>}]} {
    %0 = tpu.iota {dimensions = array<i32: 1>} : vector<1x16xi32>
    %c8_i32 = arith.constant 8 : i32
    %c0_i32 = arith.constant 0 : i32
    %1 = arith.cmpi eq, %c8_i32, %c0_i32 : i32
    %c1_i32 = arith.constant 1 : i32
    %2 = arith.select %1, %c1_i32, %c8_i32 : i32
    %3 = vector.broadcast %2 : i32 to vector<1x16xi32>
    %4 = arith.remsi %0, %3 : vector<1x16xi32>
    %c0_i32_0 = arith.constant 0 : i32
    %5 = vector.broadcast %c0_i32_0 : i32 to vector<1x16xi32>
    %6 = arith.cmpi ne, %4, %5 : vector<1x16xi32>
    %c0_i32_1 = arith.constant 0 : i32
    %7 = vector.broadcast %c0_i32_1 : i32 to vector<1x16xi32>
    %8 = arith.cmpi slt, %4, %7 : vector<1x16xi32>
    %c0_i32_2 = arith.constant 0 : i32
    %9 = arith.cmpi slt, %2, %c0_i32_2 : i32
    %10 = vector.broadcast %9 : i1 to vector<1x16xi1>
    %11 = vector.broadcast %10 : vector<1x16xi1> to vector<1x16xi1>
    %12 = arith.xori %8, %11 : vector<1x16xi1>
    %13 = arith.andi %12, %6 : vector<1x16xi1>
    %14 = vector.broadcast %2 : i32 to vector<1x16xi32>
    %15 = arith.addi %4, %14 : vector<1x16xi32>
    %16 = arith.select %13, %15, %4 : vector<1x16xi1>, vector<1x16xi32>
    %c0_i32_3 = arith.constant 0 : i32
    %17 = vector.broadcast %c0_i32_3 : i32 to vector<1x16xi32>
    %18 = arith.cmpi eq, %16, %17 : vector<1x16xi32>
    %c7_i32 = arith.constant 7 : i32
    %19 = vector.broadcast %c7_i32 : i32 to vector<1x16xi32>
    %20 = arith.cmpi eq, %16, %19 : vector<1x16xi32>
    %c0 = arith.constant 0 : index
    %c0_4 = arith.constant 0 : index
    %21 = vector.load %arg2[%c0, %c0_4] : memref<3x16xf32, #tpu.memory_space<vmem>>, vector<3x16xf32>
    %22 = vector.extract_strided_slice %21 {offsets = [0, 0], sizes = [3, 1], strides = [1, 1]} : vector<3x16xf32> to vector<3x1xf32>
    %23 = vector.extract_strided_slice %21 {offsets = [0, 0], sizes = [3, 15], strides = [1, 1]} : vector<3x16xf32> to vector<3x15xf32>
    %24 = tpu.concatenate %22, %23 in 1 : vector<3x1xf32>, vector<3x15xf32> -> vector<3x16xf32>
    %25 = vector.extract_strided_slice %21 {offsets = [0, 1], sizes = [3, 15], strides = [1, 1]} : vector<3x16xf32> to vector<3x15xf32>
    %26 = vector.extract_strided_slice %21 {offsets = [0, 15], sizes = [3, 1], strides = [1, 1]} : vector<3x16xf32> to vector<3x1xf32>
    %27 = tpu.concatenate %25, %26 in 1 : vector<3x15xf32>, vector<3x1xf32> -> vector<3x16xf32>
    %28 = vector.shape_cast %18 : vector<1x16xi1> to vector<1x16xi1>
    %29 = vector.broadcast %28 : vector<1x16xi1> to vector<3x16xi1>
    %30 = arith.select %29, %21, %24 : vector<3x16xi1>, vector<3x16xf32>
    %31 = vector.shape_cast %20 : vector<1x16xi1> to vector<1x16xi1>
    %32 = vector.broadcast %31 : vector<1x16xi1> to vector<3x16xi1>
    %33 = arith.select %32, %21, %27 : vector<3x16xi1>, vector<3x16xf32>
    %34 = tpu.concatenate %30, %21, %33 in 0 : vector<3x16xf32>, vector<3x16xf32>, vector<3x16xf32> -> vector<9x16xf32>
    %c0_5 = arith.constant 0 : index
    %c0_6 = arith.constant 0 : index
    %35 = vector.load %arg3[%c0_5, %c0_6] : memref<9x16xf32, #tpu.memory_space<vmem>>, vector<9x16xf32>
    %cst = arith.constant dense<0.000000e+00> : vector<16x16xf32>
    %36 = tpu.matmul %35, %34, %cst {dimension_numbers = #tpu.dot_dimension_numbers<[0], [0], [1], [1], [0, 1, 1, 1], [], []>} : vector<9x16xf32>, vector<9x16xf32>, vector<16x16xf32> -> vector<16x16xf32>
    %c0_7 = arith.constant 0 : index
    %c0_8 = arith.constant 0 : index
    %37 = vector.load %arg4[%c0_7, %c0_8] : memref<16x1xf32, #tpu.memory_space<vmem>>, vector<16x1xf32>
    %38 = vector.broadcast %37 : vector<16x1xf32> to vector<16x16xf32>
    %39 = arith.addf %36, %38 : vector<16x16xf32>
    %c0_9 = arith.constant 0 : index
    %c0_10 = arith.constant 0 : index
    %40 = vector.load %arg5[%c0_9, %c0_10] : memref<16x16xf32, #tpu.memory_space<vmem>>, vector<16x16xf32>
    %41 = vector.extract_strided_slice %39 {offsets = [0, 0], sizes = [16, 8], strides = [1, 1]} : vector<16x16xf32> to vector<16x8xf32>
    %42 = vector.shape_cast %41 : vector<16x8xf32> to vector<1x16x8xf32>
    %cst_11 = arith.constant dense<0.000000e+00> : vector<1xf32>
    %43 = vector.multi_reduction <add>, %42, %cst_11 [1, 2] : vector<1x16x8xf32> to vector<1xf32>
    %44 = vector.shape_cast %43 : vector<1xf32> to vector<1x1x1xf32>
    %45 = vector.extract %44[0, 0, 0] : f32 from vector<1x1x1xf32>
    %46 = arith.mulf %41, %41 : vector<16x8xf32>
    %47 = vector.shape_cast %46 : vector<16x8xf32> to vector<1x16x8xf32>
    %cst_12 = arith.constant dense<0.000000e+00> : vector<1xf32>
    %48 = vector.multi_reduction <add>, %47, %cst_12 [1, 2] : vector<1x16x8xf32> to vector<1xf32>
    %49 = vector.shape_cast %48 : vector<1xf32> to vector<1x1x1xf32>
    %50 = vector.extract %49[0, 0, 0] : f32 from vector<1x1x1xf32>
    %cst_13 = arith.constant 1.280000e+02 : f32
    %51 = arith.divf %45, %cst_13 : f32
    %cst_14 = arith.constant 1.280000e+02 : f32
    %52 = arith.divf %50, %cst_14 : f32
    %53 = arith.mulf %51, %51 : f32
    %54 = arith.subf %52, %53 : f32
    %55 = vector.broadcast %51 : f32 to vector<1x8xf32>
    %cst_15 = arith.constant 9.99999974E-6 : f32
    %56 = arith.addf %54, %cst_15 : f32
    %57 = math.rsqrt %56 : f32
    %58 = vector.broadcast %57 : f32 to vector<1x8xf32>
    %59 = vector.extract_strided_slice %39 {offsets = [0, 8], sizes = [16, 8], strides = [1, 1]} : vector<16x16xf32> to vector<16x8xf32>
    %60 = vector.shape_cast %59 : vector<16x8xf32> to vector<1x16x8xf32>
    %cst_16 = arith.constant dense<0.000000e+00> : vector<1xf32>
    %61 = vector.multi_reduction <add>, %60, %cst_16 [1, 2] : vector<1x16x8xf32> to vector<1xf32>
    %62 = vector.shape_cast %61 : vector<1xf32> to vector<1x1x1xf32>
    %63 = vector.extract %62[0, 0, 0] : f32 from vector<1x1x1xf32>
    %64 = arith.mulf %59, %59 : vector<16x8xf32>
    %65 = vector.shape_cast %64 : vector<16x8xf32> to vector<1x16x8xf32>
    %cst_17 = arith.constant dense<0.000000e+00> : vector<1xf32>
    %66 = vector.multi_reduction <add>, %65, %cst_17 [1, 2] : vector<1x16x8xf32> to vector<1xf32>
    %67 = vector.shape_cast %66 : vector<1xf32> to vector<1x1x1xf32>
    %68 = vector.extract %67[0, 0, 0] : f32 from vector<1x1x1xf32>
    %cst_18 = arith.constant 1.280000e+02 : f32
    %69 = arith.divf %63, %cst_18 : f32
    %cst_19 = arith.constant 1.280000e+02 : f32
    %70 = arith.divf %68, %cst_19 : f32
    %71 = arith.mulf %69, %69 : f32
    %72 = arith.subf %70, %71 : f32
    %73 = vector.broadcast %69 : f32 to vector<1x8xf32>
    %cst_20 = arith.constant 9.99999974E-6 : f32
    %74 = arith.addf %72, %cst_20 : f32
    %75 = math.rsqrt %74 : f32
    %76 = vector.broadcast %75 : f32 to vector<1x8xf32>
    %77 = tpu.concatenate %55, %73 in 1 : vector<1x8xf32>, vector<1x8xf32> -> vector<1x16xf32>
    %78 = tpu.concatenate %58, %76 in 1 : vector<1x8xf32>, vector<1x8xf32> -> vector<1x16xf32>
    %79 = vector.broadcast %77 : vector<1x16xf32> to vector<16x16xf32>
    %80 = arith.subf %39, %79 : vector<16x16xf32>
    %81 = vector.broadcast %78 : vector<1x16xf32> to vector<16x16xf32>
    %82 = arith.mulf %80, %81 : vector<16x16xf32>
    %83 = arith.mulf %82, %40 : vector<16x16xf32>
    %c0_21 = arith.constant 0 : index
    %c0_22 = arith.constant 0 : index
    %84 = vector.load %arg6[%c0_21, %c0_22] : memref<16x16xf32, #tpu.memory_space<vmem>>, vector<16x16xf32>
    %85 = arith.addf %83, %84 : vector<16x16xf32>
    %86 = math.tanh %85 : vector<16x16xf32>
    %87 = vector.extract_strided_slice %86 {offsets = [0, 0], sizes = [16, 1], strides = [1, 1]} : vector<16x16xf32> to vector<16x1xf32>
    %88 = vector.extract_strided_slice %86 {offsets = [0, 0], sizes = [16, 15], strides = [1, 1]} : vector<16x16xf32> to vector<16x15xf32>
    %89 = tpu.concatenate %87, %88 in 1 : vector<16x1xf32>, vector<16x15xf32> -> vector<16x16xf32>
    %90 = vector.extract_strided_slice %86 {offsets = [0, 1], sizes = [16, 15], strides = [1, 1]} : vector<16x16xf32> to vector<16x15xf32>
    %91 = vector.extract_strided_slice %86 {offsets = [0, 15], sizes = [16, 1], strides = [1, 1]} : vector<16x16xf32> to vector<16x1xf32>
    %92 = tpu.concatenate %90, %91 in 1 : vector<16x15xf32>, vector<16x1xf32> -> vector<16x16xf32>
    %93 = vector.shape_cast %18 : vector<1x16xi1> to vector<1x16xi1>
    %94 = vector.broadcast %93 : vector<1x16xi1> to vector<16x16xi1>
    %95 = arith.select %94, %86, %89 : vector<16x16xi1>, vector<16x16xf32>
    %96 = vector.shape_cast %20 : vector<1x16xi1> to vector<1x16xi1>
    %97 = vector.broadcast %96 : vector<1x16xi1> to vector<16x16xi1>
    %98 = arith.select %97, %86, %92 : vector<16x16xi1>, vector<16x16xf32>
    %99 = tpu.concatenate %95, %86, %98 in 0 : vector<16x16xf32>, vector<16x16xf32>, vector<16x16xf32> -> vector<48x16xf32>
    %c0_23 = arith.constant 0 : index
    %c0_24 = arith.constant 0 : index
    %100 = vector.load %arg7[%c0_23, %c0_24] : memref<48x16xf32, #tpu.memory_space<vmem>>, vector<48x16xf32>
    %cst_25 = arith.constant dense<0.000000e+00> : vector<16x16xf32>
    %101 = tpu.matmul %100, %99, %cst_25 {dimension_numbers = #tpu.dot_dimension_numbers<[0], [0], [1], [1], [0, 1, 1, 1], [], []>} : vector<48x16xf32>, vector<48x16xf32>, vector<16x16xf32> -> vector<16x16xf32>
    %c0_26 = arith.constant 0 : index
    %c0_27 = arith.constant 0 : index
    %102 = vector.load %arg8[%c0_26, %c0_27] : memref<16x1xf32, #tpu.memory_space<vmem>>, vector<16x1xf32>
    %103 = vector.broadcast %102 : vector<16x1xf32> to vector<16x16xf32>
    %104 = arith.addf %101, %103 : vector<16x16xf32>
    %c0_28 = arith.constant 0 : index
    %c0_29 = arith.constant 0 : index
    %105 = vector.load %arg9[%c0_28, %c0_29] : memref<16x16xf32, #tpu.memory_space<vmem>>, vector<16x16xf32>
    %106 = vector.extract_strided_slice %104 {offsets = [0, 0], sizes = [16, 8], strides = [1, 1]} : vector<16x16xf32> to vector<16x8xf32>
    %107 = vector.shape_cast %106 : vector<16x8xf32> to vector<1x16x8xf32>
    %cst_30 = arith.constant dense<0.000000e+00> : vector<1xf32>
    %108 = vector.multi_reduction <add>, %107, %cst_30 [1, 2] : vector<1x16x8xf32> to vector<1xf32>
    %109 = vector.shape_cast %108 : vector<1xf32> to vector<1x1x1xf32>
    %110 = vector.extract %109[0, 0, 0] : f32 from vector<1x1x1xf32>
    %111 = arith.mulf %106, %106 : vector<16x8xf32>
    %112 = vector.shape_cast %111 : vector<16x8xf32> to vector<1x16x8xf32>
    %cst_31 = arith.constant dense<0.000000e+00> : vector<1xf32>
    %113 = vector.multi_reduction <add>, %112, %cst_31 [1, 2] : vector<1x16x8xf32> to vector<1xf32>
    %114 = vector.shape_cast %113 : vector<1xf32> to vector<1x1x1xf32>
    %115 = vector.extract %114[0, 0, 0] : f32 from vector<1x1x1xf32>
    %cst_32 = arith.constant 1.280000e+02 : f32
    %116 = arith.divf %110, %cst_32 : f32
    %cst_33 = arith.constant 1.280000e+02 : f32
    %117 = arith.divf %115, %cst_33 : f32
    %118 = arith.mulf %116, %116 : f32
    %119 = arith.subf %117, %118 : f32
    %120 = vector.broadcast %116 : f32 to vector<1x8xf32>
    %cst_34 = arith.constant 9.99999974E-6 : f32
    %121 = arith.addf %119, %cst_34 : f32
    %122 = math.rsqrt %121 : f32
    %123 = vector.broadcast %122 : f32 to vector<1x8xf32>
    %124 = vector.extract_strided_slice %104 {offsets = [0, 8], sizes = [16, 8], strides = [1, 1]} : vector<16x16xf32> to vector<16x8xf32>
    %125 = vector.shape_cast %124 : vector<16x8xf32> to vector<1x16x8xf32>
    %cst_35 = arith.constant dense<0.000000e+00> : vector<1xf32>
    %126 = vector.multi_reduction <add>, %125, %cst_35 [1, 2] : vector<1x16x8xf32> to vector<1xf32>
    %127 = vector.shape_cast %126 : vector<1xf32> to vector<1x1x1xf32>
    %128 = vector.extract %127[0, 0, 0] : f32 from vector<1x1x1xf32>
    %129 = arith.mulf %124, %124 : vector<16x8xf32>
    %130 = vector.shape_cast %129 : vector<16x8xf32> to vector<1x16x8xf32>
    %cst_36 = arith.constant dense<0.000000e+00> : vector<1xf32>
    %131 = vector.multi_reduction <add>, %130, %cst_36 [1, 2] : vector<1x16x8xf32> to vector<1xf32>
    %132 = vector.shape_cast %131 : vector<1xf32> to vector<1x1x1xf32>
    %133 = vector.extract %132[0, 0, 0] : f32 from vector<1x1x1xf32>
    %cst_37 = arith.constant 1.280000e+02 : f32
    %134 = arith.divf %128, %cst_37 : f32
    %cst_38 = arith.constant 1.280000e+02 : f32
    %135 = arith.divf %133, %cst_38 : f32
    %136 = arith.mulf %134, %134 : f32
    %137 = arith.subf %135, %136 : f32
    %138 = vector.broadcast %134 : f32 to vector<1x8xf32>
    %cst_39 = arith.constant 9.99999974E-6 : f32
    %139 = arith.addf %137, %cst_39 : f32
    %140 = math.rsqrt %139 : f32
    %141 = vector.broadcast %140 : f32 to vector<1x8xf32>
    %142 = tpu.concatenate %120, %138 in 1 : vector<1x8xf32>, vector<1x8xf32> -> vector<1x16xf32>
    %143 = tpu.concatenate %123, %141 in 1 : vector<1x8xf32>, vector<1x8xf32> -> vector<1x16xf32>
    %144 = vector.broadcast %142 : vector<1x16xf32> to vector<16x16xf32>
    %145 = arith.subf %104, %144 : vector<16x16xf32>
    %146 = vector.broadcast %143 : vector<1x16xf32> to vector<16x16xf32>
    %147 = arith.mulf %145, %146 : vector<16x16xf32>
    %148 = arith.mulf %147, %105 : vector<16x16xf32>
    %c0_40 = arith.constant 0 : index
    %c0_41 = arith.constant 0 : index
    %149 = vector.load %arg10[%c0_40, %c0_41] : memref<16x16xf32, #tpu.memory_space<vmem>>, vector<16x16xf32>
    %150 = arith.addf %148, %149 : vector<16x16xf32>
    %151 = math.tanh %150 : vector<16x16xf32>
    %152 = vector.extract_strided_slice %151 {offsets = [0, 0], sizes = [16, 1], strides = [1, 1]} : vector<16x16xf32> to vector<16x1xf32>
    %153 = vector.extract_strided_slice %151 {offsets = [0, 0], sizes = [16, 15], strides = [1, 1]} : vector<16x16xf32> to vector<16x15xf32>
    %154 = tpu.concatenate %152, %153 in 1 : vector<16x1xf32>, vector<16x15xf32> -> vector<16x16xf32>
    %155 = vector.extract_strided_slice %151 {offsets = [0, 1], sizes = [16, 15], strides = [1, 1]} : vector<16x16xf32> to vector<16x15xf32>
    %156 = vector.extract_strided_slice %151 {offsets = [0, 15], sizes = [16, 1], strides = [1, 1]} : vector<16x16xf32> to vector<16x1xf32>
    %157 = tpu.concatenate %155, %156 in 1 : vector<16x15xf32>, vector<16x1xf32> -> vector<16x16xf32>
    %158 = vector.shape_cast %18 : vector<1x16xi1> to vector<1x16xi1>
    %159 = vector.broadcast %158 : vector<1x16xi1> to vector<16x16xi1>
    %160 = arith.select %159, %151, %154 : vector<16x16xi1>, vector<16x16xf32>
    %161 = vector.shape_cast %20 : vector<1x16xi1> to vector<1x16xi1>
    %162 = vector.broadcast %161 : vector<1x16xi1> to vector<16x16xi1>
    %163 = arith.select %162, %151, %157 : vector<16x16xi1>, vector<16x16xf32>
    %164 = tpu.concatenate %160, %151, %163 in 0 : vector<16x16xf32>, vector<16x16xf32>, vector<16x16xf32> -> vector<48x16xf32>
    %c0_42 = arith.constant 0 : index
    %c0_43 = arith.constant 0 : index
    %165 = vector.load %arg11[%c0_42, %c0_43] : memref<48x16xf32, #tpu.memory_space<vmem>>, vector<48x16xf32>
    %cst_44 = arith.constant dense<0.000000e+00> : vector<16x16xf32>
    %166 = tpu.matmul %165, %164, %cst_44 {dimension_numbers = #tpu.dot_dimension_numbers<[0], [0], [1], [1], [0, 1, 1, 1], [], []>} : vector<48x16xf32>, vector<48x16xf32>, vector<16x16xf32> -> vector<16x16xf32>
    %c0_45 = arith.constant 0 : index
    %c0_46 = arith.constant 0 : index
    %167 = vector.load %arg12[%c0_45, %c0_46] : memref<16x1xf32, #tpu.memory_space<vmem>>, vector<16x1xf32>
    %168 = vector.broadcast %167 : vector<16x1xf32> to vector<16x16xf32>
    %169 = arith.addf %166, %168 : vector<16x16xf32>
    %170 = math.tanh %169 : vector<16x16xf32>
    %c0_47 = arith.constant 0 : index
    %c0_48 = arith.constant 0 : index
    %c0_49 = arith.constant 0 : index
    %171 = vector.load %arg1[%c0_47, %c0_48, %c0_49] : memref<2x40x16xf32, #tpu.memory_space<vmem>>, vector<1x40x16xf32>
    %172 = vector.shape_cast %171 : vector<1x40x16xf32> to vector<40x16xf32>
    %c1 = arith.constant 1 : index
    %c0_50 = arith.constant 0 : index
    %c0_51 = arith.constant 0 : index
    %173 = vector.load %arg1[%c1, %c0_50, %c0_51] : memref<2x40x16xf32, #tpu.memory_space<vmem>>, vector<1x40x16xf32>
    %174 = vector.shape_cast %173 : vector<1x40x16xf32> to vector<40x16xf32>
    %175 = tpu.concatenate %172, %174, %170 in 0 : vector<40x16xf32>, vector<40x16xf32>, vector<16x16xf32> -> vector<96x16xf32>
    %176 = vector.extract_strided_slice %175 {offsets = [0, 0], sizes = [96, 1], strides = [1, 1]} : vector<96x16xf32> to vector<96x1xf32>
    %177 = vector.extract_strided_slice %175 {offsets = [0, 0], sizes = [96, 15], strides = [1, 1]} : vector<96x16xf32> to vector<96x15xf32>
    %178 = tpu.concatenate %176, %177 in 1 : vector<96x1xf32>, vector<96x15xf32> -> vector<96x16xf32>
    %179 = vector.extract_strided_slice %175 {offsets = [0, 1], sizes = [96, 15], strides = [1, 1]} : vector<96x16xf32> to vector<96x15xf32>
    %180 = vector.extract_strided_slice %175 {offsets = [0, 15], sizes = [96, 1], strides = [1, 1]} : vector<96x16xf32> to vector<96x1xf32>
    %181 = tpu.concatenate %179, %180 in 1 : vector<96x15xf32>, vector<96x1xf32> -> vector<96x16xf32>
    %182 = vector.shape_cast %18 : vector<1x16xi1> to vector<1x16xi1>
    %183 = vector.broadcast %182 : vector<1x16xi1> to vector<96x16xi1>
    %184 = arith.select %183, %175, %178 : vector<96x16xi1>, vector<96x16xf32>
    %185 = vector.shape_cast %20 : vector<1x16xi1> to vector<1x16xi1>
    %186 = vector.broadcast %185 : vector<1x16xi1> to vector<96x16xi1>
    %187 = arith.select %186, %175, %181 : vector<96x16xi1>, vector<96x16xf32>
    %188 = tpu.concatenate %184, %175, %187 in 0 : vector<96x16xf32>, vector<96x16xf32>, vector<96x16xf32> -> vector<288x16xf32>
    %c0_52 = arith.constant 0 : index
    %c0_53 = arith.constant 0 : index
    %189 = vector.load %arg13[%c0_52, %c0_53] : memref<288x16xf32, #tpu.memory_space<vmem>>, vector<288x16xf32>
    %cst_54 = arith.constant dense<0.000000e+00> : vector<16x16xf32>
    %190 = tpu.matmul %189, %188, %cst_54 {dimension_numbers = #tpu.dot_dimension_numbers<[0], [0], [1], [1], [0, 1, 1, 1], [], []>} : vector<288x16xf32>, vector<288x16xf32>, vector<16x16xf32> -> vector<16x16xf32>
    %c0_55 = arith.constant 0 : index
    %c0_56 = arith.constant 0 : index
    %191 = vector.load %arg14[%c0_55, %c0_56] : memref<16x1xf32, #tpu.memory_space<vmem>>, vector<16x1xf32>
    %192 = vector.broadcast %191 : vector<16x1xf32> to vector<16x16xf32>
    %193 = arith.addf %190, %192 : vector<16x16xf32>
    %c0_57 = arith.constant 0 : index
    %c0_58 = arith.constant 0 : index
    %194 = vector.load %arg15[%c0_57, %c0_58] : memref<16x16xf32, #tpu.memory_space<vmem>>, vector<16x16xf32>
    %195 = vector.extract_strided_slice %193 {offsets = [0, 0], sizes = [16, 8], strides = [1, 1]} : vector<16x16xf32> to vector<16x8xf32>
    %196 = vector.shape_cast %195 : vector<16x8xf32> to vector<1x16x8xf32>
    %cst_59 = arith.constant dense<0.000000e+00> : vector<1xf32>
    %197 = vector.multi_reduction <add>, %196, %cst_59 [1, 2] : vector<1x16x8xf32> to vector<1xf32>
    %198 = vector.shape_cast %197 : vector<1xf32> to vector<1x1x1xf32>
    %199 = vector.extract %198[0, 0, 0] : f32 from vector<1x1x1xf32>
    %200 = arith.mulf %195, %195 : vector<16x8xf32>
    %201 = vector.shape_cast %200 : vector<16x8xf32> to vector<1x16x8xf32>
    %cst_60 = arith.constant dense<0.000000e+00> : vector<1xf32>
    %202 = vector.multi_reduction <add>, %201, %cst_60 [1, 2] : vector<1x16x8xf32> to vector<1xf32>
    %203 = vector.shape_cast %202 : vector<1xf32> to vector<1x1x1xf32>
    %204 = vector.extract %203[0, 0, 0] : f32 from vector<1x1x1xf32>
    %cst_61 = arith.constant 1.280000e+02 : f32
    %205 = arith.divf %199, %cst_61 : f32
    %cst_62 = arith.constant 1.280000e+02 : f32
    %206 = arith.divf %204, %cst_62 : f32
    %207 = arith.mulf %205, %205 : f32
    %208 = arith.subf %206, %207 : f32
    %209 = vector.broadcast %205 : f32 to vector<1x8xf32>
    %cst_63 = arith.constant 9.99999974E-6 : f32
    %210 = arith.addf %208, %cst_63 : f32
    %211 = math.rsqrt %210 : f32
    %212 = vector.broadcast %211 : f32 to vector<1x8xf32>
    %213 = vector.extract_strided_slice %193 {offsets = [0, 8], sizes = [16, 8], strides = [1, 1]} : vector<16x16xf32> to vector<16x8xf32>
    %214 = vector.shape_cast %213 : vector<16x8xf32> to vector<1x16x8xf32>
    %cst_64 = arith.constant dense<0.000000e+00> : vector<1xf32>
    %215 = vector.multi_reduction <add>, %214, %cst_64 [1, 2] : vector<1x16x8xf32> to vector<1xf32>
    %216 = vector.shape_cast %215 : vector<1xf32> to vector<1x1x1xf32>
    %217 = vector.extract %216[0, 0, 0] : f32 from vector<1x1x1xf32>
    %218 = arith.mulf %213, %213 : vector<16x8xf32>
    %219 = vector.shape_cast %218 : vector<16x8xf32> to vector<1x16x8xf32>
    %cst_65 = arith.constant dense<0.000000e+00> : vector<1xf32>
    %220 = vector.multi_reduction <add>, %219, %cst_65 [1, 2] : vector<1x16x8xf32> to vector<1xf32>
    %221 = vector.shape_cast %220 : vector<1xf32> to vector<1x1x1xf32>
    %222 = vector.extract %221[0, 0, 0] : f32 from vector<1x1x1xf32>
    %cst_66 = arith.constant 1.280000e+02 : f32
    %223 = arith.divf %217, %cst_66 : f32
    %cst_67 = arith.constant 1.280000e+02 : f32
    %224 = arith.divf %222, %cst_67 : f32
    %225 = arith.mulf %223, %223 : f32
    %226 = arith.subf %224, %225 : f32
    %227 = vector.broadcast %223 : f32 to vector<1x8xf32>
    %cst_68 = arith.constant 9.99999974E-6 : f32
    %228 = arith.addf %226, %cst_68 : f32
    %229 = math.rsqrt %228 : f32
    %230 = vector.broadcast %229 : f32 to vector<1x8xf32>
    %231 = tpu.concatenate %209, %227 in 1 : vector<1x8xf32>, vector<1x8xf32> -> vector<1x16xf32>
    %232 = tpu.concatenate %212, %230 in 1 : vector<1x8xf32>, vector<1x8xf32> -> vector<1x16xf32>
    %233 = vector.broadcast %231 : vector<1x16xf32> to vector<16x16xf32>
    %234 = arith.subf %193, %233 : vector<16x16xf32>
    %235 = vector.broadcast %232 : vector<1x16xf32> to vector<16x16xf32>
    %236 = arith.mulf %234, %235 : vector<16x16xf32>
    %237 = arith.mulf %236, %194 : vector<16x16xf32>
    %c0_69 = arith.constant 0 : index
    %c0_70 = arith.constant 0 : index
    %238 = vector.load %arg16[%c0_69, %c0_70] : memref<16x16xf32, #tpu.memory_space<vmem>>, vector<16x16xf32>
    %239 = arith.addf %237, %238 : vector<16x16xf32>
    %240 = math.tanh %239 : vector<16x16xf32>
    %241 = vector.extract_strided_slice %240 {offsets = [0, 0], sizes = [16, 1], strides = [1, 1]} : vector<16x16xf32> to vector<16x1xf32>
    %242 = vector.extract_strided_slice %240 {offsets = [0, 0], sizes = [16, 15], strides = [1, 1]} : vector<16x16xf32> to vector<16x15xf32>
    %243 = tpu.concatenate %241, %242 in 1 : vector<16x1xf32>, vector<16x15xf32> -> vector<16x16xf32>
    %244 = vector.extract_strided_slice %240 {offsets = [0, 1], sizes = [16, 15], strides = [1, 1]} : vector<16x16xf32> to vector<16x15xf32>
    %245 = vector.extract_strided_slice %240 {offsets = [0, 15], sizes = [16, 1], strides = [1, 1]} : vector<16x16xf32> to vector<16x1xf32>
    %246 = tpu.concatenate %244, %245 in 1 : vector<16x15xf32>, vector<16x1xf32> -> vector<16x16xf32>
    %247 = vector.shape_cast %18 : vector<1x16xi1> to vector<1x16xi1>
    %248 = vector.broadcast %247 : vector<1x16xi1> to vector<16x16xi1>
    %249 = arith.select %248, %240, %243 : vector<16x16xi1>, vector<16x16xf32>
    %250 = vector.shape_cast %20 : vector<1x16xi1> to vector<1x16xi1>
    %251 = vector.broadcast %250 : vector<1x16xi1> to vector<16x16xi1>
    %252 = arith.select %251, %240, %246 : vector<16x16xi1>, vector<16x16xf32>
    %253 = tpu.concatenate %249, %240, %252 in 0 : vector<16x16xf32>, vector<16x16xf32>, vector<16x16xf32> -> vector<48x16xf32>
    %c0_71 = arith.constant 0 : index
    %c0_72 = arith.constant 0 : index
    %254 = vector.load %arg17[%c0_71, %c0_72] : memref<48x2xf32, #tpu.memory_space<vmem>>, vector<48x2xf32>
    %cst_73 = arith.constant dense<0.000000e+00> : vector<2x16xf32>
    %255 = tpu.matmul %254, %253, %cst_73 {dimension_numbers = #tpu.dot_dimension_numbers<[0], [0], [1], [1], [0, 1, 1, 1], [], []>} : vector<48x2xf32>, vector<48x16xf32>, vector<2x16xf32> -> vector<2x16xf32>
    %c0_74 = arith.constant 0 : index
    %c0_75 = arith.constant 0 : index
    %256 = vector.load %arg18[%c0_74, %c0_75] : memref<2x1xf32, #tpu.memory_space<vmem>>, vector<2x1xf32>
    %257 = vector.broadcast %256 : vector<2x1xf32> to vector<2x16xf32>
    %258 = arith.addf %255, %257 : vector<2x16xf32>
    %c0_76 = arith.constant 0 : index
    %c0_77 = arith.constant 0 : index
    %259 = vector.load %arg19[%c0_76, %c0_77] : memref<2x16xf32, #tpu.memory_space<vmem>>, vector<2x16xf32>
    tpu.vector_store %arg19[%c0_76, %c0_77], %258 {strides = array<i32>} : memref<2x16xf32, #tpu.memory_space<vmem>>, vector<2x16xf32>,
    return
  }
  func.func @transform_0(%arg0: i32) -> (i32, i32, i32) {
    %c0_i32 = arith.constant 0 : i32
    %c0_i32_0 = arith.constant 0 : i32
    %c0_i32_1 = arith.constant 0 : i32
    %c0_i32_2 = arith.constant 0 : i32
    return %c0_i32, %c0_i32_0, %c0_i32_1 : i32, i32, i32
  }
  func.func @transform_1(%arg0: i32) -> (i32, i32) {
    %c0_i32 = arith.constant 0 : i32
    %c0_i32_0 = arith.constant 0 : i32
    %c0_i32_1 = arith.constant 0 : i32
    return %c0_i32, %c0_i32_0 : i32, i32
  }
  func.func @transform_2(%arg0: i32) -> (i32, i32) {
    %c0_i32 = arith.constant 0 : i32
    %c0_i32_0 = arith.constant 0 : i32
    %c0_i32_1 = arith.constant 0 : i32
    return %c0_i32, %c0_i32_0 : i32, i32
  }
  func.func @transform_3(%arg0: i32) -> (i32, i32) {
    %c0_i32 = arith.constant 0 : i32
    %c0_i32_0 = arith.constant 0 : i32
    %c0_i32_1 = arith.constant 0 : i32
    return %c0_i32, %c0_i32_0 : i32, i32
  }
  func.func @transform_4(%arg0: i32) -> (i32, i32) {
    %c0_i32 = arith.constant 0 : i32
    %c0_i32_0 = arith.constant 0 : i32
    %c0_i32_1 = arith.constant 0 : i32
    return %c0_i32, %c0_i32_0 : i32, i32
  }
  func.func @transform_5(%arg0: i32) -> (i32, i32) {
    %c0_i32 = arith.constant 0 : i32
    %c0_i32_0 = arith.constant 0 : i32
    %c0_i32_1 = arith.constant 0 : i32
    return %c0_i32, %c0_i32_0 : i32, i32
  }
  func.func @transform_6(%arg0: i32) -> (i32, i32) {
    %c0_i32 = arith.constant 0 : i32
    %c0_i32_0 = arith.constant 0 : i32
    %c0_i32_1 = arith.constant 0 : i32
    return %c0_i32, %c0_i32_0 : i32, i32
  }
  func.func @transform_7(%arg0: i32) -> (i32, i32) {
    %c0_i32 = arith.constant 0 : i32
    %c0_i32_0 = arith.constant 0 : i32
    %c0_i32_1 = arith.constant 0 : i32
    return %c0_i32, %c0_i32_0 : i32, i32
  }
  func.func @transform_8(%arg0: i32) -> (i32, i32) {
    %c0_i32 = arith.constant 0 : i32
    %c0_i32_0 = arith.constant 0 : i32
    %c0_i32_1 = arith.constant 0 : i32
    return %c0_i32, %c0_i32_0 : i32, i32
  }
  func.func @transform_9(%arg0: i32) -> (i32, i32) {
    %c0_i32 = arith.constant 0 : i32
    %c0_i32_0 = arith.constant 0 : i32
    %c0_i32_1 = arith.constant 0 : i32
    return %c0_i32, %c0_i32_0 : i32, i32
  }
  func.func @transform_10(%arg0: i32) -> (i32, i32) {
    %c0_i32 = arith.constant 0 : i32
    %c0_i32_0 = arith.constant 0 : i32
    %c0_i32_1 = arith.constant 0 : i32
    return %c0_i32, %c0_i32_0 : i32, i32
  }
  func.func @transform_11(%arg0: i32) -> (i32, i32) {
    %c0_i32 = arith.constant 0 : i32
    %c0_i32_0 = arith.constant 0 : i32
    %c0_i32_1 = arith.constant 0 : i32
    return %c0_i32, %c0_i32_0 : i32, i32
  }
  func.func @transform_12(%arg0: i32) -> (i32, i32) {
    %c0_i32 = arith.constant 0 : i32
    %c0_i32_0 = arith.constant 0 : i32
    %c0_i32_1 = arith.constant 0 : i32
    return %c0_i32, %c0_i32_0 : i32, i32
  }
  func.func @transform_13(%arg0: i32) -> (i32, i32) {
    %c0_i32 = arith.constant 0 : i32
    %c0_i32_0 = arith.constant 0 : i32
    %c0_i32_1 = arith.constant 0 : i32
    return %c0_i32, %c0_i32_0 : i32, i32
  }
  func.func @transform_14(%arg0: i32) -> (i32, i32) {
    %c0_i32 = arith.constant 0 : i32
    %c0_i32_0 = arith.constant 0 : i32
    %c0_i32_1 = arith.constant 0 : i32
    return %c0_i32, %c0_i32_0 : i32, i32
  }
  func.func @transform_15(%arg0: i32) -> (i32, i32) {
    %c0_i32 = arith.constant 0 : i32
    %c0_i32_0 = arith.constant 0 : i32
    %c0_i32_1 = arith.constant 0 : i32
    return %c0_i32, %c0_i32_0 : i32, i32
  }
  func.func @transform_16(%arg0: i32) -> (i32, i32) {
    %c0_i32 = arith.constant 0 : i32
    %c0_i32_0 = arith.constant 0 : i32
    %c0_i32_1 = arith.constant 0 : i32
    return %c0_i32, %c0_i32_0 : i32, i32
  }
  func.func @transform_17(%arg0: i32) -> (i32, i32) {
    %c0_i32 = arith.constant 0 : i32
    %c0_i32_0 = arith.constant 0 : i32
    %c0_i32_1 = arith.constant 0 : i32
    return %c0_i32, %c0_i32_0 : i32, i32
  }
  func.func @transform_18(%arg0: i32) -> (i32, i32) {
    %c0_i32 = arith.constant 0 : i32
    %c0_i32_0 = arith.constant 0 : i32
    %c0_i32_1 = arith.constant 0 : i32
    return %c0_i32, %c0_i32_0 : i32, i32
  }
}

</mosaic_0001>

<llo_original>
// kernel: _lambda_.2
$region0: #{_lambda_.2}
  #allocation0 [shape = 'u32[]', space=smem, size = 0x4, offset = 0x4, fixed_abs, tag = 'smem constant byte address 0x4 - core index']
  #allocation1 [shape = 'u32[144,128]{1,0:T(1,128)}', space=vmem, size = 0x12000, scoped, tag = 'internal scratch']
  %s0 = inlined_call_operand.vmem [shape: f32[2,15,16], index: 0, kind: input, shape index: {}]
  %s1 = inlined_call_operand.vmem [shape: f32[2,40,15], index: 1, kind: input, shape index: {}]
  %s2 = inlined_call_operand.vmem [shape: f32[2,16,16], index: 2, kind: input, shape index: {}]
  %s3 = inlined_call_operand.vmem [shape: f32[2,1,16], index: 3, kind: input, shape index: {}]
  %s4 = inlined_call_operand.vmem [shape: f32[2,2,40,40], index: 4, kind: input, shape index: {}]
  %s5 = inlined_call_operand.vmem [shape: f32[2,2,32,32], index: 5, kind: input, shape index: {}]
  %s6 = inlined_call_operand.vmem [shape: f32[2,2,1,32], index: 6, kind: input, shape index: {}]
  %s7 = inlined_call_operand.vmem [shape: f32[2,2,40,32], index: 7, kind: input, shape index: {}]
  %s8 = inlined_call_operand.vmem [shape: f32[2,2,40,32], index: 8, kind: input, shape index: {}]
  %s9 = inlined_call_operand.vmem [shape: f32[2,40,80], index: 9, kind: input, shape index: {}]
  %s10 = inlined_call_operand.vmem [shape: f32[2,16,16], index: 10, kind: input, shape index: {}]
  %s11 = inlined_call_operand.vmem [shape: f32[2,1,16], index: 11, kind: input, shape index: {}]
  %s12 = inlined_call_operand.vmem [shape: f32[2,40,16], index: 12, kind: output, shape index: {}]
  %s13 = sld [smem:[#allocation0]]
  $region81: #{_lambda_.2} parent=0
    _
  %s15 = ssub.s32 1, %s13
  %s16 = scalar_select 0, %s15, %s13
  loop: start=0, step=1, limit=4
  $region2: #{_lambda_.2} parent=0 // loop_pre_header
    _
  $region3: #{_lambda_.2} parent=0 // loop_header
    %s18 = sphi 0, %s22
    %p19 = scmp.ge.s32.totalorder %s18, 4
    %s28 = sphi 0, %s30
    %s31 = sphi 0, %s28
    %s32 = sphi 0, %s31
    %s48 = sphi 0, %s32
    %s54 = sphi 0, %s56
    %s57 = sphi 0, %s54
    %s58 = sphi 0, %s57
    %s74 = sphi 0, %s58
    %s80 = sphi 0, %s82
    %s83 = sphi 0, %s80
    %s84 = sphi 0, %s83
    %s100 = sphi 0, %s84
    %s106 = sphi 0, %s108
    %s109 = sphi 0, %s106
    %s110 = sphi 0, %s109
    %s126 = sphi 0, %s110
    %s132 = sphi 0, %s134
    %s135 = sphi 0, %s132
    %s136 = sphi 0, %s135
    %s152 = sphi 0, %s136
    %s158 = sphi 0, %s160
    %s161 = sphi 0, %s158
    %s162 = sphi 0, %s161
    %s178 = sphi 0, %s162
    %s184 = sphi 0, %s186
    %s187 = sphi 0, %s184
    %s188 = sphi 0, %s187
    %s204 = sphi 0, %s188
    %s210 = sphi 0, %s212
    %s213 = sphi 0, %s210
    %s214 = sphi 0, %s213
    %s230 = sphi 0, %s214
    %s236 = sphi 0, %s238
    %s239 = sphi 0, %s236
    %s240 = sphi 0, %s239
    %s256 = sphi 0, %s240
    %s262 = sphi 0, %s264
    %s265 = sphi 0, %s262
    %s266 = sphi 0, %s265
    %s282 = sphi 0, %s266
    %s288 = sphi 0, %s290
    %s291 = sphi 0, %s288
    %s292 = sphi 0, %s291
    %s308 = sphi 0, %s292
    %s314 = sphi 0, %s316
    %s317 = sphi 0, %s314
    %s318 = sphi 0, %s317
    %s334 = sphi 0, %s318
    %s340 = sphi 0, %s342
    %s343 = sphi 0, %s340
    %s344 = sphi 0, %s343
    %s360 = sphi 0, %s344
  $region4: #{_lambda_.2} parent=0 // loop_header_branch
    %21 = sbr.rel (%p19) target = $region8
  $region5: #{_lambda_.2} parent=0 // loop_body
    %s23 = ssub.s32 %s18, 1
    %s24 = ssub.s32 %s18, 2
    %s25 = sadd.s32 %s18, 1
    %s26 = ssub.s32 %s18, %s25
    %p27 = scmp.eq.s32.totalorder %s26, 0
    %s29 = sadd.s32 %s28, 1
    %s30 = scalar_select %p27, %s28, %s29
    %p33 = pneg %p27
    %p34 = scmp.eq.s32.totalorder %s18, 1
    %p35 = por %p33, %p34
    %p36 = scmp.ne.s32.totalorder %s28, %s31
    %p37 = scmp.eq.s32.totalorder %s18, 0
    %p38 = por %p36, %p37
    %p39 = scmp.ne.s32.totalorder %s28, %s31
    %p40 = scmp.eq.s32.totalorder %s23, 1
    %p41 = por %p39, %p40
    %p42 = scmp.ne.s32.totalorder %s31, %s32
    %p43 = scmp.eq.s32.totalorder %s23, 0
    %p44 = por %p42, %p43
    %p45 = scmp.ne.s32.totalorder %s31, %s32
    %p46 = scmp.eq.s32.totalorder %s24, 1
    %p47 = por %p45, %p46
    %p49 = scmp.ne.s32.totalorder %s32, %s48
    %p50 = scmp.eq.s32.totalorder %s24, 0
    %p51 = por %p49, %p50
    %s52 = ssub.s32 %s18, %s25
    %p53 = scmp.eq.s32.totalorder %s52, 0
    %s55 = sadd.s32 %s54, 1
    %s56 = scalar_select %p53, %s54, %s55
    %p59 = pneg %p53
    %p60 = scmp.eq.s32.totalorder %s18, 1
    %p61 = por %p59, %p60
    %p62 = scmp.ne.s32.totalorder %s54, %s57
    %p63 = scmp.eq.s32.totalorder %s18, 0
    %p64 = por %p62, %p63
    %p65 = scmp.ne.s32.totalorder %s54, %s57
    %p66 = scmp.eq.s32.totalorder %s23, 1
    %p67 = por %p65, %p66
    %p68 = scmp.ne.s32.totalorder %s57, %s58
    %p69 = scmp.eq.s32.totalorder %s23, 0
    %p70 = por %p68, %p69
    %p71 = scmp.ne.s32.totalorder %s57, %s58
    %p72 = scmp.eq.s32.totalorder %s24, 1
    %p73 = por %p71, %p72
    %p75 = scmp.ne.s32.totalorder %s58, %s74
    %p76 = scmp.eq.s32.totalorder %s24, 0
    %p77 = por %p75, %p76
    %s78 = ssub.s32 %s18, %s25
    %p79 = scmp.eq.s32.totalorder %s78, 0
    %s81 = sadd.s32 %s80, 1
    %s82 = scalar_select %p79, %s80, %s81
    %p85 = pneg %p79
    %p86 = scmp.eq.s32.totalorder %s18, 1
    %p87 = por %p85, %p86
    %p88 = scmp.ne.s32.totalorder %s80, %s83
    %p89 = scmp.eq.s32.totalorder %s18, 0
    %p90 = por %p88, %p89
    %p91 = scmp.ne.s32.totalorder %s80, %s83
    %p92 = scmp.eq.s32.totalorder %s23, 1
    %p93 = por %p91, %p92
    %p94 = scmp.ne.s32.totalorder %s83, %s84
    %p95 = scmp.eq.s32.totalorder %s23, 0
    %p96 = por %p94, %p95
    %p97 = scmp.ne.s32.totalorder %s83, %s84
    %p98 = scmp.eq.s32.totalorder %s24, 1
    %p99 = por %p97, %p98
    %p101 = scmp.ne.s32.totalorder %s84, %s100
    %p102 = scmp.eq.s32.totalorder %s24, 0
    %p103 = por %p101, %p102
    %s104 = ssub.s32 %s18, %s25
    %p105 = scmp.eq.s32.totalorder %s104, 0
    %s107 = sadd.s32 %s106, 1
    %s108 = scalar_select %p105, %s106, %s107
    %p111 = pneg %p105
    %p112 = scmp.eq.s32.totalorder %s18, 1
    %p113 = por %p111, %p112
    %p114 = scmp.ne.s32.totalorder %s106, %s109
    %p115 = scmp.eq.s32.totalorder %s18, 0
    %p116 = por %p114, %p115
    %p117 = scmp.ne.s32.totalorder %s106, %s109
    %p118 = scmp.eq.s32.totalorder %s23, 1
    %p119 = por %p117, %p118
    %p120 = scmp.ne.s32.totalorder %s109, %s110
    %p121 = scmp.eq.s32.totalorder %s23, 0
    %p122 = por %p120, %p121
    %p123 = scmp.ne.s32.totalorder %s109, %s110
    %p124 = scmp.eq.s32.totalorder %s24, 1
    %p125 = por %p123, %p124
    %p127 = scmp.ne.s32.totalorder %s110, %s126
    %p128 = scmp.eq.s32.totalorder %s24, 0
    %p129 = por %p127, %p128
    %s130 = ssub.s32 %s18, %s25
    %p131 = scmp.eq.s32.totalorder %s130, 0
    %s133 = sadd.s32 %s132, 1
    %s134 = scalar_select %p131, %s132, %s133
    %p137 = pneg %p131
    %p138 = scmp.eq.s32.totalorder %s18, 1
    %p139 = por %p137, %p138
    %p140 = scmp.ne.s32.totalorder %s132, %s135
    %p141 = scmp.eq.s32.totalorder %s18, 0
    %p142 = por %p140, %p141
    %p143 = scmp.ne.s32.totalorder %s132, %s135
    %p144 = scmp.eq.s32.totalorder %s23, 1
    %p145 = por %p143, %p144
    %p146 = scmp.ne.s32.totalorder %s135, %s136
    %p147 = scmp.eq.s32.totalorder %s23, 0
    %p148 = por %p146, %p147
    %p149 = scmp.ne.s32.totalorder %s135, %s136
    %p150 = scmp.eq.s32.totalorder %s24, 1
    %p151 = por %p149, %p150
    %p153 = scmp.ne.s32.totalorder %s136, %s152
    %p154 = scmp.eq.s32.totalorder %s24, 0
    %p155 = por %p153, %p154
    %s156 = ssub.s32 %s18, %s25
    %p157 = scmp.eq.s32.totalorder %s156, 0
    %s159 = sadd.s32 %s158, 1
    %s160 = scalar_select %p157, %s158, %s159
    %p163 = pneg %p157
    %p164 = scmp.eq.s32.totalorder %s18, 1
    %p165 = por %p163, %p164
    %p166 = scmp.ne.s32.totalorder %s158, %s161
    %p167 = scmp.eq.s32.totalorder %s18, 0
    %p168 = por %p166, %p167
    %p169 = scmp.ne.s32.totalorder %s158, %s161
    %p170 = scmp.eq.s32.totalorder %s23, 1
    %p171 = por %p169, %p170
    %p172 = scmp.ne.s32.totalorder %s161, %s162
    %p173 = scmp.eq.s32.totalorder %s23, 0
    %p174 = por %p172, %p173
    %p175 = scmp.ne.s32.totalorder %s161, %s162
    %p176 = scmp.eq.s32.totalorder %s24, 1
    %p177 = por %p175, %p176
    %p179 = scmp.ne.s32.totalorder %s162, %s178
    %p180 = scmp.eq.s32.totalorder %s24, 0
    %p181 = por %p179, %p180
    %s182 = ssub.s32 %s18, %s25
    %p183 = scmp.eq.s32.totalorder %s182, 0
    %s185 = sadd.s32 %s184, 1
    %s186 = scalar_select %p183, %s184, %s185
    %p189 = pneg %p183
    %p190 = scmp.eq.s32.totalorder %s18, 1
    %p191 = por %p189, %p190
    %p192 = scmp.ne.s32.totalorder %s184, %s187
    %p193 = scmp.eq.s32.totalorder %s18, 0
    %p194 = por %p192, %p193
    %p195 = scmp.ne.s32.totalorder %s184, %s187
    %p196 = scmp.eq.s32.totalorder %s23, 1
    %p197 = por %p195, %p196
    %p198 = scmp.ne.s32.totalorder %s187, %s188
    %p199 = scmp.eq.s32.totalorder %s23, 0
    %p200 = por %p198, %p199
    %p201 = scmp.ne.s32.totalorder %s187, %s188
    %p202 = scmp.eq.s32.totalorder %s24, 1
    %p203 = por %p201, %p202
    %p205 = scmp.ne.s32.totalorder %s188, %s204
    %p206 = scmp.eq.s32.totalorder %s24, 0
    %p207 = por %p205, %p206
    %s208 = ssub.s32 %s18, %s25
    %p209 = scmp.eq.s32.totalorder %s208, 0
    %s211 = sadd.s32 %s210, 1
    %s212 = scalar_select %p209, %s210, %s211
    %p215 = pneg %p209
    %p216 = scmp.eq.s32.totalorder %s18, 1
    %p217 = por %p215, %p216
    %p218 = scmp.ne.s32.totalorder %s210, %s213
    %p219 = scmp.eq.s32.totalorder %s18, 0
    %p220 = por %p218, %p219
    %p221 = scmp.ne.s32.totalorder %s210, %s213
    %p222 = scmp.eq.s32.totalorder %s23, 1
    %p223 = por %p221, %p222
    %p224 = scmp.ne.s32.totalorder %s213, %s214
    %p225 = scmp.eq.s32.totalorder %s23, 0
    %p226 = por %p224, %p225
    %p227 = scmp.ne.s32.totalorder %s213, %s214
    %p228 = scmp.eq.s32.totalorder %s24, 1
    %p229 = por %p227, %p228
    %p231 = scmp.ne.s32.totalorder %s214, %s230
    %p232 = scmp.eq.s32.totalorder %s24, 0
    %p233 = por %p231, %p232
    %s234 = ssub.s32 %s18, %s25
    %p235 = scmp.eq.s32.totalorder %s234, 0
    %s237 = sadd.s32 %s236, 1
    %s238 = scalar_select %p235, %s236, %s237
    %p241 = pneg %p235
    %p242 = scmp.eq.s32.totalorder %s18, 1
    %p243 = por %p241, %p242
    %p244 = scmp.ne.s32.totalorder %s236, %s239
    %p245 = scmp.eq.s32.totalorder %s18, 0
    %p246 = por %p244, %p245
    %p247 = scmp.ne.s32.totalorder %s236, %s239
    %p248 = scmp.eq.s32.totalorder %s23, 1
    %p249 = por %p247, %p248
    %p250 = scmp.ne.s32.totalorder %s239, %s240
    %p251 = scmp.eq.s32.totalorder %s23, 0
    %p252 = por %p250, %p251
    %p253 = scmp.ne.s32.totalorder %s239, %s240
    %p254 = scmp.eq.s32.totalorder %s24, 1
    %p255 = por %p253, %p254
    %p257 = scmp.ne.s32.totalorder %s240, %s256
    %p258 = scmp.eq.s32.totalorder %s24, 0
    %p259 = por %p257, %p258
    %s260 = ssub.s32 %s18, %s25
    %p261 = scmp.eq.s32.totalorder %s260, 0
    %s263 = sadd.s32 %s262, 1
    %s264 = scalar_select %p261, %s262, %s263
    %p267 = pneg %p261
    %p268 = scmp.eq.s32.totalorder %s18, 1
    %p269 = por %p267, %p268
    %p270 = scmp.ne.s32.totalorder %s262, %s265
    %p271 = scmp.eq.s32.totalorder %s18, 0
    %p272 = por %p270, %p271
    %p273 = scmp.ne.s32.totalorder %s262, %s265
    %p274 = scmp.eq.s32.totalorder %s23, 1
    %p275 = por %p273, %p274
    %p276 = scmp.ne.s32.totalorder %s265, %s266
    %p277 = scmp.eq.s32.totalorder %s23, 0
    %p278 = por %p276, %p277
    %p279 = scmp.ne.s32.totalorder %s265, %s266
    %p280 = scmp.eq.s32.totalorder %s24, 1
    %p281 = por %p279, %p280
    %p283 = scmp.ne.s32.totalorder %s266, %s282
    %p284 = scmp.eq.s32.totalorder %s24, 0
    %p285 = por %p283, %p284
    %s286 = ssub.s32 %s18, %s25
    %p287 = scmp.eq.s32.totalorder %s286, 0
    %s289 = sadd.s32 %s288, 1
    %s290 = scalar_select %p287, %s288, %s289
    %p293 = pneg %p287
    %p294 = scmp.eq.s32.totalorder %s18, 1
    %p295 = por %p293, %p294
    %p296 = scmp.ne.s32.totalorder %s288, %s291
    %p297 = scmp.eq.s32.totalorder %s18, 0
    %p298 = por %p296, %p297
    %p299 = scmp.ne.s32.totalorder %s288, %s291
    %p300 = scmp.eq.s32.totalorder %s23, 1
    %p301 = por %p299, %p300
    %p302 = scmp.ne.s32.totalorder %s291, %s292
    %p303 = scmp.eq.s32.totalorder %s23, 0
    %p304 = por %p302, %p303
    %p305 = scmp.ne.s32.totalorder %s291, %s292
    %p306 = scmp.eq.s32.totalorder %s24, 1
    %p307 = por %p305, %p306
    %p309 = scmp.ne.s32.totalorder %s292, %s308
    %p310 = scmp.eq.s32.totalorder %s24, 0
    %p311 = por %p309, %p310
    %s312 = ssub.s32 %s18, %s25
    %p313 = scmp.eq.s32.totalorder %s312, 0
    %s315 = sadd.s32 %s314, 1
    %s316 = scalar_select %p313, %s314, %s315
    %p319 = pneg %p313
    %p320 = scmp.eq.s32.totalorder %s18, 1
    %p321 = por %p319, %p320
    %p322 = scmp.ne.s32.totalorder %s314, %s317
    %p323 = scmp.eq.s32.totalorder %s18, 0
    %p324 = por %p322, %p323
    %p325 = scmp.ne.s32.totalorder %s314, %s317
    %p326 = scmp.eq.s32.totalorder %s23, 1
    %p327 = por %p325, %p326
    %p328 = scmp.ne.s32.totalorder %s317, %s318
    %p329 = scmp.eq.s32.totalorder %s23, 0
    %p330 = por %p328, %p329
    %p331 = scmp.ne.s32.totalorder %s317, %s318
    %p332 = scmp.eq.s32.totalorder %s24, 1
    %p333 = por %p331, %p332
    %p335 = scmp.ne.s32.totalorder %s318, %s334
    %p336 = scmp.eq.s32.totalorder %s24, 0
    %p337 = por %p335, %p336
    %s338 = ssub.s32 %s18, %s25
    %p339 = scmp.eq.s32.totalorder %s338, 0
    %s341 = sadd.s32 %s340, 1
    %s342 = scalar_select %p339, %s340, %s341
    %p345 = pneg %p339
    %p346 = scmp.eq.s32.totalorder %s18, 1
    %p347 = por %p345, %p346
    %p348 = scmp.ne.s32.totalorder %s340, %s343
    %p349 = scmp.eq.s32.totalorder %s18, 0
    %p350 = por %p348, %p349
    %p351 = scmp.ne.s32.totalorder %s340, %s343
    %p352 = scmp.eq.s32.totalorder %s23, 1
    %p353 = por %p351, %p352
    %p354 = scmp.ne.s32.totalorder %s343, %s344
    %p355 = scmp.eq.s32.totalorder %s23, 0
    %p356 = por %p354, %p355
    %p357 = scmp.ne.s32.totalorder %s343, %s344
    %p358 = scmp.eq.s32.totalorder %s24, 1
    %p359 = por %p357, %p358
    %p361 = scmp.ne.s32.totalorder %s344, %s360
    %p362 = scmp.eq.s32.totalorder %s24, 0
    %p363 = por %p361, %p362
    %p364 = scmp.le.s32.totalorder 1, %s18
    %p365 = scmp.lt.s32.totalorder %s18, 3
    %p366 = pnand %p364, %p365
    %p367 = pneg %p366
    // Predicated region
    $region9: #{_lambda_.2} parent=5 // pred_check
      _
    $region10: #{_lambda_.2} parent=5 // pred_check_branch
      %369 = sbr.rel (%p366) target = $region12
    $region11: #{_lambda_.2} parent=5 // pred_region
      %s370 = ssub.s32 %s18, 1
    $region12: #{_lambda_.2} parent=5 // pred_fallthru
      _
    %p371 = scmp.lt.s32.totalorder %s18, 2
    // Predicated region
    $region13: #{_lambda_.2} parent=5 // pred_check
      %p372 = pneg %p371
    $region14: #{_lambda_.2} parent=5 // pred_check_branch
      %374 = sbr.rel (%p372) target = $region16
    $region15: #{_lambda_.2} parent=5 // pred_region
      // Predicated region
      $region17: #{_lambda_.2} parent=15 // pred_check
        %p375 = pneg %p38
      $region18: #{_lambda_.2} parent=15 // pred_check_branch
        %377 = sbr.rel (%p375) target = $region20
      $region19: #{_lambda_.2} parent=15 // pred_region
        %p378 = scmp.lt.s32.totalorder %s18, 1
        %s379 = scalar_select %p378, %s18, 1
        %s380 = smul.addr %s379, 2
        %s381 = smul.addr %s380, 8
        %s382 = scalar_lea.vmem %s0, %s381
      $region20: #{_lambda_.2} parent=15 // pred_fallthru
        _
      // Predicated region
      $region21: #{_lambda_.2} parent=15 // pred_check
        %p383 = pneg %p64
      $region22: #{_lambda_.2} parent=15 // pred_check_branch
        %385 = sbr.rel (%p383) target = $region24
      $region23: #{_lambda_.2} parent=15 // pred_region
        %p386 = scmp.lt.s32.totalorder %s18, 1
        %s387 = scalar_select %p386, %s18, 1
        %s388 = smul.addr %s387, 5
        %s389 = smul.addr %s388, 8
        %s390 = scalar_lea.vmem %s1, %s389
      $region24: #{_lambda_.2} parent=15 // pred_fallthru
        _
      // Predicated region
      $region25: #{_lambda_.2} parent=15 // pred_check
        %p391 = pneg %p90
      $region26: #{_lambda_.2} parent=15 // pred_check_branch
        %393 = sbr.rel (%p391) target = $region28
      $region27: #{_lambda_.2} parent=15 // pred_region
        %p394 = scmp.lt.s32.totalorder %s18, 1
        %s395 = scalar_select %p394, %s18, 1
        %s396 = smul.addr %s395, 2
        %s397 = smul.addr %s396, 8
        %s398 = scalar_lea.vmem %s2, %s397
      $region28: #{_lambda_.2} parent=15 // pred_fallthru
        _
      // Predicated region
      $region29: #{_lambda_.2} parent=15 // pred_check
        %p399 = pneg %p116
      $region30: #{_lambda_.2} parent=15 // pred_check_branch
        %401 = sbr.rel (%p399) target = $region32
      $region31: #{_lambda_.2} parent=15 // pred_region
        %p402 = scmp.lt.s32.totalorder %s18, 1
        %s403 = scalar_select %p402, %s18, 1
        %s404 = scalar_lea.vmem %s3, %s403
      $region32: #{_lambda_.2} parent=15 // pred_fallthru
        _
      // Predicated region
      $region33: #{_lambda_.2} parent=15 // pred_check
        %p405 = pneg %p142
      $region34: #{_lambda_.2} parent=15 // pred_check_branch
        %407 = sbr.rel (%p405) target = $region36
      $region35: #{_lambda_.2} parent=15 // pred_region
        %p408 = scmp.lt.s32.totalorder %s18, 1
        %s409 = scalar_select %p408, %s18, 1
        %s410 = smul.addr %s409, 10
        %s411 = smul.addr %s410, 8
        %s412 = scalar_lea.vmem %s4, %s411
      $region36: #{_lambda_.2} parent=15 // pred_fallthru
        _
      // Predicated region
      $region37: #{_lambda_.2} parent=15 // pred_check
        %p413 = pneg %p168
      $region38: #{_lambda_.2} parent=15 // pred_check_branch
        %415 = sbr.rel (%p413) target = $region40
      $region39: #{_lambda_.2} parent=15 // pred_region
        %p416 = scmp.lt.s32.totalorder %s18, 1
        %s417 = scalar_select %p416, %s18, 1
        %s418 = smul.addr %s417, 8
        %s419 = smul.addr %s418, 8
        %s420 = scalar_lea.vmem %s5, %s419
      $region40: #{_lambda_.2} parent=15 // pred_fallthru
        _
      // Predicated region
      $region41: #{_lambda_.2} parent=15 // pred_check
        %p421 = pneg %p194
      $region42: #{_lambda_.2} parent=15 // pred_check_branch
        %423 = sbr.rel (%p421) target = $region44
      $region43: #{_lambda_.2} parent=15 // pred_region
        %p424 = scmp.lt.s32.totalorder %s18, 1
        %s425 = scalar_select %p424, %s18, 1
        %s426 = smul.addr %s425, 2
        %s427 = scalar_lea.vmem %s6, %s426
      $region44: #{_lambda_.2} parent=15 // pred_fallthru
        _
      // Predicated region
      $region45: #{_lambda_.2} parent=15 // pred_check
        %p428 = pneg %p220
      $region46: #{_lambda_.2} parent=15 // pred_check_branch
        %430 = sbr.rel (%p428) target = $region48
      $region47: #{_lambda_.2} parent=15 // pred_region
        %p431 = scmp.lt.s32.totalorder %s18, 1
        %s432 = scalar_select %p431, %s18, 1
        %s433 = smul.addr %s432, 10
        %s434 = smul.addr %s433, 8
        %s435 = scalar_lea.vmem %s7, %s434
      $region48: #{_lambda_.2} parent=15 // pred_fallthru
        _
      // Predicated region
      $region49: #{_lambda_.2} parent=15 // pred_check
        %p436 = pneg %p246
      $region50: #{_lambda_.2} parent=15 // pred_check_branch
        %438 = sbr.rel (%p436) target = $region52
      $region51: #{_lambda_.2} parent=15 // pred_region
        %p439 = scmp.lt.s32.totalorder %s18, 1
        %s440 = scalar_select %p439, %s18, 1
        %s441 = smul.addr %s440, 10
        %s442 = smul.addr %s441, 8
        %s443 = scalar_lea.vmem %s8, %s442
      $region52: #{_lambda_.2} parent=15 // pred_fallthru
        _
      // Predicated region
      $region53: #{_lambda_.2} parent=15 // pred_check
        %p444 = pneg %p272
      $region54: #{_lambda_.2} parent=15 // pred_check_branch
        %446 = sbr.rel (%p444) target = $region56
      $region55: #{_lambda_.2} parent=15 // pred_region
        %p447 = scmp.lt.s32.totalorder %s18, 1
        %s448 = scalar_select %p447, %s18, 1
        %s449 = smul.addr %s448, 5
        %s450 = smul.addr %s449, 8
        %s451 = scalar_lea.vmem %s9, %s450
      $region56: #{_lambda_.2} parent=15 // pred_fallthru
        _
      // Predicated region
      $region57: #{_lambda_.2} parent=15 // pred_check
        %p452 = pneg %p298
      $region58: #{_lambda_.2} parent=15 // pred_check_branch
        %454 = sbr.rel (%p452) target = $region60
      $region59: #{_lambda_.2} parent=15 // pred_region
        %p455 = scmp.lt.s32.totalorder %s18, 1
        %s456 = scalar_select %p455, %s18, 1
        %s457 = smul.addr %s456, 2
        %s458 = smul.addr %s457, 8
        %s459 = scalar_lea.vmem %s10, %s458
      $region60: #{_lambda_.2} parent=15 // pred_fallthru
        _
      // Predicated region
      $region61: #{_lambda_.2} parent=15 // pred_check
        %p460 = pneg %p324
      $region62: #{_lambda_.2} parent=15 // pred_check_branch
        %462 = sbr.rel (%p460) target = $region64
      $region63: #{_lambda_.2} parent=15 // pred_region
        %p463 = scmp.lt.s32.totalorder %s18, 1
        %s464 = scalar_select %p463, %s18, 1
        %s465 = scalar_lea.vmem %s11, %s464
      $region64: #{_lambda_.2} parent=15 // pred_fallthru
        _
    $region16: #{_lambda_.2} parent=5 // pred_fallthru
      _
    %p466 = scmp.le.s32.totalorder 1, %s18
    %p467 = scmp.lt.s32.totalorder %s18, 3
    %p468 = pnand %p466, %p467
    %p469 = pneg %p468
    // Predicated region
    $region65: #{_lambda_.2} parent=5 // pred_check
      _
    $region66: #{_lambda_.2} parent=5 // pred_check_branch
      %471 = sbr.rel (%p468) target = $region68
    $region67: #{_lambda_.2} parent=5 // pred_region
      %s472 = ssub.s32 %s18, 1
      %p473 = scmp.lt.s32.totalorder %s23, 1
      %s474 = scalar_select %p473, %s23, 1
      %s475 = smul.addr %s474, 2
      %s476 = smul.addr %s475, 8
      %s477 = scalar_lea.vmem %s0, %s476
      %p478 = pneg %p44
      %p479 = pneg %p41
      %p480 = scmp.lt.s32.totalorder %s23, 1
      %s481 = scalar_select %p480, %s23, 1
      %s482 = smul.addr %s481, 5
      %s483 = smul.addr %s482, 8
      %s484 = scalar_lea.vmem %s1, %s483
      %p485 = pneg %p70
      %p486 = pneg %p67
      %p487 = scmp.lt.s32.totalorder %s23, 1
      %s488 = scalar_select %p487, %s23, 1
      %s489 = smul.addr %s488, 2
      %s490 = smul.addr %s489, 8
      %s491 = scalar_lea.vmem %s2, %s490
      %p492 = pneg %p96
      %p493 = pneg %p93
      %p494 = scmp.lt.s32.totalorder %s23, 1
      %s495 = scalar_select %p494, %s23, 1
      %s496 = scalar_lea.vmem %s3, %s495
      %p497 = pneg %p122
      %p498 = pneg %p119
      %p499 = scmp.lt.s32.totalorder %s23, 1
      %s500 = scalar_select %p499, %s23, 1
      %s501 = smul.addr %s500, 10
      %s502 = smul.addr %s501, 8
      %s503 = scalar_lea.vmem %s4, %s502
      %p504 = pneg %p148
      %p505 = pneg %p145
      %p506 = scmp.lt.s32.totalorder %s23, 1
      %s507 = scalar_select %p506, %s23, 1
      %s508 = smul.addr %s507, 8
      %s509 = smul.addr %s508, 8
      %s510 = scalar_lea.vmem %s5, %s509
      %p511 = pneg %p174
      %p512 = pneg %p171
      %p513 = scmp.lt.s32.totalorder %s23, 1
      %s514 = scalar_select %p513, %s23, 1
      %s515 = smul.addr %s514, 2
      %s516 = scalar_lea.vmem %s6, %s515
      %p517 = pneg %p200
      %p518 = pneg %p197
      %p519 = scmp.lt.s32.totalorder %s23, 1
      %s520 = scalar_select %p519, %s23, 1
      %s521 = smul.addr %s520, 10
      %s522 = smul.addr %s521, 8
      %s523 = scalar_lea.vmem %s7, %s522
      %p524 = pneg %p226
      %p525 = pneg %p223
      %p526 = scmp.lt.s32.totalorder %s23, 1
      %s527 = scalar_select %p526, %s23, 1
      %s528 = smul.addr %s527, 10
      %s529 = smul.addr %s528, 8
      %s530 = scalar_lea.vmem %s8, %s529
      %p531 = pneg %p252
      %p532 = pneg %p249
      %p533 = scmp.lt.s32.totalorder %s23, 1
      %s534 = scalar_select %p533, %s23, 1
      %s535 = smul.addr %s534, 5
      %s536 = smul.addr %s535, 8
      %s537 = scalar_lea.vmem %s9, %s536
      %p538 = pneg %p278
      %p539 = pneg %p275
      %p540 = scmp.lt.s32.totalorder %s23, 1
      %s541 = scalar_select %p540, %s23, 1
      %s542 = smul.addr %s541, 2
      %s543 = smul.addr %s542, 8
      %s544 = scalar_lea.vmem %s10, %s543
      %p545 = pneg %p304
      %p546 = pneg %p301
      %p547 = scmp.lt.s32.totalorder %s23, 1
      %s548 = scalar_select %p547, %s23, 1
      %s549 = scalar_lea.vmem %s11, %s548
      %p550 = pneg %p330
      %p551 = pneg %p327
      %p552 = pneg %p356
      %p553 = pneg %p353
      %p554 = scmp.lt.s32.totalorder %s23, 1
      %s555 = scalar_select %p554, %s23, 1
      %s556 = smul.addr %s555, 5
      %s557 = smul.addr %s556, 8
      %s558 = scalar_lea.vmem %s12, %s557
      %p559 = scmp.lt.s32.totalorder %s23, 1
      %s560 = scalar_select %p559, %s23, 1
      %s561 = smul.addr %s560, 2
      %s562 = smul.addr %s561, 8
      %s563 = scalar_lea.vmem %s0, %s562
      %p564 = scmp.lt.s32.totalorder %s23, 1
      %s565 = scalar_select %p564, %s23, 1
      %s566 = smul.addr %s565, 5
      %s567 = smul.addr %s566, 8
      %s568 = scalar_lea.vmem %s1, %s567
      %p569 = scmp.lt.s32.totalorder %s23, 1
      %s570 = scalar_select %p569, %s23, 1
      %s571 = smul.addr %s570, 2
      %s572 = smul.addr %s571, 8
      %s573 = scalar_lea.vmem %s2, %s572
      %p574 = scmp.lt.s32.totalorder %s23, 1
      %s575 = scalar_select %p574, %s23, 1
      %s576 = scalar_lea.vmem %s3, %s575
      %p577 = scmp.lt.s32.totalorder %s23, 1
      %s578 = scalar_select %p577, %s23, 1
      %s579 = smul.addr %s578, 10
      %s580 = smul.addr %s579, 8
      %s581 = scalar_lea.vmem %s4, %s580
      %p582 = scmp.lt.s32.totalorder %s23, 1
      %s583 = scalar_select %p582, %s23, 1
      %s584 = smul.addr %s583, 8
      %s585 = smul.addr %s584, 8
      %s586 = scalar_lea.vmem %s5, %s585
      %p587 = scmp.lt.s32.totalorder %s23, 1
      %s588 = scalar_select %p587, %s23, 1
      %s589 = smul.addr %s588, 2
      %s590 = scalar_lea.vmem %s6, %s589
      %p591 = scmp.lt.s32.totalorder %s23, 1
      %s592 = scalar_select %p591, %s23, 1
      %s593 = smul.addr %s592, 10
      %s594 = smul.addr %s593, 8
      %s595 = scalar_lea.vmem %s7, %s594
      %p596 = scmp.lt.s32.totalorder %s23, 1
      %s597 = scalar_select %p596, %s23, 1
      %s598 = smul.addr %s597, 10
      %s599 = smul.addr %s598, 8
      %s600 = scalar_lea.vmem %s8, %s599
      %p601 = scmp.lt.s32.totalorder %s23, 1
      %s602 = scalar_select %p601, %s23, 1
      %s603 = smul.addr %s602, 5
      %s604 = smul.addr %s603, 8
      %s605 = scalar_lea.vmem %s9, %s604
      %p606 = scmp.lt.s32.totalorder %s23, 1
      %s607 = scalar_select %p606, %s23, 1
      %s608 = smul.addr %s607, 2
      %s609 = smul.addr %s608, 8
      %s610 = scalar_lea.vmem %s10, %s609
      %p611 = scmp.lt.s32.totalorder %s23, 1
      %s612 = scalar_select %p611, %s23, 1
      %s613 = scalar_lea.vmem %s11, %s612
      %p614 = scmp.lt.s32.totalorder %s23, 1
      %s615 = scalar_select %p614, %s23, 1
      %s616 = smul.addr %s615, 5
      %s617 = smul.addr %s616, 8
      %s618 = scalar_lea.vmem %s12, %s617
      %v619 = vld [vmem:[%s563] sm:$0xff]
      %v620 = vld [vmem:[%s563 + $0x8] sm:$0x7f]
      %v621 = vld [vmem:[%s568] sm:$0xff]
      %v622 = vld [vmem:[%s568 + $0x8] sm:$0xff]
      %v623 = vld [vmem:[%s568 + $0x10] sm:$0xff]
      %v624 = vld [vmem:[%s568 + $0x18] sm:$0xff]
      %v625 = vld [vmem:[%s568 + $0x20] sm:$0xff]
      %vm626 = vcmask 121856
      %v628 = vsel %vm626, %v621, 0
      %v631 = vsel %vm626, %v622, 0
      %v634 = vsel %vm626, %v623, 0
      %v637 = vsel %vm626, %v624, 0
      %v640 = vsel %vm626, %v625, 0
      %vm642 = vcmask 1046528
      %v644 = vsel %vm642, %v620, 0
      %646 = vmatprep.subr.mxu0 0.0
      %647 = vmatpush1.msra.mxu0 0.0
      %648 = vmatprep.subr.mxu0 0.0
      %649 = vmatpush1.msra.mxu0 0.0
      %650 = vmatprep.subr.mxu0 0.0
      %651 = vmatpush1.msra.mxu0 0.0
      %652 = vmatprep.subr.mxu0 0.0
      %653 = vmatpush1.msra.mxu0 0.0
      %654 = vmatprep.subr.mxu0 0.0
      %655 = vmatpush1.msra.mxu0 0.0
      %656 = vmatprep.subr.mxu0 0.0
      %657 = vmatpush1.msra.mxu0 0.0
      %658 = vmatprep.subr.mxu0 0.0
      %659 = vmatpush1.msra.mxu0 0.0
      %660 = vmatprep.subr.mxu0 0.0
      %661 = vmatpush1.msra.mxu0 0.0
      %662 = vmatprep.subr.mxu0 0.0
      %663 = vmatpush1.msra.mxu0 0.0
      %664 = vmatprep.subr.mxu0 0.0
      %665 = vmatpush1.msra.mxu0 0.0
      %666 = vmatprep.subr.mxu0 0.0
      %667 = vmatpush1.msra.mxu0 0.0
      %668 = vmatprep.subr.mxu0 0.0
      %669 = vmatpush1.msra.mxu0 0.0
      %670 = vmatprep.subr.mxu0 0.0
      %671 = vmatpush1.msra.mxu0 0.0
      %672 = vmatprep.subr.mxu0 0.0
      %673 = vmatpush1.msra.mxu0 0.0
      %674 = vmatprep.subr.mxu0 0.0
      %675 = vmatpush1.msra.mxu0 %v644
      %676 = vmatprep.subr.mxu0 0.0
      %677 = vmatpush1.msra.mxu0 %v619
      %678 = vmatprep.subr.mxu0 0.0
      %679 = vmatpush2.msra.mxu0 0.0
      %680 = vmatprep.subr.mxu0 0.0
      %681 = vmatpush2.msra.mxu0 0.0
      %682 = vmatprep.subr.mxu0 0.0
      %683 = vmatpush2.msra.mxu0 0.0
      %684 = vmatprep.subr.mxu0 0.0
      %685 = vmatpush2.msra.mxu0 0.0
      %686 = vmatprep.subr.mxu0 0.0
      %687 = vmatpush2.msra.mxu0 0.0
      %688 = vmatprep.subr.mxu0 0.0
      %689 = vmatpush2.msra.mxu0 0.0
      %690 = vmatprep.subr.mxu0 0.0
      %691 = vmatpush2.msra.mxu0 0.0
      %692 = vmatprep.subr.mxu0 0.0
      %693 = vmatpush2.msra.mxu0 0.0
      %694 = vmatprep.subr.mxu0 0.0
      %695 = vmatpush2.msra.mxu0 0.0
      %696 = vmatprep.subr.mxu0 0.0
      %697 = vmatpush2.msra.mxu0 0.0
      %698 = vmatprep.subr.mxu0 0.0
      %699 = vmatpush2.msra.mxu0 0.0
      %700 = vmatprep.subr.mxu0 0.0
      %701 = vmatpush2.msra.mxu0 0.0
      %702 = vmatprep.subr.mxu0 0.0
      %703 = vmatpush2.msra.mxu0 0.0
      %704 = vmatprep.subr.mxu0 0.0
      %705 = vmatpush2.msra.mxu0 0.0
      %706 = vmatprep.subr.mxu0 0.0
      %707 = vmatpush2.msra.mxu0 0.0
      %708 = vmatprep.subr.mxu0 0.0
      %709 = vmatpush2.msra.mxu0 0.0
      %710 = vmatprep.mubr.f32.mxu0 0.0
      %711 = vmatmul.mubr.f32.gmra.mxu0 %v628
      %v712 = vpop.f32.mrf.mxu0
      %v713 = vadd.f32 0.0, %v712
      %v714 = vpop.f32.mrf.mxu0
      %715 = vmatprep.mubr.f32.mxu0 0.0
      %716 = vmatmul.mubr.f32.gmra.mxu0 %v631
      %v717 = vpop.f32.mrf.mxu0
      %v718 = vadd.f32 0.0, %v717
      %v719 = vpop.f32.mrf.mxu0
      %720 = vmatprep.mubr.f32.mxu0 0.0
      %721 = vmatmul.mubr.f32.gmra.mxu0 %v634
      %v722 = vpop.f32.mrf.mxu0
      %v723 = vadd.f32 0.0, %v722
      %v724 = vpop.f32.mrf.mxu0
      %725 = vmatprep.mubr.f32.mxu0 0.0
      %726 = vmatmul.mubr.f32.gmra.mxu0 %v637
      %v727 = vpop.f32.mrf.mxu0
      %v728 = vadd.f32 0.0, %v727
      %v729 = vpop.f32.mrf.mxu0
      %730 = vmatprep.mubr.f32.mxu0 0.0
      %731 = vmatmul.mubr.f32.gmra.mxu0 %v640
      %v732 = vpop.f32.mrf.mxu0
      %v733 = vadd.f32 0.0, %v732
      %v734 = vpop.f32.mrf.mxu0
      %735 = vdwg.mxu0
      %v736 = vld [vmem:[%s573] sm:$0xff]
      %v737 = vld [vmem:[%s573 + $0x8] sm:$0xff]
      %v738 = vld [vmem:[%s576] sm:$0x1]
      %v740 = vlaneseq
      %v741 = vshrl.u32 %v740, 7
      %v742 = vsub.s32 0, %v741
      %v743 = vrot.slane %v738, %v742
      %vm745 = vcmask 130048
      %v747 = vsel %vm745, %v713, 0
      %v750 = vsel %vm745, %v718, 0
      %v753 = vsel %vm745, %v723, 0
      %v756 = vsel %vm745, %v728, 0
      %v759 = vsel %vm745, %v733, 0
      %761 = vmatprep.subr.mxu0 0.0
      %762 = vmatpush1.msra.mxu0 0.0
      %763 = vmatprep.subr.mxu0 0.0
      %764 = vmatpush1.msra.mxu0 0.0
      %765 = vmatprep.subr.mxu0 0.0
      %766 = vmatpush1.msra.mxu0 0.0
      %767 = vmatprep.subr.mxu0 0.0
      %768 = vmatpush1.msra.mxu0 0.0
      %769 = vmatprep.subr.mxu0 0.0
      %770 = vmatpush1.msra.mxu0 0.0
      %771 = vmatprep.subr.mxu0 0.0
      %772 = vmatpush1.msra.mxu0 0.0
      %773 = vmatprep.subr.mxu0 0.0
      %774 = vmatpush1.msra.mxu0 0.0
      %775 = vmatprep.subr.mxu0 0.0
      %776 = vmatpush1.msra.mxu0 0.0
      %777 = vmatprep.subr.mxu0 0.0
      %778 = vmatpush1.msra.mxu0 0.0
      %779 = vmatprep.subr.mxu0 0.0
      %780 = vmatpush1.msra.mxu0 0.0
      %781 = vmatprep.subr.mxu0 0.0
      %782 = vmatpush1.msra.mxu0 0.0
      %783 = vmatprep.subr.mxu0 0.0
      %784 = vmatpush1.msra.mxu0 0.0
      %785 = vmatprep.subr.mxu0 0.0
      %786 = vmatpush1.msra.mxu0 0.0
      %787 = vmatprep.subr.mxu0 0.0
      %788 = vmatpush1.msra.mxu0 0.0
      %789 = vmatprep.subr.mxu0 0.0
      %790 = vmatpush1.msra.mxu0 %v737
      %791 = vmatprep.subr.mxu0 0.0
      %792 = vmatpush1.msra.mxu0 %v736
      %793 = vmatprep.subr.mxu0 0.0
      %794 = vmatpush2.msra.mxu0 0.0
      %795 = vmatprep.subr.mxu0 0.0
      %796 = vmatpush2.msra.mxu0 0.0
      %797 = vmatprep.subr.mxu0 0.0
      %798 = vmatpush2.msra.mxu0 0.0
      %799 = vmatprep.subr.mxu0 0.0
      %800 = vmatpush2.msra.mxu0 0.0
      %801 = vmatprep.subr.mxu0 0.0
      %802 = vmatpush2.msra.mxu0 0.0
      %803 = vmatprep.subr.mxu0 0.0
      %804 = vmatpush2.msra.mxu0 0.0
      %805 = vmatprep.subr.mxu0 0.0
      %806 = vmatpush2.msra.mxu0 0.0
      %807 = vmatprep.subr.mxu0 0.0
      %808 = vmatpush2.msra.mxu0 0.0
      %809 = vmatprep.subr.mxu0 0.0
      %810 = vmatpush2.msra.mxu0 0.0
      %811 = vmatprep.subr.mxu0 0.0
      %812 = vmatpush2.msra.mxu0 0.0
      %813 = vmatprep.subr.mxu0 0.0
      %814 = vmatpush2.msra.mxu0 0.0
      %815 = vmatprep.subr.mxu0 0.0
      %816 = vmatpush2.msra.mxu0 0.0
      %817 = vmatprep.subr.mxu0 0.0
      %818 = vmatpush2.msra.mxu0 0.0
      %819 = vmatprep.subr.mxu0 0.0
      %820 = vmatpush2.msra.mxu0 0.0
      %821 = vmatprep.subr.mxu0 0.0
      %822 = vmatpush2.msra.mxu0 0.0
      %823 = vmatprep.subr.mxu0 0.0
      %824 = vmatpush2.msra.mxu0 0.0
      %825 = vmatprep.mubr.f32.mxu0 0.0
      %826 = vmatmul.mubr.f32.gmra.mxu0 %v747
      %v827 = vpop.f32.mrf.mxu0
      %v828 = vadd.f32 %v743, %v827
      %v829 = vpop.f32.mrf.mxu0
      %830 = vmatprep.mubr.f32.mxu0 0.0
      %831 = vmatmul.mubr.f32.gmra.mxu0 %v750
      %v832 = vpop.f32.mrf.mxu0
      %v833 = vadd.f32 %v743, %v832
      %v834 = vpop.f32.mrf.mxu0
      %835 = vmatprep.mubr.f32.mxu0 0.0
      %836 = vmatmul.mubr.f32.gmra.mxu0 %v753
      %v837 = vpop.f32.mrf.mxu0
      %v838 = vadd.f32 %v743, %v837
      %v839 = vpop.f32.mrf.mxu0
      %840 = vmatprep.mubr.f32.mxu0 0.0
      %841 = vmatmul.mubr.f32.gmra.mxu0 %v756
      %v842 = vpop.f32.mrf.mxu0
      %v843 = vadd.f32 %v743, %v842
      %v844 = vpop.f32.mrf.mxu0
      %845 = vmatprep.mubr.f32.mxu0 0.0
      %846 = vmatmul.mubr.f32.gmra.mxu0 %v759
      %v847 = vpop.f32.mrf.mxu0
      %v848 = vadd.f32 %v743, %v847
      %v849 = vpop.f32.mrf.mxu0
      %850 = vdwg.mxu0
      %856 = vrot.lane.b32.xlu0 %v828, 8
      %v857 = vpop.permute.xlu0 %856
      %858 = vrot.lane.b32.xlu0 %v833, 8
      %v859 = vpop.permute.xlu0 %858
      %860 = vrot.lane.b32.xlu0 %v838, 8
      %v861 = vpop.permute.xlu0 %860
      %862 = vrot.lane.b32.xlu0 %v843, 8
      %v863 = vpop.permute.xlu0 %862
      %864 = vrot.lane.b32.xlu0 %v848, 8
      %v865 = vpop.permute.xlu0 %864
      %871 = vrot.lane.b32.xlu0 %v828, 16
      %v872 = vpop.permute.xlu0 %871
      %873 = vrot.lane.b32.xlu0 %v833, 16
      %v874 = vpop.permute.xlu0 %873
      %875 = vrot.lane.b32.xlu0 %v838, 16
      %v876 = vpop.permute.xlu0 %875
      %877 = vrot.lane.b32.xlu0 %v843, 16
      %v878 = vpop.permute.xlu0 %877
      %879 = vrot.lane.b32.xlu0 %v848, 16
      %v880 = vpop.permute.xlu0 %879
      %vm886 = vcmask 64512
      %v887 = vsel %vm886, %v828, %v857
      %v888 = vsel %vm886, %v833, %v859
      %v889 = vsel %vm886, %v838, %v861
      %v890 = vsel %vm886, %v843, %v863
      %v891 = vsel %vm886, %v848, %v865
      %v892 = vsel %vm745, %v887, %v857
      %v893 = vsel %vm745, %v888, %v859
      %v894 = vsel %vm745, %v889, %v861
      %v895 = vsel %vm745, %v890, %v863
      %v896 = vsel %vm745, %v891, %v865
      %vm897 = vcmask 195584
      %v898 = vsel %vm897, %v892, %v872
      %v899 = vsel %vm897, %v893, %v874
      %v900 = vsel %vm897, %v894, %v876
      %v901 = vsel %vm897, %v895, %v878
      %v902 = vsel %vm897, %v896, %v880
      %v903 = vld [vmem:[%s581] sm:$0xff]
      %v904 = vld [vmem:[%s581 + $0x8] sm:$0xff]
      %v905 = vld [vmem:[%s581 + $0x10] sm:$0xff]
      %v906 = vld [vmem:[%s581 + $0x18] sm:$0xff]
      %v907 = vld [vmem:[%s581 + $0x20] sm:$0xff]
      %vm908 = vcmask 326656
      %v910 = vsel %vm908, %v903, 0
      %v913 = vsel %vm908, %v904, 0
      %v916 = vsel %vm908, %v905, 0
      %v919 = vsel %vm908, %v906, 0
      %v922 = vsel %vm908, %v907, 0
      %924 = vmatprep.subr.mxu0 0.0
      %925 = vmatpush1.msra.mxu0 0.0
      %926 = vmatprep.subr.mxu0 0.0
      %927 = vmatpush1.msra.mxu0 0.0
      %928 = vmatprep.subr.mxu0 0.0
      %929 = vmatpush1.msra.mxu0 0.0
      %930 = vmatprep.subr.mxu0 0.0
      %931 = vmatpush1.msra.mxu0 0.0
      %932 = vmatprep.subr.mxu0 0.0
      %933 = vmatpush1.msra.mxu0 0.0
      %934 = vmatprep.subr.mxu0 0.0
      %935 = vmatpush1.msra.mxu0 0.0
      %936 = vmatprep.subr.mxu0 0.0
      %937 = vmatpush1.msra.mxu0 0.0
      %938 = vmatprep.subr.mxu0 0.0
      %939 = vmatpush1.msra.mxu0 0.0
      %940 = vmatprep.subr.mxu0 0.0
      %941 = vmatpush1.msra.mxu0 0.0
      %942 = vmatprep.subr.mxu0 0.0
      %943 = vmatpush1.msra.mxu0 0.0
      %944 = vmatprep.subr.mxu0 0.0
      %945 = vmatpush1.msra.mxu0 0.0
      %946 = vmatprep.subr.mxu0 0.0
      %947 = vmatpush1.msra.mxu0 %v902
      %948 = vmatprep.subr.mxu0 0.0
      %949 = vmatpush1.msra.mxu0 %v901
      %950 = vmatprep.subr.mxu0 0.0
      %951 = vmatpush1.msra.mxu0 %v900
      %952 = vmatprep.subr.mxu0 0.0
      %953 = vmatpush1.msra.mxu0 %v899
      %954 = vmatprep.subr.mxu0 0.0
      %955 = vmatpush1.msra.mxu0 %v898
      %956 = vmatprep.subr.mxu0 0.0
      %957 = vmatpush2.msra.mxu0 0.0
      %958 = vmatprep.subr.mxu0 0.0
      %959 = vmatpush2.msra.mxu0 0.0
      %960 = vmatprep.subr.mxu0 0.0
      %961 = vmatpush2.msra.mxu0 0.0
      %962 = vmatprep.subr.mxu0 0.0
      %963 = vmatpush2.msra.mxu0 0.0
      %964 = vmatprep.subr.mxu0 0.0
      %965 = vmatpush2.msra.mxu0 0.0
      %966 = vmatprep.subr.mxu0 0.0
      %967 = vmatpush2.msra.mxu0 0.0
      %968 = vmatprep.subr.mxu0 0.0
      %969 = vmatpush2.msra.mxu0 0.0
      %970 = vmatprep.subr.mxu0 0.0
      %971 = vmatpush2.msra.mxu0 0.0
      %972 = vmatprep.subr.mxu0 0.0
      %973 = vmatpush2.msra.mxu0 0.0
      %974 = vmatprep.subr.mxu0 0.0
      %975 = vmatpush2.msra.mxu0 0.0
      %976 = vmatprep.subr.mxu0 0.0
      %977 = vmatpush2.msra.mxu0 0.0
      %978 = vmatprep.subr.mxu0 0.0
      %979 = vmatpush2.msra.mxu0 0.0
      %980 = vmatprep.subr.mxu0 0.0
      %981 = vmatpush2.msra.mxu0 0.0
      %982 = vmatprep.subr.mxu0 0.0
      %983 = vmatpush2.msra.mxu0 0.0
      %984 = vmatprep.subr.mxu0 0.0
      %985 = vmatpush2.msra.mxu0 0.0
      %986 = vmatprep.subr.mxu0 0.0
      %987 = vmatpush2.msra.mxu0 0.0
      %988 = vmatprep.mubr.f32.mxu0 0.0
      %989 = vmatmul.mubr.f32.gmra.mxu0 %v910
      %v990 = vpop.f32.mrf.mxu0
      %v991 = vadd.f32 0.0, %v990
      %v992 = vpop.f32.mrf.mxu0
      %993 = vmatprep.mubr.f32.mxu0 0.0
      %994 = vmatmul.mubr.f32.gmra.mxu0 %v913
      %v995 = vpop.f32.mrf.mxu0
      %v996 = vadd.f32 0.0, %v995
      %v997 = vpop.f32.mrf.mxu0
      %998 = vmatprep.mubr.f32.mxu0 0.0
      %999 = vmatmul.mubr.f32.gmra.mxu0 %v916
      %v1000 = vpop.f32.mrf.mxu0
      %v1001 = vadd.f32 0.0, %v1000
      %v1002 = vpop.f32.mrf.mxu0
      %1003 = vmatprep.mubr.f32.mxu0 0.0
      %1004 = vmatmul.mubr.f32.gmra.mxu0 %v919
      %v1005 = vpop.f32.mrf.mxu0
      %v1006 = vadd.f32 0.0, %v1005
      %v1007 = vpop.f32.mrf.mxu0
      %1008 = vmatprep.mubr.f32.mxu0 0.0
      %1009 = vmatmul.mubr.f32.gmra.mxu0 %v922
      %v1010 = vpop.f32.mrf.mxu0
      %v1011 = vadd.f32 0.0, %v1010
      %v1012 = vpop.f32.mrf.mxu0
      %1013 = vdwg.mxu0
      %v1014 = vld [vmem:[%s586] sm:$0xff]
      %v1015 = vld [vmem:[%s586 + $0x8] sm:$0xff]
      %v1016 = vld [vmem:[%s586 + $0x10] sm:$0xff]
      %v1017 = vld [vmem:[%s586 + $0x18] sm:$0xff]
      %v1018 = vld [vmem:[%s590] sm:$0x1]
      %v1020 = vlaneseq
      %v1021 = vshrl.u32 %v1020, 7
      %v1022 = vsub.s32 0, %v1021
      %v1023 = vrot.slane %v1018, %v1022
      %vm1025 = vcmask 261120
      %v1027 = vsel %vm1025, %v991, 0
      %v1030 = vsel %vm1025, %v996, 0
      %v1033 = vsel %vm1025, %v1001, 0
      %v1036 = vsel %vm1025, %v1006, 0
      %v1039 = vsel %vm1025, %v1011, 0
      %1041 = vmatprep.subr.mxu0 0.0
      %1042 = vmatpush1.msra.mxu0 0.0
      %1043 = vmatprep.subr.mxu0 0.0
      %1044 = vmatpush1.msra.mxu0 0.0
      %1045 = vmatprep.subr.mxu0 0.0
      %1046 = vmatpush1.msra.mxu0 0.0
      %1047 = vmatprep.subr.mxu0 0.0
      %1048 = vmatpush1.msra.mxu0 0.0
      %1049 = vmatprep.subr.mxu0 0.0
      %1050 = vmatpush1.msra.mxu0 0.0
      %1051 = vmatprep.subr.mxu0 0.0
      %1052 = vmatpush1.msra.mxu0 0.0
      %1053 = vmatprep.subr.mxu0 0.0
      %1054 = vmatpush1.msra.mxu0 0.0
      %1055 = vmatprep.subr.mxu0 0.0
      %1056 = vmatpush1.msra.mxu0 0.0
      %1057 = vmatprep.subr.mxu0 0.0
      %1058 = vmatpush1.msra.mxu0 0.0
      %1059 = vmatprep.subr.mxu0 0.0
      %1060 = vmatpush1.msra.mxu0 0.0
      %1061 = vmatprep.subr.mxu0 0.0
      %1062 = vmatpush1.msra.mxu0 0.0
      %1063 = vmatprep.subr.mxu0 0.0
      %1064 = vmatpush1.msra.mxu0 0.0
      %1065 = vmatprep.subr.mxu0 0.0
      %1066 = vmatpush1.msra.mxu0 %v1017
      %1067 = vmatprep.subr.mxu0 0.0
      %1068 = vmatpush1.msra.mxu0 %v1016
      %1069 = vmatprep.subr.mxu0 0.0
      %1070 = vmatpush1.msra.mxu0 %v1015
      %1071 = vmatprep.subr.mxu0 0.0
      %1072 = vmatpush1.msra.mxu0 %v1014
      %1073 = vmatprep.subr.mxu0 0.0
      %1074 = vmatpush2.msra.mxu0 0.0
      %1075 = vmatprep.subr.mxu0 0.0
      %1076 = vmatpush2.msra.mxu0 0.0
      %1077 = vmatprep.subr.mxu0 0.0
      %1078 = vmatpush2.msra.mxu0 0.0
      %1079 = vmatprep.subr.mxu0 0.0
      %1080 = vmatpush2.msra.mxu0 0.0
      %1081 = vmatprep.subr.mxu0 0.0
      %1082 = vmatpush2.msra.mxu0 0.0
      %1083 = vmatprep.subr.mxu0 0.0
      %1084 = vmatpush2.msra.mxu0 0.0
      %1085 = vmatprep.subr.mxu0 0.0
      %1086 = vmatpush2.msra.mxu0 0.0
      %1087 = vmatprep.subr.mxu0 0.0
      %1088 = vmatpush2.msra.mxu0 0.0
      %1089 = vmatprep.subr.mxu0 0.0
      %1090 = vmatpush2.msra.mxu0 0.0
      %1091 = vmatprep.subr.mxu0 0.0
      %1092 = vmatpush2.msra.mxu0 0.0
      %1093 = vmatprep.subr.mxu0 0.0
      %1094 = vmatpush2.msra.mxu0 0.0
      %1095 = vmatprep.subr.mxu0 0.0
      %1096 = vmatpush2.msra.mxu0 0.0
      %1097 = vmatprep.subr.mxu0 0.0
      %1098 = vmatpush2.msra.mxu0 0.0
      %1099 = vmatprep.subr.mxu0 0.0
      %1100 = vmatpush2.msra.mxu0 0.0
      %1101 = vmatprep.subr.mxu0 0.0
      %1102 = vmatpush2.msra.mxu0 0.0
      %1103 = vmatprep.subr.mxu0 0.0
      %1104 = vmatpush2.msra.mxu0 0.0
      %1105 = vmatprep.mubr.f32.mxu0 0.0
      %1106 = vmatmul.mubr.f32.gmra.mxu0 %v1027
      %v1107 = vpop.f32.mrf.mxu0
      %v1108 = vadd.f32 %v1023, %v1107
      %v1109 = vpop.f32.mrf.mxu0
      %1110 = vmatprep.mubr.f32.mxu0 0.0
      %1111 = vmatmul.mubr.f32.gmra.mxu0 %v1030
      %v1112 = vpop.f32.mrf.mxu0
      %v1113 = vadd.f32 %v1023, %v1112
      %v1114 = vpop.f32.mrf.mxu0
      %1115 = vmatprep.mubr.f32.mxu0 0.0
      %1116 = vmatmul.mubr.f32.gmra.mxu0 %v1033
      %v1117 = vpop.f32.mrf.mxu0
      %v1118 = vadd.f32 %v1023, %v1117
      %v1119 = vpop.f32.mrf.mxu0
      %1120 = vmatprep.mubr.f32.mxu0 0.0
      %1121 = vmatmul.mubr.f32.gmra.mxu0 %v1036
      %v1122 = vpop.f32.mrf.mxu0
      %v1123 = vadd.f32 %v1023, %v1122
      %v1124 = vpop.f32.mrf.mxu0
      %1125 = vmatprep.mubr.f32.mxu0 0.0
      %1126 = vmatmul.mubr.f32.gmra.mxu0 %v1039
      %v1127 = vpop.f32.mrf.mxu0
      %v1128 = vadd.f32 %v1023, %v1127
      %v1129 = vpop.f32.mrf.mxu0
      %1130 = vdwg.mxu0
      %v1131 = vsel %vm745, %v1108, 0.0
      %v1132 = vsel %vm745, %v1113, 0.0
      %v1133 = vadd.f32 %v1131, %v1132
      %v1134 = vsel %vm745, %v1118, 0.0
      %v1135 = vadd.f32 %v1133, %v1134
      %v1136 = vsel %vm745, %v1123, 0.0
      %v1137 = vadd.f32 %v1135, %v1136
      %v1138 = vsel %vm745, %v1128, 0.0
      %v1139 = vadd.f32 %v1137, %v1138
      %1140 = vadd.xlane.f32.xlu0 %v1139
      %v1141 = vpop.xlane.xlu0 %1140
      %v1142 = vrot.slane %v1141, 4
      %v1143 = vadd.f32 %v1141, %v1142
      %v1144 = vrot.slane %v1143, 2
      %v1145 = vadd.f32 %v1143, %v1144
      %v1146 = vrot.slane %v1145, 1
      %v1147 = vadd.f32 %v1145, %v1146
      %s1148 = vtos %v1147
      %v1149 = vmul.f32 %v1108, %v1108
      %v1150 = vmul.f32 %v1113, %v1113
      %v1151 = vmul.f32 %v1118, %v1118
      %v1152 = vmul.f32 %v1123, %v1123
      %v1153 = vmul.f32 %v1128, %v1128
      %v1154 = vsel %vm745, %v1149, 0.0
      %v1155 = vsel %vm745, %v1150, 0.0
      %v1156 = vadd.f32 %v1154, %v1155
      %v1157 = vsel %vm745, %v1151, 0.0
      %v1158 = vadd.f32 %v1156, %v1157
      %v1159 = vsel %vm745, %v1152, 0.0
      %v1160 = vadd.f32 %v1158, %v1159
      %v1161 = vsel %vm745, %v1153, 0.0
      %v1162 = vadd.f32 %v1160, %v1161
      %1163 = vadd.xlane.f32.xlu0 %v1162
      %v1164 = vpop.xlane.xlu0 %1163
      %v1165 = vrot.slane %v1164, 4
      %v1166 = vadd.f32 %v1164, %v1165
      %v1167 = vrot.slane %v1166, 2
      %v1168 = vadd.f32 %v1166, %v1167
      %v1169 = vrot.slane %v1168, 1
      %v1170 = vadd.f32 %v1168, %v1169
      %s1171 = vtos %v1170
      %v1172 = vrcp.pop 640.0
      %s1173 = vtos %v1172
      %s1174 = smul.f32 %s1148, %s1173
      %v1175 = vrcp.pop 640.0
      %s1176 = vtos %v1175
      %s1177 = smul.f32 %s1171, %s1176
      %s1178 = smul.f32 %s1174, %s1174
      %s1179 = ssub.f32 %s1177, %s1178
      %v1180 = vstv %s1174
      %s1181 = sadd.f32 %s1179, 1e-05
      %v1182 = vstv %s1181
      %v1183 = vrsqrt.pop %v1182
      %s1184 = vtos %v1183
      %v1185 = vstv %s1184
      %1191 = vrot.lane.b32.xlu0 %v1108, 112
      %v1192 = vpop.permute.xlu0 %1191
      %1193 = vrot.lane.b32.xlu0 %v1113, 112
      %v1194 = vpop.permute.xlu0 %1193
      %1195 = vrot.lane.b32.xlu0 %v1118, 112
      %v1196 = vpop.permute.xlu0 %1195
      %1197 = vrot.lane.b32.xlu0 %v1123, 112
      %v1198 = vpop.permute.xlu0 %1197
      %1199 = vrot.lane.b32.xlu0 %v1128, 112
      %v1200 = vpop.permute.xlu0 %1199
      %v1206 = vsel %vm745, %v1192, 0.0
      %v1207 = vsel %vm745, %v1194, 0.0
      %v1208 = vadd.f32 %v1206, %v1207
      %v1209 = vsel %vm745, %v1196, 0.0
      %v1210 = vadd.f32 %v1208, %v1209
      %v1211 = vsel %vm745, %v1198, 0.0
      %v1212 = vadd.f32 %v1210, %v1211
      %v1213 = vsel %vm745, %v1200, 0.0
      %v1214 = vadd.f32 %v1212, %v1213
      %1215 = vadd.xlane.f32.xlu0 %v1214
      %v1216 = vpop.xlane.xlu0 %1215
      %v1217 = vrot.slane %v1216, 4
      %v1218 = vadd.f32 %v1216, %v1217
      %v1219 = vrot.slane %v1218, 2
      %v1220 = vadd.f32 %v1218, %v1219
      %v1221 = vrot.slane %v1220, 1
      %v1222 = vadd.f32 %v1220, %v1221
      %s1223 = vtos %v1222
      %1229 = vrot.lane.b32.xlu0 %v1149, 112
      %v1230 = vpop.permute.xlu0 %1229
      %1231 = vrot.lane.b32.xlu0 %v1150, 112
      %v1232 = vpop.permute.xlu0 %1231
      %1233 = vrot.lane.b32.xlu0 %v1151, 112
      %v1234 = vpop.permute.xlu0 %1233
      %1235 = vrot.lane.b32.xlu0 %v1152, 112
      %v1236 = vpop.permute.xlu0 %1235
      %1237 = vrot.lane.b32.xlu0 %v1153, 112
      %v1238 = vpop.permute.xlu0 %1237
      %v1244 = vsel %vm745, %v1230, 0.0
      %v1245 = vsel %vm745, %v1232, 0.0
      %v1246 = vadd.f32 %v1244, %v1245
      %v1247 = vsel %vm745, %v1234, 0.0
      %v1248 = vadd.f32 %v1246, %v1247
      %v1249 = vsel %vm745, %v1236, 0.0
      %v1250 = vadd.f32 %v1248, %v1249
      %v1251 = vsel %vm745, %v1238, 0.0
      %v1252 = vadd.f32 %v1250, %v1251
      %1253 = vadd.xlane.f32.xlu0 %v1252
      %v1254 = vpop.xlane.xlu0 %1253
      %v1255 = vrot.slane %v1254, 4
      %v1256 = vadd.f32 %v1254, %v1255
      %v1257 = vrot.slane %v1256, 2
      %v1258 = vadd.f32 %v1256, %v1257
      %v1259 = vrot.slane %v1258, 1
      %v1260 = vadd.f32 %v1258, %v1259
      %s1261 = vtos %v1260
      %v1262 = vrcp.pop 640.0
      %s1263 = vtos %v1262
      %s1264 = smul.f32 %s1223, %s1263
      %v1265 = vrcp.pop 640.0
      %s1266 = vtos %v1265
      %s1267 = smul.f32 %s1261, %s1266
      %s1268 = smul.f32 %s1264, %s1264
      %s1269 = ssub.f32 %s1267, %s1268
      %v1270 = vstv %s1264
      %s1271 = sadd.f32 %s1269, 1e-05
      %v1272 = vstv %s1271
      %v1273 = vrsqrt.pop %v1272
      %s1274 = vtos %v1273
      %v1275 = vstv %s1274
      %v1276 = vsel %vm745, %v1180, %v1270
      %v1277 = vsel %vm745, %v1185, %v1275
      %v1278 = vlaneseq
      %v1279 = vshrl.u32 %v1278, 7
      %v1280 = vsub.s32 0, %v1279
      %v1281 = vrot.slane %v1276, %v1280
      %v1282 = vsub.f32 %v1108, %v1281
      %v1283 = vsub.f32 %v1113, %v1281
      %v1284 = vsub.f32 %v1118, %v1281
      %v1285 = vsub.f32 %v1123, %v1281
      %v1286 = vsub.f32 %v1128, %v1281
      %v1287 = vlaneseq
      %v1288 = vshrl.u32 %v1287, 7
      %v1289 = vsub.s32 0, %v1288
      %v1290 = vrot.slane %v1277, %v1289
      %v1291 = vmul.f32 %v1282, %v1290
      %v1292 = vmul.f32 %v1283, %v1290
      %v1293 = vmul.f32 %v1284, %v1290
      %v1294 = vmul.f32 %v1285, %v1290
      %v1295 = vmul.f32 %v1286, %v1290
      %v1296 = vld [vmem:[%s595] sm:$0xff]
      %v1297 = vld [vmem:[%s595 + $0x8] sm:$0xff]
      %v1298 = vld [vmem:[%s595 + $0x10] sm:$0xff]
      %v1299 = vld [vmem:[%s595 + $0x18] sm:$0xff]
      %v1300 = vld [vmem:[%s595 + $0x20] sm:$0xff]
      %v1301 = vmul.f32 %v1291, %v1296
      %v1302 = vmul.f32 %v1292, %v1297
      %v1303 = vmul.f32 %v1293, %v1298
      %v1304 = vmul.f32 %v1294, %v1299
      %v1305 = vmul.f32 %v1295, %v1300
      %v1306 = vld [vmem:[%s600] sm:$0xff]
      %v1307 = vld [vmem:[%s600 + $0x8] sm:$0xff]
      %v1308 = vld [vmem:[%s600 + $0x10] sm:$0xff]
      %v1309 = vld [vmem:[%s600 + $0x18] sm:$0xff]
      %v1310 = vld [vmem:[%s600 + $0x20] sm:$0xff]
      %v1311 = vadd.f32 %v1301, %v1306
      %v1312 = vadd.f32 %v1302, %v1307
      %v1313 = vadd.f32 %v1303, %v1308
      %v1314 = vadd.f32 %v1304, %v1309
      %v1315 = vadd.f32 %v1305, %v1310
      %v1316 = vtanh.pop %v1311
      %v1317 = vtanh.pop %v1312
      %v1318 = vtanh.pop %v1313
      %v1319 = vtanh.pop %v1314
      %v1320 = vtanh.pop %v1315
      %v1321 = vadd.f32 %v1316, %v898
      %v1322 = vadd.f32 %v1317, %v899
      %v1323 = vadd.f32 %v1318, %v900
      %v1324 = vadd.f32 %v1319, %v901
      %v1325 = vadd.f32 %v1320, %v902
      %s1326 = scalar_lea.vmem %s581, 40
      %v1327 = vld [vmem:[%s1326] sm:$0xff]
      %v1328 = vld [vmem:[%s1326 + $0x8] sm:$0xff]
      %v1329 = vld [vmem:[%s1326 + $0x10] sm:$0xff]
      %v1330 = vld [vmem:[%s1326 + $0x18] sm:$0xff]
      %v1331 = vld [vmem:[%s1326 + $0x20] sm:$0xff]
      %v1333 = vsel %vm908, %v1327, 0
      %v1336 = vsel %vm908, %v1328, 0
      %v1339 = vsel %vm908, %v1329, 0
      %v1342 = vsel %vm908, %v1330, 0
      %v1345 = vsel %vm908, %v1331, 0
      %1347 = vmatprep.subr.mxu0 0.0
      %1348 = vmatpush1.msra.mxu0 0.0
      %1349 = vmatprep.subr.mxu0 0.0
      %1350 = vmatpush1.msra.mxu0 0.0
      %1351 = vmatprep.subr.mxu0 0.0
      %1352 = vmatpush1.msra.mxu0 0.0
      %1353 = vmatprep.subr.mxu0 0.0
      %1354 = vmatpush1.msra.mxu0 0.0
      %1355 = vmatprep.subr.mxu0 0.0
      %1356 = vmatpush1.msra.mxu0 0.0
      %1357 = vmatprep.subr.mxu0 0.0
      %1358 = vmatpush1.msra.mxu0 0.0
      %1359 = vmatprep.subr.mxu0 0.0
      %1360 = vmatpush1.msra.mxu0 0.0
      %1361 = vmatprep.subr.mxu0 0.0
      %1362 = vmatpush1.msra.mxu0 0.0
      %1363 = vmatprep.subr.mxu0 0.0
      %1364 = vmatpush1.msra.mxu0 0.0
      %1365 = vmatprep.subr.mxu0 0.0
      %1366 = vmatpush1.msra.mxu0 0.0
      %1367 = vmatprep.subr.mxu0 0.0
      %1368 = vmatpush1.msra.mxu0 0.0
      %1369 = vmatprep.subr.mxu0 0.0
      %1370 = vmatpush1.msra.mxu0 %v1325
      %1371 = vmatprep.subr.mxu0 0.0
      %1372 = vmatpush1.msra.mxu0 %v1324
      %1373 = vmatprep.subr.mxu0 0.0
      %1374 = vmatpush1.msra.mxu0 %v1323
      %1375 = vmatprep.subr.mxu0 0.0
      %1376 = vmatpush1.msra.mxu0 %v1322
      %1377 = vmatprep.subr.mxu0 0.0
      %1378 = vmatpush1.msra.mxu0 %v1321
      %1379 = vmatprep.subr.mxu0 0.0
      %1380 = vmatpush2.msra.mxu0 0.0
      %1381 = vmatprep.subr.mxu0 0.0
      %1382 = vmatpush2.msra.mxu0 0.0
      %1383 = vmatprep.subr.mxu0 0.0
      %1384 = vmatpush2.msra.mxu0 0.0
      %1385 = vmatprep.subr.mxu0 0.0
      %1386 = vmatpush2.msra.mxu0 0.0
      %1387 = vmatprep.subr.mxu0 0.0
      %1388 = vmatpush2.msra.mxu0 0.0
      %1389 = vmatprep.subr.mxu0 0.0
      %1390 = vmatpush2.msra.mxu0 0.0
      %1391 = vmatprep.subr.mxu0 0.0
      %1392 = vmatpush2.msra.mxu0 0.0
      %1393 = vmatprep.subr.mxu0 0.0
      %1394 = vmatpush2.msra.mxu0 0.0
      %1395 = vmatprep.subr.mxu0 0.0
      %1396 = vmatpush2.msra.mxu0 0.0
      %1397 = vmatprep.subr.mxu0 0.0
      %1398 = vmatpush2.msra.mxu0 0.0
      %1399 = vmatprep.subr.mxu0 0.0
      %1400 = vmatpush2.msra.mxu0 0.0
      %1401 = vmatprep.subr.mxu0 0.0
      %1402 = vmatpush2.msra.mxu0 0.0
      %1403 = vmatprep.subr.mxu0 0.0
      %1404 = vmatpush2.msra.mxu0 0.0
      %1405 = vmatprep.subr.mxu0 0.0
      %1406 = vmatpush2.msra.mxu0 0.0
      %1407 = vmatprep.subr.mxu0 0.0
      %1408 = vmatpush2.msra.mxu0 0.0
      %1409 = vmatprep.subr.mxu0 0.0
      %1410 = vmatpush2.msra.mxu0 0.0
      %1411 = vmatprep.mubr.f32.mxu0 0.0
      %1412 = vmatmul.mubr.f32.gmra.mxu0 %v1333
      %v1413 = vpop.f32.mrf.mxu0
      %v1414 = vadd.f32 0.0, %v1413
      %v1415 = vpop.f32.mrf.mxu0
      %1416 = vmatprep.mubr.f32.mxu0 0.0
      %1417 = vmatmul.mubr.f32.gmra.mxu0 %v1336
      %v1418 = vpop.f32.mrf.mxu0
      %v1419 = vadd.f32 0.0, %v1418
      %v1420 = vpop.f32.mrf.mxu0
      %1421 = vmatprep.mubr.f32.mxu0 0.0
      %1422 = vmatmul.mubr.f32.gmra.mxu0 %v1339
      %v1423 = vpop.f32.mrf.mxu0
      %v1424 = vadd.f32 0.0, %v1423
      %v1425 = vpop.f32.mrf.mxu0
      %1426 = vmatprep.mubr.f32.mxu0 0.0
      %1427 = vmatmul.mubr.f32.gmra.mxu0 %v1342
      %v1428 = vpop.f32.mrf.mxu0
      %v1429 = vadd.f32 0.0, %v1428
      %v1430 = vpop.f32.mrf.mxu0
      %1431 = vmatprep.mubr.f32.mxu0 0.0
      %1432 = vmatmul.mubr.f32.gmra.mxu0 %v1345
      %v1433 = vpop.f32.mrf.mxu0
      %v1434 = vadd.f32 0.0, %v1433
      %v1435 = vpop.f32.mrf.mxu0
      %1436 = vdwg.mxu0
      %s1437 = scalar_lea.vmem %s586, 32
      %v1438 = vld [vmem:[%s1437] sm:$0xff]
      %v1439 = vld [vmem:[%s1437 + $0x8] sm:$0xff]
      %v1440 = vld [vmem:[%s1437 + $0x10] sm:$0xff]
      %v1441 = vld [vmem:[%s1437 + $0x18] sm:$0xff]
      %s1442 = scalar_lea.vmem %s590, 1
      %v1443 = vld [vmem:[%s1442] sm:$0x1]
      %v1445 = vlaneseq
      %v1446 = vshrl.u32 %v1445, 7
      %v1447 = vsub.s32 0, %v1446
      %v1448 = vrot.slane %v1443, %v1447
      %v1451 = vsel %vm1025, %v1414, 0
      %v1454 = vsel %vm1025, %v1419, 0
      %v1457 = vsel %vm1025, %v1424, 0
      %v1460 = vsel %vm1025, %v1429, 0
      %v1463 = vsel %vm1025, %v1434, 0
      %1465 = vmatprep.subr.mxu0 0.0
      %1466 = vmatpush1.msra.mxu0 0.0
      %1467 = vmatprep.subr.mxu0 0.0
      %1468 = vmatpush1.msra.mxu0 0.0
      %1469 = vmatprep.subr.mxu0 0.0
      %1470 = vmatpush1.msra.mxu0 0.0
      %1471 = vmatprep.subr.mxu0 0.0
      %1472 = vmatpush1.msra.mxu0 0.0
      %1473 = vmatprep.subr.mxu0 0.0
      %1474 = vmatpush1.msra.mxu0 0.0
      %1475 = vmatprep.subr.mxu0 0.0
      %1476 = vmatpush1.msra.mxu0 0.0
      %1477 = vmatprep.subr.mxu0 0.0
      %1478 = vmatpush1.msra.mxu0 0.0
      %1479 = vmatprep.subr.mxu0 0.0
      %1480 = vmatpush1.msra.mxu0 0.0
      %1481 = vmatprep.subr.mxu0 0.0
      %1482 = vmatpush1.msra.mxu0 0.0
      %1483 = vmatprep.subr.mxu0 0.0
      %1484 = vmatpush1.msra.mxu0 0.0
      %1485 = vmatprep.subr.mxu0 0.0
      %1486 = vmatpush1.msra.mxu0 0.0
      %1487 = vmatprep.subr.mxu0 0.0
      %1488 = vmatpush1.msra.mxu0 0.0
      %1489 = vmatprep.subr.mxu0 0.0
      %1490 = vmatpush1.msra.mxu0 %v1441
      %1491 = vmatprep.subr.mxu0 0.0
      %1492 = vmatpush1.msra.mxu0 %v1440
      %1493 = vmatprep.subr.mxu0 0.0
      %1494 = vmatpush1.msra.mxu0 %v1439
      %1495 = vmatprep.subr.mxu0 0.0
      %1496 = vmatpush1.msra.mxu0 %v1438
      %1497 = vmatprep.subr.mxu0 0.0
      %1498 = vmatpush2.msra.mxu0 0.0
      %1499 = vmatprep.subr.mxu0 0.0
      %1500 = vmatpush2.msra.mxu0 0.0
      %1501 = vmatprep.subr.mxu0 0.0
      %1502 = vmatpush2.msra.mxu0 0.0
      %1503 = vmatprep.subr.mxu0 0.0
      %1504 = vmatpush2.msra.mxu0 0.0
      %1505 = vmatprep.subr.mxu0 0.0
      %1506 = vmatpush2.msra.mxu0 0.0
      %1507 = vmatprep.subr.mxu0 0.0
      %1508 = vmatpush2.msra.mxu0 0.0
      %1509 = vmatprep.subr.mxu0 0.0
      %1510 = vmatpush2.msra.mxu0 0.0
      %1511 = vmatprep.subr.mxu0 0.0
      %1512 = vmatpush2.msra.mxu0 0.0
      %1513 = vmatprep.subr.mxu0 0.0
      %1514 = vmatpush2.msra.mxu0 0.0
      %1515 = vmatprep.subr.mxu0 0.0
      %1516 = vmatpush2.msra.mxu0 0.0
      %1517 = vmatprep.subr.mxu0 0.0
      %1518 = vmatpush2.msra.mxu0 0.0
      %1519 = vmatprep.subr.mxu0 0.0
      %1520 = vmatpush2.msra.mxu0 0.0
      %1521 = vmatprep.subr.mxu0 0.0
      %1522 = vmatpush2.msra.mxu0 0.0
      %1523 = vmatprep.subr.mxu0 0.0
      %1524 = vmatpush2.msra.mxu0 0.0
      %1525 = vmatprep.subr.mxu0 0.0
      %1526 = vmatpush2.msra.mxu0 0.0
      %1527 = vmatprep.subr.mxu0 0.0
      %1528 = vmatpush2.msra.mxu0 0.0
      %1529 = vmatprep.mubr.f32.mxu0 0.0
      %1530 = vmatmul.mubr.f32.gmra.mxu0 %v1451
      %v1531 = vpop.f32.mrf.mxu0
      %v1532 = vadd.f32 %v1448, %v1531
      %v1533 = vpop.f32.mrf.mxu0
      %1534 = vmatprep.mubr.f32.mxu0 0.0
      %1535 = vmatmul.mubr.f32.gmra.mxu0 %v1454
      %v1536 = vpop.f32.mrf.mxu0
      %v1537 = vadd.f32 %v1448, %v1536
      %v1538 = vpop.f32.mrf.mxu0
      %1539 = vmatprep.mubr.f32.mxu0 0.0
      %1540 = vmatmul.mubr.f32.gmra.mxu0 %v1457
      %v1541 = vpop.f32.mrf.mxu0
      %v1542 = vadd.f32 %v1448, %v1541
      %v1543 = vpop.f32.mrf.mxu0
      %1544 = vmatprep.mubr.f32.mxu0 0.0
      %1545 = vmatmul.mubr.f32.gmra.mxu0 %v1460
      %v1546 = vpop.f32.mrf.mxu0
      %v1547 = vadd.f32 %v1448, %v1546
      %v1548 = vpop.f32.mrf.mxu0
      %1549 = vmatprep.mubr.f32.mxu0 0.0
      %1550 = vmatmul.mubr.f32.gmra.mxu0 %v1463
      %v1551 = vpop.f32.mrf.mxu0
      %v1552 = vadd.f32 %v1448, %v1551
      %v1553 = vpop.f32.mrf.mxu0
      %1554 = vdwg.mxu0
      %v1555 = vsel %vm745, %v1532, 0.0
      %v1556 = vsel %vm745, %v1537, 0.0
      %v1557 = vadd.f32 %v1555, %v1556
      %v1558 = vsel %vm745, %v1542, 0.0
      %v1559 = vadd.f32 %v1557, %v1558
      %v1560 = vsel %vm745, %v1547, 0.0
      %v1561 = vadd.f32 %v1559, %v1560
      %v1562 = vsel %vm745, %v1552, 0.0
      %v1563 = vadd.f32 %v1561, %v1562
      %1564 = vadd.xlane.f32.xlu0 %v1563
      %v1565 = vpop.xlane.xlu0 %1564
      %v1566 = vrot.slane %v1565, 4
      %v1567 = vadd.f32 %v1565, %v1566
      %v1568 = vrot.slane %v1567, 2
      %v1569 = vadd.f32 %v1567, %v1568
      %v1570 = vrot.slane %v1569, 1
      %v1571 = vadd.f32 %v1569, %v1570
      %s1572 = vtos %v1571
      %v1573 = vmul.f32 %v1532, %v1532
      %v1574 = vmul.f32 %v1537, %v1537
      %v1575 = vmul.f32 %v1542, %v1542
      %v1576 = vmul.f32 %v1547, %v1547
      %v1577 = vmul.f32 %v1552, %v1552
      %v1578 = vsel %vm745, %v1573, 0.0
      %v1579 = vsel %vm745, %v1574, 0.0
      %v1580 = vadd.f32 %v1578, %v1579
      %v1581 = vsel %vm745, %v1575, 0.0
      %v1582 = vadd.f32 %v1580, %v1581
      %v1583 = vsel %vm745, %v1576, 0.0
      %v1584 = vadd.f32 %v1582, %v1583
      %v1585 = vsel %vm745, %v1577, 0.0
      %v1586 = vadd.f32 %v1584, %v1585
      %1587 = vadd.xlane.f32.xlu0 %v1586
      %v1588 = vpop.xlane.xlu0 %1587
      %v1589 = vrot.slane %v1588, 4
      %v1590 = vadd.f32 %v1588, %v1589
      %v1591 = vrot.slane %v1590, 2
      %v1592 = vadd.f32 %v1590, %v1591
      %v1593 = vrot.slane %v1592, 1
      %v1594 = vadd.f32 %v1592, %v1593
      %s1595 = vtos %v1594
      %v1596 = vrcp.pop 640.0
      %s1597 = vtos %v1596
      %s1598 = smul.f32 %s1572, %s1597
      %v1599 = vrcp.pop 640.0
      %s1600 = vtos %v1599
      %s1601 = smul.f32 %s1595, %s1600
      %s1602 = smul.f32 %s1598, %s1598
      %s1603 = ssub.f32 %s1601, %s1602
      %v1604 = vstv %s1598
      %s1605 = sadd.f32 %s1603, 1e-05
      %v1606 = vstv %s1605
      %v1607 = vrsqrt.pop %v1606
      %s1608 = vtos %v1607
      %v1609 = vstv %s1608
      %1615 = vrot.lane.b32.xlu0 %v1532, 112
      %v1616 = vpop.permute.xlu0 %1615
      %1617 = vrot.lane.b32.xlu0 %v1537, 112
      %v1618 = vpop.permute.xlu0 %1617
      %1619 = vrot.lane.b32.xlu0 %v1542, 112
      %v1620 = vpop.permute.xlu0 %1619
      %1621 = vrot.lane.b32.xlu0 %v1547, 112
      %v1622 = vpop.permute.xlu0 %1621
      %1623 = vrot.lane.b32.xlu0 %v1552, 112
      %v1624 = vpop.permute.xlu0 %1623
      %v1630 = vsel %vm745, %v1616, 0.0
      %v1631 = vsel %vm745, %v1618, 0.0
      %v1632 = vadd.f32 %v1630, %v1631
      %v1633 = vsel %vm745, %v1620, 0.0
      %v1634 = vadd.f32 %v1632, %v1633
      %v1635 = vsel %vm745, %v1622, 0.0
      %v1636 = vadd.f32 %v1634, %v1635
      %v1637 = vsel %vm745, %v1624, 0.0
      %v1638 = vadd.f32 %v1636, %v1637
      %1639 = vadd.xlane.f32.xlu0 %v1638
      %v1640 = vpop.xlane.xlu0 %1639
      %v1641 = vrot.slane %v1640, 4
      %v1642 = vadd.f32 %v1640, %v1641
      %v1643 = vrot.slane %v1642, 2
      %v1644 = vadd.f32 %v1642, %v1643
      %v1645 = vrot.slane %v1644, 1
      %v1646 = vadd.f32 %v1644, %v1645
      %s1647 = vtos %v1646
      %1653 = vrot.lane.b32.xlu0 %v1573, 112
      %v1654 = vpop.permute.xlu0 %1653
      %1655 = vrot.lane.b32.xlu0 %v1574, 112
      %v1656 = vpop.permute.xlu0 %1655
      %1657 = vrot.lane.b32.xlu0 %v1575, 112
      %v1658 = vpop.permute.xlu0 %1657
      %1659 = vrot.lane.b32.xlu0 %v1576, 112
      %v1660 = vpop.permute.xlu0 %1659
      %1661 = vrot.lane.b32.xlu0 %v1577, 112
      %v1662 = vpop.permute.xlu0 %1661
      %v1668 = vsel %vm745, %v1654, 0.0
      %v1669 = vsel %vm745, %v1656, 0.0
      %v1670 = vadd.f32 %v1668, %v1669
      %v1671 = vsel %vm745, %v1658, 0.0
      %v1672 = vadd.f32 %v1670, %v1671
      %v1673 = vsel %vm745, %v1660, 0.0
      %v1674 = vadd.f32 %v1672, %v1673
      %v1675 = vsel %vm745, %v1662, 0.0
      %v1676 = vadd.f32 %v1674, %v1675
      %1677 = vadd.xlane.f32.xlu0 %v1676
      %v1678 = vpop.xlane.xlu0 %1677
      %v1679 = vrot.slane %v1678, 4
      %v1680 = vadd.f32 %v1678, %v1679
      %v1681 = vrot.slane %v1680, 2
      %v1682 = vadd.f32 %v1680, %v1681
      %v1683 = vrot.slane %v1682, 1
      %v1684 = vadd.f32 %v1682, %v1683
      %s1685 = vtos %v1684
      %v1686 = vrcp.pop 640.0
      %s1687 = vtos %v1686
      %s1688 = smul.f32 %s1647, %s1687
      %v1689 = vrcp.pop 640.0
      %s1690 = vtos %v1689
      %s1691 = smul.f32 %s1685, %s1690
      %s1692 = smul.f32 %s1688, %s1688
      %s1693 = ssub.f32 %s1691, %s1692
      %v1694 = vstv %s1688
      %s1695 = sadd.f32 %s1693, 1e-05
      %v1696 = vstv %s1695
      %v1697 = vrsqrt.pop %v1696
      %s1698 = vtos %v1697
      %v1699 = vstv %s1698
      %v1700 = vsel %vm745, %v1604, %v1694
      %v1701 = vsel %vm745, %v1609, %v1699
      %v1702 = vlaneseq
      %v1703 = vshrl.u32 %v1702, 7
      %v1704 = vsub.s32 0, %v1703
      %v1705 = vrot.slane %v1700, %v1704
      %v1706 = vsub.f32 %v1532, %v1705
      %v1707 = vsub.f32 %v1537, %v1705
      %v1708 = vsub.f32 %v1542, %v1705
      %v1709 = vsub.f32 %v1547, %v1705
      %v1710 = vsub.f32 %v1552, %v1705
      %v1711 = vlaneseq
      %v1712 = vshrl.u32 %v1711, 7
      %v1713 = vsub.s32 0, %v1712
      %v1714 = vrot.slane %v1701, %v1713
      %v1715 = vmul.f32 %v1706, %v1714
      %v1716 = vmul.f32 %v1707, %v1714
      %v1717 = vmul.f32 %v1708, %v1714
      %v1718 = vmul.f32 %v1709, %v1714
      %v1719 = vmul.f32 %v1710, %v1714
      %s1720 = scalar_lea.vmem %s595, 40
      %v1721 = vld [vmem:[%s1720] sm:$0xff]
      %v1722 = vld [vmem:[%s1720 + $0x8] sm:$0xff]
      %v1723 = vld [vmem:[%s1720 + $0x10] sm:$0xff]
      %v1724 = vld [vmem:[%s1720 + $0x18] sm:$0xff]
      %v1725 = vld [vmem:[%s1720 + $0x20] sm:$0xff]
      %v1726 = vmul.f32 %v1715, %v1721
      %v1727 = vmul.f32 %v1716, %v1722
      %v1728 = vmul.f32 %v1717, %v1723
      %v1729 = vmul.f32 %v1718, %v1724
      %v1730 = vmul.f32 %v1719, %v1725
      %s1731 = scalar_lea.vmem %s600, 40
      %v1732 = vld [vmem:[%s1731] sm:$0xff]
      %v1733 = vld [vmem:[%s1731 + $0x8] sm:$0xff]
      %v1734 = vld [vmem:[%s1731 + $0x10] sm:$0xff]
      %v1735 = vld [vmem:[%s1731 + $0x18] sm:$0xff]
      %v1736 = vld [vmem:[%s1731 + $0x20] sm:$0xff]
      %v1737 = vadd.f32 %v1726, %v1732
      %v1738 = vadd.f32 %v1727, %v1733
      %v1739 = vadd.f32 %v1728, %v1734
      %v1740 = vadd.f32 %v1729, %v1735
      %v1741 = vadd.f32 %v1730, %v1736
      %v1742 = vtanh.pop %v1737
      %v1743 = vtanh.pop %v1738
      %v1744 = vtanh.pop %v1739
      %v1745 = vtanh.pop %v1740
      %v1746 = vtanh.pop %v1741
      %v1747 = vadd.f32 %v1742, %v1321
      %v1748 = vadd.f32 %v1743, %v1322
      %v1749 = vadd.f32 %v1744, %v1323
      %v1750 = vadd.f32 %v1745, %v1324
      %v1751 = vadd.f32 %v1746, %v1325
      %1757 = vrot.lane.b32.xlu0 %v1747, 120
      %v1758 = vpop.permute.xlu0 %1757
      %1759 = vrot.lane.b32.xlu0 %v1748, 120
      %v1760 = vpop.permute.xlu0 %1759
      %1761 = vrot.lane.b32.xlu0 %v1749, 120
      %v1762 = vpop.permute.xlu0 %1761
      %1763 = vrot.lane.b32.xlu0 %v1750, 120
      %v1764 = vpop.permute.xlu0 %1763
      %1765 = vrot.lane.b32.xlu0 %v1751, 120
      %v1766 = vpop.permute.xlu0 %1765
      %v1772 = vsel %vm886, %v1747, %v1758
      %v1773 = vsel %vm886, %v1748, %v1760
      %v1774 = vsel %vm886, %v1749, %v1762
      %v1775 = vsel %vm886, %v1750, %v1764
      %v1776 = vsel %vm886, %v1751, %v1766
      %v1777 = vld [vmem:[%s605] sm:$0xff]
      %v1778 = vld [vmem:[%s605 + $0x8] sm:$0xff]
      %v1779 = vld [vmem:[%s605 + $0x10] sm:$0xff]
      %v1780 = vld [vmem:[%s605 + $0x18] sm:$0xff]
      %v1781 = vld [vmem:[%s605 + $0x20] sm:$0xff]
      %vm1782 = vcmask 654336
      %v1784 = vsel %vm1782, %v1777, 0
      %v1787 = vsel %vm1782, %v1778, 0
      %v1790 = vsel %vm1782, %v1779, 0
      %v1793 = vsel %vm1782, %v1780, 0
      %v1796 = vsel %vm1782, %v1781, 0
      %1798 = vmatprep.subr.mxu0 0.0
      %1799 = vmatpush1.msra.mxu0 0.0
      %1800 = vmatprep.subr.mxu0 0.0
      %1801 = vmatpush1.msra.mxu0 0.0
      %1802 = vmatprep.subr.mxu0 0.0
      %1803 = vmatpush1.msra.mxu0 0.0
      %1804 = vmatprep.subr.mxu0 0.0
      %1805 = vmatpush1.msra.mxu0 0.0
      %1806 = vmatprep.subr.mxu0 0.0
      %1807 = vmatpush1.msra.mxu0 0.0
      %1808 = vmatprep.subr.mxu0 0.0
      %1809 = vmatpush1.msra.mxu0 0.0
      %1810 = vmatprep.subr.mxu0 0.0
      %1811 = vmatpush1.msra.mxu0 %v848
      %1812 = vmatprep.subr.mxu0 0.0
      %1813 = vmatpush1.msra.mxu0 %v843
      %1814 = vmatprep.subr.mxu0 0.0
      %1815 = vmatpush1.msra.mxu0 %v838
      %1816 = vmatprep.subr.mxu0 0.0
      %1817 = vmatpush1.msra.mxu0 %v833
      %1818 = vmatprep.subr.mxu0 0.0
      %1819 = vmatpush1.msra.mxu0 %v828
      %1820 = vmatprep.subr.mxu0 0.0
      %1821 = vmatpush1.msra.mxu0 %v1776
      %1822 = vmatprep.subr.mxu0 0.0
      %1823 = vmatpush1.msra.mxu0 %v1775
      %1824 = vmatprep.subr.mxu0 0.0
      %1825 = vmatpush1.msra.mxu0 %v1774
      %1826 = vmatprep.subr.mxu0 0.0
      %1827 = vmatpush1.msra.mxu0 %v1773
      %1828 = vmatprep.subr.mxu0 0.0
      %1829 = vmatpush1.msra.mxu0 %v1772
      %1830 = vmatprep.subr.mxu0 0.0
      %1831 = vmatpush2.msra.mxu0 0.0
      %1832 = vmatprep.subr.mxu0 0.0
      %1833 = vmatpush2.msra.mxu0 0.0
      %1834 = vmatprep.subr.mxu0 0.0
      %1835 = vmatpush2.msra.mxu0 0.0
      %1836 = vmatprep.subr.mxu0 0.0
      %1837 = vmatpush2.msra.mxu0 0.0
      %1838 = vmatprep.subr.mxu0 0.0
      %1839 = vmatpush2.msra.mxu0 0.0
      %1840 = vmatprep.subr.mxu0 0.0
      %1841 = vmatpush2.msra.mxu0 0.0
      %1842 = vmatprep.subr.mxu0 0.0
      %1843 = vmatpush2.msra.mxu0 0.0
      %1844 = vmatprep.subr.mxu0 0.0
      %1845 = vmatpush2.msra.mxu0 0.0
      %1846 = vmatprep.subr.mxu0 0.0
      %1847 = vmatpush2.msra.mxu0 0.0
      %1848 = vmatprep.subr.mxu0 0.0
      %1849 = vmatpush2.msra.mxu0 0.0
      %1850 = vmatprep.subr.mxu0 0.0
      %1851 = vmatpush2.msra.mxu0 0.0
      %1852 = vmatprep.subr.mxu0 0.0
      %1853 = vmatpush2.msra.mxu0 0.0
      %1854 = vmatprep.subr.mxu0 0.0
      %1855 = vmatpush2.msra.mxu0 0.0
      %1856 = vmatprep.subr.mxu0 0.0
      %1857 = vmatpush2.msra.mxu0 0.0
      %1858 = vmatprep.subr.mxu0 0.0
      %1859 = vmatpush2.msra.mxu0 0.0
      %1860 = vmatprep.subr.mxu0 0.0
      %1861 = vmatpush2.msra.mxu0 0.0
      %1862 = vmatprep.mubr.f32.mxu0 0.0
      %1863 = vmatmul.mubr.f32.gmra.mxu0 %v1784
      %v1864 = vpop.f32.mrf.mxu0
      %v1865 = vadd.f32 0.0, %v1864
      %v1866 = vpop.f32.mrf.mxu0
      %1867 = vmatprep.mubr.f32.mxu0 0.0
      %1868 = vmatmul.mubr.f32.gmra.mxu0 %v1787
      %v1869 = vpop.f32.mrf.mxu0
      %v1870 = vadd.f32 0.0, %v1869
      %v1871 = vpop.f32.mrf.mxu0
      %1872 = vmatprep.mubr.f32.mxu0 0.0
      %1873 = vmatmul.mubr.f32.gmra.mxu0 %v1790
      %v1874 = vpop.f32.mrf.mxu0
      %v1875 = vadd.f32 0.0, %v1874
      %v1876 = vpop.f32.mrf.mxu0
      %1877 = vmatprep.mubr.f32.mxu0 0.0
      %1878 = vmatmul.mubr.f32.gmra.mxu0 %v1793
      %v1879 = vpop.f32.mrf.mxu0
      %v1880 = vadd.f32 0.0, %v1879
      %v1881 = vpop.f32.mrf.mxu0
      %1882 = vmatprep.mubr.f32.mxu0 0.0
      %1883 = vmatmul.mubr.f32.gmra.mxu0 %v1796
      %v1884 = vpop.f32.mrf.mxu0
      %v1885 = vadd.f32 0.0, %v1884
      %v1886 = vpop.f32.mrf.mxu0
      %1887 = vdwg.mxu0
      %v1888 = vld [vmem:[%s610] sm:$0xff]
      %v1889 = vld [vmem:[%s610 + $0x8] sm:$0xff]
      %v1890 = vld [vmem:[%s613] sm:$0x1]
      %v1892 = vlaneseq
      %v1893 = vshrl.u32 %v1892, 7
      %v1894 = vsub.s32 0, %v1893
      %v1895 = vrot.slane %v1890, %v1894
      %v1898 = vsel %vm745, %v1865, 0
      %v1901 = vsel %vm745, %v1870, 0
      %v1904 = vsel %vm745, %v1875, 0
      %v1907 = vsel %vm745, %v1880, 0
      %v1910 = vsel %vm745, %v1885, 0
      %1912 = vmatprep.subr.mxu0 0.0
      %1913 = vmatpush1.msra.mxu0 0.0
      %1914 = vmatprep.subr.mxu0 0.0
      %1915 = vmatpush1.msra.mxu0 0.0
      %1916 = vmatprep.subr.mxu0 0.0
      %1917 = vmatpush1.msra.mxu0 0.0
      %1918 = vmatprep.subr.mxu0 0.0
      %1919 = vmatpush1.msra.mxu0 0.0
      %1920 = vmatprep.subr.mxu0 0.0
      %1921 = vmatpush1.msra.mxu0 0.0
      %1922 = vmatprep.subr.mxu0 0.0
      %1923 = vmatpush1.msra.mxu0 0.0
      %1924 = vmatprep.subr.mxu0 0.0
      %1925 = vmatpush1.msra.mxu0 0.0
      %1926 = vmatprep.subr.mxu0 0.0
      %1927 = vmatpush1.msra.mxu0 0.0
      %1928 = vmatprep.subr.mxu0 0.0
      %1929 = vmatpush1.msra.mxu0 0.0
      %1930 = vmatprep.subr.mxu0 0.0
      %1931 = vmatpush1.msra.mxu0 0.0
      %1932 = vmatprep.subr.mxu0 0.0
      %1933 = vmatpush1.msra.mxu0 0.0
      %1934 = vmatprep.subr.mxu0 0.0
      %1935 = vmatpush1.msra.mxu0 0.0
      %1936 = vmatprep.subr.mxu0 0.0
      %1937 = vmatpush1.msra.mxu0 0.0
      %1938 = vmatprep.subr.mxu0 0.0
      %1939 = vmatpush1.msra.mxu0 0.0
      %1940 = vmatprep.subr.mxu0 0.0
      %1941 = vmatpush1.msra.mxu0 %v1889
      %1942 = vmatprep.subr.mxu0 0.0
      %1943 = vmatpush1.msra.mxu0 %v1888
      %1944 = vmatprep.subr.mxu0 0.0
      %1945 = vmatpush2.msra.mxu0 0.0
      %1946 = vmatprep.subr.mxu0 0.0
      %1947 = vmatpush2.msra.mxu0 0.0
      %1948 = vmatprep.subr.mxu0 0.0
      %1949 = vmatpush2.msra.mxu0 0.0
      %1950 = vmatprep.subr.mxu0 0.0
      %1951 = vmatpush2.msra.mxu0 0.0
      %1952 = vmatprep.subr.mxu0 0.0
      %1953 = vmatpush2.msra.mxu0 0.0
      %1954 = vmatprep.subr.mxu0 0.0
      %1955 = vmatpush2.msra.mxu0 0.0
      %1956 = vmatprep.subr.mxu0 0.0
      %1957 = vmatpush2.msra.mxu0 0.0
      %1958 = vmatprep.subr.mxu0 0.0
      %1959 = vmatpush2.msra.mxu0 0.0
      %1960 = vmatprep.subr.mxu0 0.0
      %1961 = vmatpush2.msra.mxu0 0.0
      %1962 = vmatprep.subr.mxu0 0.0
      %1963 = vmatpush2.msra.mxu0 0.0
      %1964 = vmatprep.subr.mxu0 0.0
      %1965 = vmatpush2.msra.mxu0 0.0
      %1966 = vmatprep.subr.mxu0 0.0
      %1967 = vmatpush2.msra.mxu0 0.0
      %1968 = vmatprep.subr.mxu0 0.0
      %1969 = vmatpush2.msra.mxu0 0.0
      %1970 = vmatprep.subr.mxu0 0.0
      %1971 = vmatpush2.msra.mxu0 0.0
      %1972 = vmatprep.subr.mxu0 0.0
      %1973 = vmatpush2.msra.mxu0 0.0
      %1974 = vmatprep.subr.mxu0 0.0
      %1975 = vmatpush2.msra.mxu0 0.0
      %1976 = vmatprep.mubr.f32.mxu0 0.0
      %1977 = vmatmul.mubr.f32.gmra.mxu0 %v1898
      %v1978 = vpop.f32.mrf.mxu0
      %v1979 = vadd.f32 %v1895, %v1978
      %v1980 = vpop.f32.mrf.mxu0
      %1981 = vmatprep.mubr.f32.mxu0 0.0
      %1982 = vmatmul.mubr.f32.gmra.mxu0 %v1901
      %v1983 = vpop.f32.mrf.mxu0
      %v1984 = vadd.f32 %v1895, %v1983
      %v1985 = vpop.f32.mrf.mxu0
      %1986 = vmatprep.mubr.f32.mxu0 0.0
      %1987 = vmatmul.mubr.f32.gmra.mxu0 %v1904
      %v1988 = vpop.f32.mrf.mxu0
      %v1989 = vadd.f32 %v1895, %v1988
      %v1990 = vpop.f32.mrf.mxu0
      %1991 = vmatprep.mubr.f32.mxu0 0.0
      %1992 = vmatmul.mubr.f32.gmra.mxu0 %v1907
      %v1993 = vpop.f32.mrf.mxu0
      %v1994 = vadd.f32 %v1895, %v1993
      %v1995 = vpop.f32.mrf.mxu0
      %1996 = vmatprep.mubr.f32.mxu0 0.0
      %1997 = vmatmul.mubr.f32.gmra.mxu0 %v1910
      %v1998 = vpop.f32.mrf.mxu0
      %v1999 = vadd.f32 %v1895, %v1998
      %v2000 = vpop.f32.mrf.mxu0
      %2001 = vdwg.mxu0
      %2002 = vst.msk [vmem:[%s618] sm:$0xff] %vm745, %v1979
      %2003 = vst.msk [vmem:[%s618 + $0x8] sm:$0xff] %vm745, %v1984
      %2004 = vst.msk [vmem:[%s618 + $0x10] sm:$0xff] %vm745, %v1989
      %2005 = vst.msk [vmem:[%s618 + $0x18] sm:$0xff] %vm745, %v1994
      %2006 = vst.msk [vmem:[%s618 + $0x20] sm:$0xff] %vm745, %v1999
      %p2007 = scmp.lt.s32.totalorder %s23, 1
      %s2008 = scalar_select %p2007, %s23, 1
      %s2009 = smul.addr %s2008, 5
      %s2010 = smul.addr %s2009, 8
      %s2011 = scalar_lea.vmem %s12, %s2010
      // Predicated region
      $region69: #{_lambda_.2} parent=67 // pred_check
        %p2012 = pneg %p353
      $region70: #{_lambda_.2} parent=67 // pred_check_branch
        %2014 = sbr.rel (%p2012) target = $region72
      $region71: #{_lambda_.2} parent=67 // pred_region
        _
      $region72: #{_lambda_.2} parent=67 // pred_fallthru
        _
    $region68: #{_lambda_.2} parent=5 // pred_fallthru
      _
    %p2015 = scmp.le.s32.totalorder 2, %s18
    // Predicated region
    $region73: #{_lambda_.2} parent=5 // pred_check
      %p2016 = pneg %p2015
    $region74: #{_lambda_.2} parent=5 // pred_check_branch
      %2018 = sbr.rel (%p2016) target = $region76
    $region75: #{_lambda_.2} parent=5 // pred_region
      %s2019 = ssub.s32 %s18, 2
      // Predicated region
      $region77: #{_lambda_.2} parent=75 // pred_check
        %p2020 = pneg %p359
      $region78: #{_lambda_.2} parent=75 // pred_check_branch
        %2022 = sbr.rel (%p2020) target = $region80
      $region79: #{_lambda_.2} parent=75 // pred_region
        %p2023 = scmp.lt.s32.totalorder %s24, 1
        %s2024 = scalar_select %p2023, %s24, 1
        %s2025 = smul.addr %s2024, 5
        %s2026 = smul.addr %s2025, 8
        %s2027 = scalar_lea.vmem %s12, %s2026
      $region80: #{_lambda_.2} parent=75 // pred_fallthru
        _
    $region76: #{_lambda_.2} parent=5 // pred_fallthru
      _
  $region6: #{_lambda_.2} parent=0 // loop_footer
    %s22 = sadd.s32 1, %s18
  $region7: #{_lambda_.2} parent=0 // loop_footer_branch
    %17 = sbr.rel target = $region3
  $region8: #{_lambda_.2} parent=0 // loop_exit
    _

// kernel: _lambda_.3
$region0: #{_lambda_.3}
  #allocation0 [shape = 'u32[]', space=smem, size = 0x4, offset = 0x4, fixed_abs, tag = 'smem constant byte address 0x4 - core index']
  #allocation1 [shape = 'u32[144,128]{1,0:T(1,128)}', space=vmem, size = 0x12000, scoped, tag = 'internal scratch']
  %s0 = inlined_call_operand.vmem [shape: f32[2,40,16], index: 0, kind: input, shape index: {}]
  %s1 = inlined_call_operand.vmem [shape: f32[3,16], index: 1, kind: input, shape index: {}]
  %s2 = inlined_call_operand.vmem [shape: f32[9,16], index: 2, kind: input, shape index: {}]
  %s3 = inlined_call_operand.vmem [shape: f32[16,1], index: 3, kind: input, shape index: {}]
  %s4 = inlined_call_operand.vmem [shape: f32[16,16], index: 4, kind: input, shape index: {}]
  %s5 = inlined_call_operand.vmem [shape: f32[16,16], index: 5, kind: input, shape index: {}]
  %s6 = inlined_call_operand.vmem [shape: f32[48,16], index: 6, kind: input, shape index: {}]
  %s7 = inlined_call_operand.vmem [shape: f32[16,1], index: 7, kind: input, shape index: {}]
  %s8 = inlined_call_operand.vmem [shape: f32[16,16], index: 8, kind: input, shape index: {}]
  %s9 = inlined_call_operand.vmem [shape: f32[16,16], index: 9, kind: input, shape index: {}]
  %s10 = inlined_call_operand.vmem [shape: f32[48,16], index: 10, kind: input, shape index: {}]
  %s11 = inlined_call_operand.vmem [shape: f32[16,1], index: 11, kind: input, shape index: {}]
  %s12 = inlined_call_operand.vmem [shape: f32[288,16], index: 12, kind: input, shape index: {}]
  %s13 = inlined_call_operand.vmem [shape: f32[16,1], index: 13, kind: input, shape index: {}]
  %s14 = inlined_call_operand.vmem [shape: f32[16,16], index: 14, kind: input, shape index: {}]
  %s15 = inlined_call_operand.vmem [shape: f32[16,16], index: 15, kind: input, shape index: {}]
  %s16 = inlined_call_operand.vmem [shape: f32[48,2], index: 16, kind: input, shape index: {}]
  %s17 = inlined_call_operand.vmem [shape: f32[2,1], index: 17, kind: input, shape index: {}]
  %s18 = inlined_call_operand.vmem [shape: f32[2,16], index: 18, kind: output, shape index: {}]
  %s19 = sld [smem:[#allocation0]]
  $region82: #{_lambda_.3} parent=0
    _
  %s21 = ssub.s32 1, %s19
  %s22 = scalar_select 0, %s21, %s19
  // Predicated region
  $region2: #{_lambda_.3} parent=0 // pred_check
    _
  $region3: #{_lambda_.3} parent=0 // pred_check_branch
    %24 = sbr.rel (0) target = $region5
  $region4: #{_lambda_.3} parent=0 // pred_region
    _
  $region5: #{_lambda_.3} parent=0 // pred_fallthru
    _
  // Predicated region
  $region6: #{_lambda_.3} parent=0 // pred_check
    _
  $region7: #{_lambda_.3} parent=0 // pred_check_branch
    %26 = sbr.rel (0) target = $region9
  $region8: #{_lambda_.3} parent=0 // pred_region
    _
  $region9: #{_lambda_.3} parent=0 // pred_fallthru
    _
  // Predicated region
  $region10: #{_lambda_.3} parent=0 // pred_check
    _
  $region11: #{_lambda_.3} parent=0 // pred_check_branch
    %28 = sbr.rel (0) target = $region13
  $region12: #{_lambda_.3} parent=0 // pred_region
    _
  $region13: #{_lambda_.3} parent=0 // pred_fallthru
    _
  // Predicated region
  $region14: #{_lambda_.3} parent=0 // pred_check
    _
  $region15: #{_lambda_.3} parent=0 // pred_check_branch
    %30 = sbr.rel (0) target = $region17
  $region16: #{_lambda_.3} parent=0 // pred_region
    _
  $region17: #{_lambda_.3} parent=0 // pred_fallthru
    _
  // Predicated region
  $region18: #{_lambda_.3} parent=0 // pred_check
    _
  $region19: #{_lambda_.3} parent=0 // pred_check_branch
    %32 = sbr.rel (0) target = $region21
  $region20: #{_lambda_.3} parent=0 // pred_region
    _
  $region21: #{_lambda_.3} parent=0 // pred_fallthru
    _
  // Predicated region
  $region22: #{_lambda_.3} parent=0 // pred_check
    _
  $region23: #{_lambda_.3} parent=0 // pred_check_branch
    %34 = sbr.rel (0) target = $region25
  $region24: #{_lambda_.3} parent=0 // pred_region
    _
  $region25: #{_lambda_.3} parent=0 // pred_fallthru
    _
  // Predicated region
  $region26: #{_lambda_.3} parent=0 // pred_check
    _
  $region27: #{_lambda_.3} parent=0 // pred_check_branch
    %36 = sbr.rel (0) target = $region29
  $region28: #{_lambda_.3} parent=0 // pred_region
    _
  $region29: #{_lambda_.3} parent=0 // pred_fallthru
    _
  // Predicated region
  $region30: #{_lambda_.3} parent=0 // pred_check
    _
  $region31: #{_lambda_.3} parent=0 // pred_check_branch
    %38 = sbr.rel (0) target = $region33
  $region32: #{_lambda_.3} parent=0 // pred_region
    _
  $region33: #{_lambda_.3} parent=0 // pred_fallthru
    _
  // Predicated region
  $region34: #{_lambda_.3} parent=0 // pred_check
    _
  $region35: #{_lambda_.3} parent=0 // pred_check_branch
    %40 = sbr.rel (0) target = $region37
  $region36: #{_lambda_.3} parent=0 // pred_region
    _
  $region37: #{_lambda_.3} parent=0 // pred_fallthru
    _
  // Predicated region
  $region38: #{_lambda_.3} parent=0 // pred_check
    _
  $region39: #{_lambda_.3} parent=0 // pred_check_branch
    %42 = sbr.rel (0) target = $region41
  $region40: #{_lambda_.3} parent=0 // pred_region
    _
  $region41: #{_lambda_.3} parent=0 // pred_fallthru
    _
  // Predicated region
  $region42: #{_lambda_.3} parent=0 // pred_check
    _
  $region43: #{_lambda_.3} parent=0 // pred_check_branch
    %44 = sbr.rel (0) target = $region45
  $region44: #{_lambda_.3} parent=0 // pred_region
    _
  $region45: #{_lambda_.3} parent=0 // pred_fallthru
    _
  // Predicated region
  $region46: #{_lambda_.3} parent=0 // pred_check
    _
  $region47: #{_lambda_.3} parent=0 // pred_check_branch
    %46 = sbr.rel (0) target = $region49
  $region48: #{_lambda_.3} parent=0 // pred_region
    _
  $region49: #{_lambda_.3} parent=0 // pred_fallthru
    _
  // Predicated region
  $region50: #{_lambda_.3} parent=0 // pred_check
    _
  $region51: #{_lambda_.3} parent=0 // pred_check_branch
    %48 = sbr.rel (0) target = $region53
  $region52: #{_lambda_.3} parent=0 // pred_region
    _
  $region53: #{_lambda_.3} parent=0 // pred_fallthru
    _
  // Predicated region
  $region54: #{_lambda_.3} parent=0 // pred_check
    _
  $region55: #{_lambda_.3} parent=0 // pred_check_branch
    %50 = sbr.rel (0) target = $region57
  $region56: #{_lambda_.3} parent=0 // pred_region
    _
  $region57: #{_lambda_.3} parent=0 // pred_fallthru
    _
  // Predicated region
  $region58: #{_lambda_.3} parent=0 // pred_check
    _
  $region59: #{_lambda_.3} parent=0 // pred_check_branch
    %52 = sbr.rel (0) target = $region61
  $region60: #{_lambda_.3} parent=0 // pred_region
    _
  $region61: #{_lambda_.3} parent=0 // pred_fallthru
    _
  // Predicated region
  $region62: #{_lambda_.3} parent=0 // pred_check
    _
  $region63: #{_lambda_.3} parent=0 // pred_check_branch
    %54 = sbr.rel (0) target = $region65
  $region64: #{_lambda_.3} parent=0 // pred_region
    _
  $region65: #{_lambda_.3} parent=0 // pred_fallthru
    _
  // Predicated region
  $region66: #{_lambda_.3} parent=0 // pred_check
    _
  $region67: #{_lambda_.3} parent=0 // pred_check_branch
    %56 = sbr.rel (0) target = $region69
  $region68: #{_lambda_.3} parent=0 // pred_region
    _
  $region69: #{_lambda_.3} parent=0 // pred_fallthru
    _
  // Predicated region
  $region70: #{_lambda_.3} parent=0 // pred_check
    _
  $region71: #{_lambda_.3} parent=0 // pred_check_branch
    %58 = sbr.rel (0) target = $region73
  $region72: #{_lambda_.3} parent=0 // pred_region
    _
  $region73: #{_lambda_.3} parent=0 // pred_fallthru
    _
  %v59 = vlaneseq
  %v60 = vand.u32 %v59, 127
  %vm61 = vcmp.lt.s32.totalorder %v60, 0
  %v62 = vsub.s32 0, %v60
  %v63 = vsel %vm61, %v62, %v60
  %v64 = vshrl.u32 %v63, 3
  %v65 = vand.u32 %v63, 7
  %v66 = vsub.s32 0, %v65
  %v67 = vsel %vm61, %v66, %v65
  %vm68 = vcmp.ne.s32.totalorder %v67, 0
  %vm69 = vcmp.lt.s32.totalorder %v67, 0
  %vm70 = vmand %vm69, %vm68
  %v71 = vadd.s32 %v67, 8
  %v72 = vsel %vm70, %v71, %v67
  %vm73 = vcmp.eq.s32.totalorder %v72, 0
  %vm74 = vcmp.eq.s32.totalorder %v72, 7
  %v75 = vld [vmem:[%s1] sm:$0x7]
  %77 = vrot.lane.b32.xlu0 %v75, 1
  %v78 = vpop.permute.xlu0 %77
  %vm80 = vcmask 7168
  %v81 = vsel %vm80, %v75, %v78
  %82 = vrot.lane.b32.xlu0 %v75, 127
  %v83 = vpop.permute.xlu0 %82
  %vm85 = vcmask 121856
  %v86 = vsel %vm85, %v83, %v75
  %v87 = vsel %vm73, 1, 0
  %vm88 = vcmp.eq.s32.totalorder %v87, 1
  %v89 = vsel %vm88, %v75, %v81
  %v90 = vsel %vm74, 1, 0
  %vm91 = vcmp.eq.s32.totalorder %v90, 1
  %v92 = vsel %vm91, %v75, %v86
  %v93 = vrot.slane %v75, 5
  %v96 = vrot.slane %v92, 2
  %vm98 = vcmask 1042432
  %v99 = vsel %vm98, %v89, %v93
  %vm100 = vcmask 1045504
  %v101 = vsel %vm100, %v99, %v96
  %v102 = vld [vmem:[%s2] sm:$0xff]
  %v103 = vld [vmem:[%s2 + $0x8] sm:$0x1]
  %v104 = vld [vmem:[%s3] sm:$0xff]
  %v105 = vld [vmem:[%s3 + $0x8] sm:$0xff]
  %107 = vset.pattern.permute.xlu0 0
  %108 = vperm.xlu0 %107, %v104
  %v109 = vpop.permute.xlu0 %108
  %112 = vset.pattern.permute.xlu0 0
  %113 = vperm.xlu0 %112, %v105
  %v114 = vpop.permute.xlu0 %113
  %116 = vxpose.xlu0.b32.start [1/16] %v102, 128
  %117 = vxpose.xlu0.b32.cont [2/16] %v103, 128
  %118 = vxpose.xlu0.b32.cont [3/16] 0.0, 128
  %119 = vxpose.xlu0.b32.cont [4/16] 0.0, 128
  %120 = vxpose.xlu0.b32.cont [5/16] 0.0, 128
  %121 = vxpose.xlu0.b32.cont [6/16] 0.0, 128
  %122 = vxpose.xlu0.b32.cont [7/16] 0.0, 128
  %123 = vxpose.xlu0.b32.cont [8/16] 0.0, 128
  %124 = vxpose.xlu0.b32.cont [9/16] 0.0, 128
  %125 = vxpose.xlu0.b32.cont [10/16] 0.0, 128
  %126 = vxpose.xlu0.b32.cont [11/16] 0.0, 128
  %127 = vxpose.xlu0.b32.cont [12/16] 0.0, 128
  %128 = vxpose.xlu0.b32.cont [13/16] 0.0, 128
  %129 = vxpose.xlu0.b32.cont [14/16] 0.0, 128
  %130 = vxpose.xlu0.b32.cont [15/16] 0.0, 128
  %131 = vxpose.xlu0.b32.end [16/16] 0.0, 128
  %v132 = vpop.trf.xlu0
  %v133 = vpop.trf.xlu0
  %v134 = vpop.trf.xlu0
  %v135 = vpop.trf.xlu0
  %v136 = vpop.trf.xlu0
  %v137 = vpop.trf.xlu0
  %v138 = vpop.trf.xlu0
  %v139 = vpop.trf.xlu0
  %v140 = vpop.trf.xlu0
  %v141 = vpop.trf.xlu0
  %v142 = vpop.trf.xlu0
  %v143 = vpop.trf.xlu0
  %v144 = vpop.trf.xlu0
  %v145 = vpop.trf.xlu0
  %v146 = vpop.trf.xlu0
  %v147 = vpop.trf.xlu0
  %vm148 = vcmask 72704
  %v150 = vsel %vm148, %v132, 0
  %v153 = vsel %vm148, %v133, 0
  %vm155 = vcmask 1040384
  %v156 = vsel %vm155, %v96, 0
  %158 = vmatprep.subr.mxu0 0.0
  %159 = vmatpush1.msra.mxu0 0.0
  %160 = vmatprep.subr.mxu0 0.0
  %161 = vmatpush1.msra.mxu0 0.0
  %162 = vmatprep.subr.mxu0 0.0
  %163 = vmatpush1.msra.mxu0 0.0
  %164 = vmatprep.subr.mxu0 0.0
  %165 = vmatpush1.msra.mxu0 0.0
  %166 = vmatprep.subr.mxu0 0.0
  %167 = vmatpush1.msra.mxu0 0.0
  %168 = vmatprep.subr.mxu0 0.0
  %169 = vmatpush1.msra.mxu0 0.0
  %170 = vmatprep.subr.mxu0 0.0
  %171 = vmatpush1.msra.mxu0 0.0
  %172 = vmatprep.subr.mxu0 0.0
  %173 = vmatpush1.msra.mxu0 0.0
  %174 = vmatprep.subr.mxu0 0.0
  %175 = vmatpush1.msra.mxu0 0.0
  %176 = vmatprep.subr.mxu0 0.0
  %177 = vmatpush1.msra.mxu0 0.0
  %178 = vmatprep.subr.mxu0 0.0
  %179 = vmatpush1.msra.mxu0 0.0
  %180 = vmatprep.subr.mxu0 0.0
  %181 = vmatpush1.msra.mxu0 0.0
  %182 = vmatprep.subr.mxu0 0.0
  %183 = vmatpush1.msra.mxu0 0.0
  %184 = vmatprep.subr.mxu0 0.0
  %185 = vmatpush1.msra.mxu0 0.0
  %186 = vmatprep.subr.mxu0 0.0
  %187 = vmatpush1.msra.mxu0 %v156
  %188 = vmatprep.subr.mxu0 0.0
  %189 = vmatpush1.msra.mxu0 %v101
  %190 = vmatprep.subr.mxu0 0.0
  %191 = vmatpush2.msra.mxu0 0.0
  %192 = vmatprep.subr.mxu0 0.0
  %193 = vmatpush2.msra.mxu0 0.0
  %194 = vmatprep.subr.mxu0 0.0
  %195 = vmatpush2.msra.mxu0 0.0
  %196 = vmatprep.subr.mxu0 0.0
  %197 = vmatpush2.msra.mxu0 0.0
  %198 = vmatprep.subr.mxu0 0.0
  %199 = vmatpush2.msra.mxu0 0.0
  %200 = vmatprep.subr.mxu0 0.0
  %201 = vmatpush2.msra.mxu0 0.0
  %202 = vmatprep.subr.mxu0 0.0
  %203 = vmatpush2.msra.mxu0 0.0
  %204 = vmatprep.subr.mxu0 0.0
  %205 = vmatpush2.msra.mxu0 0.0
  %206 = vmatprep.subr.mxu0 0.0
  %207 = vmatpush2.msra.mxu0 0.0
  %208 = vmatprep.subr.mxu0 0.0
  %209 = vmatpush2.msra.mxu0 0.0
  %210 = vmatprep.subr.mxu0 0.0
  %211 = vmatpush2.msra.mxu0 0.0
  %212 = vmatprep.subr.mxu0 0.0
  %213 = vmatpush2.msra.mxu0 0.0
  %214 = vmatprep.subr.mxu0 0.0
  %215 = vmatpush2.msra.mxu0 0.0
  %216 = vmatprep.subr.mxu0 0.0
  %217 = vmatpush2.msra.mxu0 0.0
  %218 = vmatprep.subr.mxu0 0.0
  %219 = vmatpush2.msra.mxu0 0.0
  %220 = vmatprep.subr.mxu0 0.0
  %221 = vmatpush2.msra.mxu0 0.0
  %222 = vmatprep.mubr.f32.mxu0 0.0
  %223 = vmatmul.mubr.f32.gmra.mxu0 %v150
  %v224 = vpop.f32.mrf.mxu0
  %v225 = vadd.f32 %v109, %v224
  %v226 = vpop.f32.mrf.mxu0
  %227 = vmatprep.mubr.f32.mxu0 0.0
  %228 = vmatmul.mubr.f32.gmra.mxu0 %v153
  %v229 = vpop.f32.mrf.mxu0
  %v230 = vadd.f32 %v114, %v229
  %v231 = vpop.f32.mrf.mxu0
  %232 = vdwg.mxu0
  %v233 = vld [vmem:[%s4] sm:$0xff]
  %v234 = vld [vmem:[%s4 + $0x8] sm:$0xff]
  %vm235 = vcmask 64512
  %v236 = vsel %vm235, %v225, 0.0
  %v237 = vsel %vm235, %v230, 0.0
  %v238 = vadd.f32 %v236, %v237
  %239 = vadd.xlane.f32.xlu0 %v238
  %v240 = vpop.xlane.xlu0 %239
  %v241 = vrot.slane %v240, 4
  %v242 = vadd.f32 %v240, %v241
  %v243 = vrot.slane %v242, 2
  %v244 = vadd.f32 %v242, %v243
  %v245 = vrot.slane %v244, 1
  %v246 = vadd.f32 %v244, %v245
  %s247 = vtos %v246
  %v248 = vmul.f32 %v225, %v225
  %v249 = vmul.f32 %v230, %v230
  %v250 = vsel %vm235, %v248, 0.0
  %v251 = vsel %vm235, %v249, 0.0
  %v252 = vadd.f32 %v250, %v251
  %253 = vadd.xlane.f32.xlu0 %v252
  %v254 = vpop.xlane.xlu0 %253
  %v255 = vrot.slane %v254, 4
  %v256 = vadd.f32 %v254, %v255
  %v257 = vrot.slane %v256, 2
  %v258 = vadd.f32 %v256, %v257
  %v259 = vrot.slane %v258, 1
  %v260 = vadd.f32 %v258, %v259
  %s261 = vtos %v260
  %v262 = vrcp.pop 128.0
  %s263 = vtos %v262
  %s264 = smul.f32 %s247, %s263
  %v265 = vrcp.pop 128.0
  %s266 = vtos %v265
  %s267 = smul.f32 %s261, %s266
  %s268 = smul.f32 %s264, %s264
  %s269 = ssub.f32 %s267, %s268
  %v270 = vstv %s264
  %s271 = sadd.f32 %s269, 1e-05
  %v272 = vstv %s271
  %v273 = vrsqrt.pop %v272
  %s274 = vtos %v273
  %v275 = vstv %s274
  %278 = vrot.lane.b32.xlu0 %v225, 120
  %v279 = vpop.permute.xlu0 %278
  %280 = vrot.lane.b32.xlu0 %v230, 120
  %v281 = vpop.permute.xlu0 %280
  %v284 = vsel %vm235, %v279, 0.0
  %v285 = vsel %vm235, %v281, 0.0
  %v286 = vadd.f32 %v284, %v285
  %287 = vadd.xlane.f32.xlu0 %v286
  %v288 = vpop.xlane.xlu0 %287
  %v289 = vrot.slane %v288, 4
  %v290 = vadd.f32 %v288, %v289
  %v291 = vrot.slane %v290, 2
  %v292 = vadd.f32 %v290, %v291
  %v293 = vrot.slane %v292, 1
  %v294 = vadd.f32 %v292, %v293
  %s295 = vtos %v294
  %298 = vrot.lane.b32.xlu0 %v248, 120
  %v299 = vpop.permute.xlu0 %298
  %300 = vrot.lane.b32.xlu0 %v249, 120
  %v301 = vpop.permute.xlu0 %300
  %v304 = vsel %vm235, %v299, 0.0
  %v305 = vsel %vm235, %v301, 0.0
  %v306 = vadd.f32 %v304, %v305
  %307 = vadd.xlane.f32.xlu0 %v306
  %v308 = vpop.xlane.xlu0 %307
  %v309 = vrot.slane %v308, 4
  %v310 = vadd.f32 %v308, %v309
  %v311 = vrot.slane %v310, 2
  %v312 = vadd.f32 %v310, %v311
  %v313 = vrot.slane %v312, 1
  %v314 = vadd.f32 %v312, %v313
  %s315 = vtos %v314
  %v316 = vrcp.pop 128.0
  %s317 = vtos %v316
  %s318 = smul.f32 %s295, %s317
  %v319 = vrcp.pop 128.0
  %s320 = vtos %v319
  %s321 = smul.f32 %s315, %s320
  %s322 = smul.f32 %s318, %s318
  %s323 = ssub.f32 %s321, %s322
  %v324 = vstv %s318
  %s325 = sadd.f32 %s323, 1e-05
  %v326 = vstv %s325
  %v327 = vrsqrt.pop %v326
  %s328 = vtos %v327
  %v329 = vstv %s328
  %v330 = vsel %vm235, %v270, %v324
  %v331 = vsel %vm235, %v275, %v329
  %v332 = vlaneseq
  %v333 = vshrl.u32 %v332, 7
  %v334 = vsub.s32 0, %v333
  %v335 = vrot.slane %v330, %v334
  %v336 = vsub.f32 %v225, %v335
  %v337 = vsub.f32 %v230, %v335
  %v338 = vlaneseq
  %v339 = vshrl.u32 %v338, 7
  %v340 = vsub.s32 0, %v339
  %v341 = vrot.slane %v331, %v340
  %v342 = vmul.f32 %v336, %v341
  %v343 = vmul.f32 %v337, %v341
  %v344 = vmul.f32 %v342, %v233
  %v345 = vmul.f32 %v343, %v234
  %v346 = vld [vmem:[%s5] sm:$0xff]
  %v347 = vld [vmem:[%s5 + $0x8] sm:$0xff]
  %v348 = vadd.f32 %v344, %v346
  %v349 = vadd.f32 %v345, %v347
  %v350 = vtanh.pop %v348
  %v351 = vtanh.pop %v349
  %354 = vrot.lane.b32.xlu0 %v350, 1
  %v355 = vpop.permute.xlu0 %354
  %356 = vrot.lane.b32.xlu0 %v351, 1
  %v357 = vpop.permute.xlu0 %356
  %v360 = vsel %vm80, %v350, %v355
  %v361 = vsel %vm80, %v351, %v357
  %362 = vrot.lane.b32.xlu0 %v350, 127
  %v363 = vpop.permute.xlu0 %362
  %364 = vrot.lane.b32.xlu0 %v351, 127
  %v365 = vpop.permute.xlu0 %364
  %v368 = vsel %vm85, %v363, %v350
  %v369 = vsel %vm85, %v365, %v351
  %v370 = vsel %vm88, %v350, %v360
  %v371 = vsel %vm88, %v351, %v361
  %v372 = vsel %vm91, %v350, %v368
  %v373 = vsel %vm91, %v351, %v369
  %v374 = vld [vmem:[%s6] sm:$0xff]
  %v375 = vld [vmem:[%s6 + $0x8] sm:$0xff]
  %v376 = vld [vmem:[%s6 + $0x10] sm:$0xff]
  %v377 = vld [vmem:[%s6 + $0x18] sm:$0xff]
  %v378 = vld [vmem:[%s6 + $0x20] sm:$0xff]
  %v379 = vld [vmem:[%s6 + $0x28] sm:$0xff]
  %v380 = vld [vmem:[%s7] sm:$0xff]
  %v381 = vld [vmem:[%s7 + $0x8] sm:$0xff]
  %383 = vset.pattern.permute.xlu0 0
  %384 = vperm.xlu0 %383, %v380
  %v385 = vpop.permute.xlu0 %384
  %388 = vset.pattern.permute.xlu0 0
  %389 = vperm.xlu0 %388, %v381
  %v390 = vpop.permute.xlu0 %389
  %392 = vxpose.xlu0.b32.start [1/16] %v374, 128
  %393 = vxpose.xlu0.b32.cont [2/16] %v375, 128
  %394 = vxpose.xlu0.b32.cont [3/16] %v376, 128
  %395 = vxpose.xlu0.b32.cont [4/16] %v377, 128
  %396 = vxpose.xlu0.b32.cont [5/16] %v378, 128
  %397 = vxpose.xlu0.b32.cont [6/16] %v379, 128
  %398 = vxpose.xlu0.b32.cont [7/16] 0.0, 128
  %399 = vxpose.xlu0.b32.cont [8/16] 0.0, 128
  %400 = vxpose.xlu0.b32.cont [9/16] 0.0, 128
  %401 = vxpose.xlu0.b32.cont [10/16] 0.0, 128
  %402 = vxpose.xlu0.b32.cont [11/16] 0.0, 128
  %403 = vxpose.xlu0.b32.cont [12/16] 0.0, 128
  %404 = vxpose.xlu0.b32.cont [13/16] 0.0, 128
  %405 = vxpose.xlu0.b32.cont [14/16] 0.0, 128
  %406 = vxpose.xlu0.b32.cont [15/16] 0.0, 128
  %407 = vxpose.xlu0.b32.end [16/16] 0.0, 128
  %v408 = vpop.trf.xlu0
  %v409 = vpop.trf.xlu0
  %v410 = vpop.trf.xlu0
  %v411 = vpop.trf.xlu0
  %v412 = vpop.trf.xlu0
  %v413 = vpop.trf.xlu0
  %v414 = vpop.trf.xlu0
  %v415 = vpop.trf.xlu0
  %v416 = vpop.trf.xlu0
  %v417 = vpop.trf.xlu0
  %v418 = vpop.trf.xlu0
  %v419 = vpop.trf.xlu0
  %v420 = vpop.trf.xlu0
  %v421 = vpop.trf.xlu0
  %v422 = vpop.trf.xlu0
  %v423 = vpop.trf.xlu0
  %vm424 = vcmask 392192
  %v426 = vsel %vm424, %v408, 0
  %v429 = vsel %vm424, %v409, 0
  %431 = vmatprep.subr.mxu0 0.0
  %432 = vmatpush1.msra.mxu0 0.0
  %433 = vmatprep.subr.mxu0 0.0
  %434 = vmatpush1.msra.mxu0 0.0
  %435 = vmatprep.subr.mxu0 0.0
  %436 = vmatpush1.msra.mxu0 0.0
  %437 = vmatprep.subr.mxu0 0.0
  %438 = vmatpush1.msra.mxu0 0.0
  %439 = vmatprep.subr.mxu0 0.0
  %440 = vmatpush1.msra.mxu0 0.0
  %441 = vmatprep.subr.mxu0 0.0
  %442 = vmatpush1.msra.mxu0 0.0
  %443 = vmatprep.subr.mxu0 0.0
  %444 = vmatpush1.msra.mxu0 0.0
  %445 = vmatprep.subr.mxu0 0.0
  %446 = vmatpush1.msra.mxu0 0.0
  %447 = vmatprep.subr.mxu0 0.0
  %448 = vmatpush1.msra.mxu0 0.0
  %449 = vmatprep.subr.mxu0 0.0
  %450 = vmatpush1.msra.mxu0 0.0
  %451 = vmatprep.subr.mxu0 0.0
  %452 = vmatpush1.msra.mxu0 %v373
  %453 = vmatprep.subr.mxu0 0.0
  %454 = vmatpush1.msra.mxu0 %v372
  %455 = vmatprep.subr.mxu0 0.0
  %456 = vmatpush1.msra.mxu0 %v351
  %457 = vmatprep.subr.mxu0 0.0
  %458 = vmatpush1.msra.mxu0 %v350
  %459 = vmatprep.subr.mxu0 0.0
  %460 = vmatpush1.msra.mxu0 %v371
  %461 = vmatprep.subr.mxu0 0.0
  %462 = vmatpush1.msra.mxu0 %v370
  %463 = vmatprep.subr.mxu0 0.0
  %464 = vmatpush2.msra.mxu0 0.0
  %465 = vmatprep.subr.mxu0 0.0
  %466 = vmatpush2.msra.mxu0 0.0
  %467 = vmatprep.subr.mxu0 0.0
  %468 = vmatpush2.msra.mxu0 0.0
  %469 = vmatprep.subr.mxu0 0.0
  %470 = vmatpush2.msra.mxu0 0.0
  %471 = vmatprep.subr.mxu0 0.0
  %472 = vmatpush2.msra.mxu0 0.0
  %473 = vmatprep.subr.mxu0 0.0
  %474 = vmatpush2.msra.mxu0 0.0
  %475 = vmatprep.subr.mxu0 0.0
  %476 = vmatpush2.msra.mxu0 0.0
  %477 = vmatprep.subr.mxu0 0.0
  %478 = vmatpush2.msra.mxu0 0.0
  %479 = vmatprep.subr.mxu0 0.0
  %480 = vmatpush2.msra.mxu0 0.0
  %481 = vmatprep.subr.mxu0 0.0
  %482 = vmatpush2.msra.mxu0 0.0
  %483 = vmatprep.subr.mxu0 0.0
  %484 = vmatpush2.msra.mxu0 0.0
  %485 = vmatprep.subr.mxu0 0.0
  %486 = vmatpush2.msra.mxu0 0.0
  %487 = vmatprep.subr.mxu0 0.0
  %488 = vmatpush2.msra.mxu0 0.0
  %489 = vmatprep.subr.mxu0 0.0
  %490 = vmatpush2.msra.mxu0 0.0
  %491 = vmatprep.subr.mxu0 0.0
  %492 = vmatpush2.msra.mxu0 0.0
  %493 = vmatprep.subr.mxu0 0.0
  %494 = vmatpush2.msra.mxu0 0.0
  %495 = vmatprep.mubr.f32.mxu0 0.0
  %496 = vmatmul.mubr.f32.gmra.mxu0 %v426
  %v497 = vpop.f32.mrf.mxu0
  %v498 = vadd.f32 %v385, %v497
  %v499 = vpop.f32.mrf.mxu0
  %500 = vmatprep.mubr.f32.mxu0 0.0
  %501 = vmatmul.mubr.f32.gmra.mxu0 %v429
  %v502 = vpop.f32.mrf.mxu0
  %v503 = vadd.f32 %v390, %v502
  %v504 = vpop.f32.mrf.mxu0
  %505 = vdwg.mxu0
  %v506 = vld [vmem:[%s8] sm:$0xff]
  %v507 = vld [vmem:[%s8 + $0x8] sm:$0xff]
  %v508 = vsel %vm235, %v498, 0.0
  %v509 = vsel %vm235, %v503, 0.0
  %v510 = vadd.f32 %v508, %v509
  %511 = vadd.xlane.f32.xlu0 %v510
  %v512 = vpop.xlane.xlu0 %511
  %v513 = vrot.slane %v512, 4
  %v514 = vadd.f32 %v512, %v513
  %v515 = vrot.slane %v514, 2
  %v516 = vadd.f32 %v514, %v515
  %v517 = vrot.slane %v516, 1
  %v518 = vadd.f32 %v516, %v517
  %s519 = vtos %v518
  %v520 = vmul.f32 %v498, %v498
  %v521 = vmul.f32 %v503, %v503
  %v522 = vsel %vm235, %v520, 0.0
  %v523 = vsel %vm235, %v521, 0.0
  %v524 = vadd.f32 %v522, %v523
  %525 = vadd.xlane.f32.xlu0 %v524
  %v526 = vpop.xlane.xlu0 %525
  %v527 = vrot.slane %v526, 4
  %v528 = vadd.f32 %v526, %v527
  %v529 = vrot.slane %v528, 2
  %v530 = vadd.f32 %v528, %v529
  %v531 = vrot.slane %v530, 1
  %v532 = vadd.f32 %v530, %v531
  %s533 = vtos %v532
  %v534 = vrcp.pop 128.0
  %s535 = vtos %v534
  %s536 = smul.f32 %s519, %s535
  %v537 = vrcp.pop 128.0
  %s538 = vtos %v537
  %s539 = smul.f32 %s533, %s538
  %s540 = smul.f32 %s536, %s536
  %s541 = ssub.f32 %s539, %s540
  %v542 = vstv %s536
  %s543 = sadd.f32 %s541, 1e-05
  %v544 = vstv %s543
  %v545 = vrsqrt.pop %v544
  %s546 = vtos %v545
  %v547 = vstv %s546
  %550 = vrot.lane.b32.xlu0 %v498, 120
  %v551 = vpop.permute.xlu0 %550
  %552 = vrot.lane.b32.xlu0 %v503, 120
  %v553 = vpop.permute.xlu0 %552
  %v556 = vsel %vm235, %v551, 0.0
  %v557 = vsel %vm235, %v553, 0.0
  %v558 = vadd.f32 %v556, %v557
  %559 = vadd.xlane.f32.xlu0 %v558
  %v560 = vpop.xlane.xlu0 %559
  %v561 = vrot.slane %v560, 4
  %v562 = vadd.f32 %v560, %v561
  %v563 = vrot.slane %v562, 2
  %v564 = vadd.f32 %v562, %v563
  %v565 = vrot.slane %v564, 1
  %v566 = vadd.f32 %v564, %v565
  %s567 = vtos %v566
  %570 = vrot.lane.b32.xlu0 %v520, 120
  %v571 = vpop.permute.xlu0 %570
  %572 = vrot.lane.b32.xlu0 %v521, 120
  %v573 = vpop.permute.xlu0 %572
  %v576 = vsel %vm235, %v571, 0.0
  %v577 = vsel %vm235, %v573, 0.0
  %v578 = vadd.f32 %v576, %v577
  %579 = vadd.xlane.f32.xlu0 %v578
  %v580 = vpop.xlane.xlu0 %579
  %v581 = vrot.slane %v580, 4
  %v582 = vadd.f32 %v580, %v581
  %v583 = vrot.slane %v582, 2
  %v584 = vadd.f32 %v582, %v583
  %v585 = vrot.slane %v584, 1
  %v586 = vadd.f32 %v584, %v585
  %s587 = vtos %v586
  %v588 = vrcp.pop 128.0
  %s589 = vtos %v588
  %s590 = smul.f32 %s567, %s589
  %v591 = vrcp.pop 128.0
  %s592 = vtos %v591
  %s593 = smul.f32 %s587, %s592
  %s594 = smul.f32 %s590, %s590
  %s595 = ssub.f32 %s593, %s594
  %v596 = vstv %s590
  %s597 = sadd.f32 %s595, 1e-05
  %v598 = vstv %s597
  %v599 = vrsqrt.pop %v598
  %s600 = vtos %v599
  %v601 = vstv %s600
  %v602 = vsel %vm235, %v542, %v596
  %v603 = vsel %vm235, %v547, %v601
  %v604 = vlaneseq
  %v605 = vshrl.u32 %v604, 7
  %v606 = vsub.s32 0, %v605
  %v607 = vrot.slane %v602, %v606
  %v608 = vsub.f32 %v498, %v607
  %v609 = vsub.f32 %v503, %v607
  %v610 = vlaneseq
  %v611 = vshrl.u32 %v610, 7
  %v612 = vsub.s32 0, %v611
  %v613 = vrot.slane %v603, %v612
  %v614 = vmul.f32 %v608, %v613
  %v615 = vmul.f32 %v609, %v613
  %v616 = vmul.f32 %v614, %v506
  %v617 = vmul.f32 %v615, %v507
  %v618 = vld [vmem:[%s9] sm:$0xff]
  %v619 = vld [vmem:[%s9 + $0x8] sm:$0xff]
  %v620 = vadd.f32 %v616, %v618
  %v621 = vadd.f32 %v617, %v619
  %v622 = vtanh.pop %v620
  %v623 = vtanh.pop %v621
  %626 = vrot.lane.b32.xlu0 %v622, 1
  %v627 = vpop.permute.xlu0 %626
  %628 = vrot.lane.b32.xlu0 %v623, 1
  %v629 = vpop.permute.xlu0 %628
  %v632 = vsel %vm80, %v622, %v627
  %v633 = vsel %vm80, %v623, %v629
  %634 = vrot.lane.b32.xlu0 %v622, 127
  %v635 = vpop.permute.xlu0 %634
  %636 = vrot.lane.b32.xlu0 %v623, 127
  %v637 = vpop.permute.xlu0 %636
  %v640 = vsel %vm85, %v635, %v622
  %v641 = vsel %vm85, %v637, %v623
  %v642 = vsel %vm88, %v622, %v632
  %v643 = vsel %vm88, %v623, %v633
  %v644 = vsel %vm91, %v622, %v640
  %v645 = vsel %vm91, %v623, %v641
  %v646 = vld [vmem:[%s10] sm:$0xff]
  %v647 = vld [vmem:[%s10 + $0x8] sm:$0xff]
  %v648 = vld [vmem:[%s10 + $0x10] sm:$0xff]
  %v649 = vld [vmem:[%s10 + $0x18] sm:$0xff]
  %v650 = vld [vmem:[%s10 + $0x20] sm:$0xff]
  %v651 = vld [vmem:[%s10 + $0x28] sm:$0xff]
  %v652 = vld [vmem:[%s11] sm:$0xff]
  %v653 = vld [vmem:[%s11 + $0x8] sm:$0xff]
  %655 = vset.pattern.permute.xlu0 0
  %656 = vperm.xlu0 %655, %v652
  %v657 = vpop.permute.xlu0 %656
  %660 = vset.pattern.permute.xlu0 0
  %661 = vperm.xlu0 %660, %v653
  %v662 = vpop.permute.xlu0 %661
  %664 = vxpose.xlu0.b32.start [1/16] %v646, 128
  %665 = vxpose.xlu0.b32.cont [2/16] %v647, 128
  %666 = vxpose.xlu0.b32.cont [3/16] %v648, 128
  %667 = vxpose.xlu0.b32.cont [4/16] %v649, 128
  %668 = vxpose.xlu0.b32.cont [5/16] %v650, 128
  %669 = vxpose.xlu0.b32.cont [6/16] %v651, 128
  %670 = vxpose.xlu0.b32.cont [7/16] 0.0, 128
  %671 = vxpose.xlu0.b32.cont [8/16] 0.0, 128
  %672 = vxpose.xlu0.b32.cont [9/16] 0.0, 128
  %673 = vxpose.xlu0.b32.cont [10/16] 0.0, 128
  %674 = vxpose.xlu0.b32.cont [11/16] 0.0, 128
  %675 = vxpose.xlu0.b32.cont [12/16] 0.0, 128
  %676 = vxpose.xlu0.b32.cont [13/16] 0.0, 128
  %677 = vxpose.xlu0.b32.cont [14/16] 0.0, 128
  %678 = vxpose.xlu0.b32.cont [15/16] 0.0, 128
  %679 = vxpose.xlu0.b32.end [16/16] 0.0, 128
  %v680 = vpop.trf.xlu0
  %v681 = vpop.trf.xlu0
  %v682 = vpop.trf.xlu0
  %v683 = vpop.trf.xlu0
  %v684 = vpop.trf.xlu0
  %v685 = vpop.trf.xlu0
  %v686 = vpop.trf.xlu0
  %v687 = vpop.trf.xlu0
  %v688 = vpop.trf.xlu0
  %v689 = vpop.trf.xlu0
  %v690 = vpop.trf.xlu0
  %v691 = vpop.trf.xlu0
  %v692 = vpop.trf.xlu0
  %v693 = vpop.trf.xlu0
  %v694 = vpop.trf.xlu0
  %v695 = vpop.trf.xlu0
  %v697 = vsel %vm424, %v680, 0
  %v700 = vsel %vm424, %v681, 0
  %702 = vmatprep.subr.mxu0 0.0
  %703 = vmatpush1.msra.mxu0 0.0
  %704 = vmatprep.subr.mxu0 0.0
  %705 = vmatpush1.msra.mxu0 0.0
  %706 = vmatprep.subr.mxu0 0.0
  %707 = vmatpush1.msra.mxu0 0.0
  %708 = vmatprep.subr.mxu0 0.0
  %709 = vmatpush1.msra.mxu0 0.0
  %710 = vmatprep.subr.mxu0 0.0
  %711 = vmatpush1.msra.mxu0 0.0
  %712 = vmatprep.subr.mxu0 0.0
  %713 = vmatpush1.msra.mxu0 0.0
  %714 = vmatprep.subr.mxu0 0.0
  %715 = vmatpush1.msra.mxu0 0.0
  %716 = vmatprep.subr.mxu0 0.0
  %717 = vmatpush1.msra.mxu0 0.0
  %718 = vmatprep.subr.mxu0 0.0
  %719 = vmatpush1.msra.mxu0 0.0
  %720 = vmatprep.subr.mxu0 0.0
  %721 = vmatpush1.msra.mxu0 0.0
  %722 = vmatprep.subr.mxu0 0.0
  %723 = vmatpush1.msra.mxu0 %v645
  %724 = vmatprep.subr.mxu0 0.0
  %725 = vmatpush1.msra.mxu0 %v644
  %726 = vmatprep.subr.mxu0 0.0
  %727 = vmatpush1.msra.mxu0 %v623
  %728 = vmatprep.subr.mxu0 0.0
  %729 = vmatpush1.msra.mxu0 %v622
  %730 = vmatprep.subr.mxu0 0.0
  %731 = vmatpush1.msra.mxu0 %v643
  %732 = vmatprep.subr.mxu0 0.0
  %733 = vmatpush1.msra.mxu0 %v642
  %734 = vmatprep.subr.mxu0 0.0
  %735 = vmatpush2.msra.mxu0 0.0
  %736 = vmatprep.subr.mxu0 0.0
  %737 = vmatpush2.msra.mxu0 0.0
  %738 = vmatprep.subr.mxu0 0.0
  %739 = vmatpush2.msra.mxu0 0.0
  %740 = vmatprep.subr.mxu0 0.0
  %741 = vmatpush2.msra.mxu0 0.0
  %742 = vmatprep.subr.mxu0 0.0
  %743 = vmatpush2.msra.mxu0 0.0
  %744 = vmatprep.subr.mxu0 0.0
  %745 = vmatpush2.msra.mxu0 0.0
  %746 = vmatprep.subr.mxu0 0.0
  %747 = vmatpush2.msra.mxu0 0.0
  %748 = vmatprep.subr.mxu0 0.0
  %749 = vmatpush2.msra.mxu0 0.0
  %750 = vmatprep.subr.mxu0 0.0
  %751 = vmatpush2.msra.mxu0 0.0
  %752 = vmatprep.subr.mxu0 0.0
  %753 = vmatpush2.msra.mxu0 0.0
  %754 = vmatprep.subr.mxu0 0.0
  %755 = vmatpush2.msra.mxu0 0.0
  %756 = vmatprep.subr.mxu0 0.0
  %757 = vmatpush2.msra.mxu0 0.0
  %758 = vmatprep.subr.mxu0 0.0
  %759 = vmatpush2.msra.mxu0 0.0
  %760 = vmatprep.subr.mxu0 0.0
  %761 = vmatpush2.msra.mxu0 0.0
  %762 = vmatprep.subr.mxu0 0.0
  %763 = vmatpush2.msra.mxu0 0.0
  %764 = vmatprep.subr.mxu0 0.0
  %765 = vmatpush2.msra.mxu0 0.0
  %766 = vmatprep.mubr.f32.mxu0 0.0
  %767 = vmatmul.mubr.f32.gmra.mxu0 %v697
  %v768 = vpop.f32.mrf.mxu0
  %v769 = vadd.f32 %v657, %v768
  %v770 = vpop.f32.mrf.mxu0
  %771 = vmatprep.mubr.f32.mxu0 0.0
  %772 = vmatmul.mubr.f32.gmra.mxu0 %v700
  %v773 = vpop.f32.mrf.mxu0
  %v774 = vadd.f32 %v662, %v773
  %v775 = vpop.f32.mrf.mxu0
  %776 = vdwg.mxu0
  %v777 = vtanh.pop %v769
  %v778 = vtanh.pop %v774
  %v779 = vld [vmem:[%s0] sm:$0xff]
  %v780 = vld [vmem:[%s0 + $0x8] sm:$0xff]
  %v781 = vld [vmem:[%s0 + $0x10] sm:$0xff]
  %v782 = vld [vmem:[%s0 + $0x18] sm:$0xff]
  %v783 = vld [vmem:[%s0 + $0x20] sm:$0xff]
  %s784 = scalar_lea.vmem %s0, 40
  %v785 = vld [vmem:[%s784] sm:$0xff]
  %v786 = vld [vmem:[%s784 + $0x8] sm:$0xff]
  %v787 = vld [vmem:[%s784 + $0x10] sm:$0xff]
  %v788 = vld [vmem:[%s784 + $0x18] sm:$0xff]
  %v789 = vld [vmem:[%s784 + $0x20] sm:$0xff]
  %802 = vrot.lane.b32.xlu0 %v779, 1
  %v803 = vpop.permute.xlu0 %802
  %804 = vrot.lane.b32.xlu0 %v780, 1
  %v805 = vpop.permute.xlu0 %804
  %806 = vrot.lane.b32.xlu0 %v781, 1
  %v807 = vpop.permute.xlu0 %806
  %808 = vrot.lane.b32.xlu0 %v782, 1
  %v809 = vpop.permute.xlu0 %808
  %810 = vrot.lane.b32.xlu0 %v783, 1
  %v811 = vpop.permute.xlu0 %810
  %812 = vrot.lane.b32.xlu0 %v785, 1
  %v813 = vpop.permute.xlu0 %812
  %814 = vrot.lane.b32.xlu0 %v786, 1
  %v815 = vpop.permute.xlu0 %814
  %816 = vrot.lane.b32.xlu0 %v787, 1
  %v817 = vpop.permute.xlu0 %816
  %818 = vrot.lane.b32.xlu0 %v788, 1
  %v819 = vpop.permute.xlu0 %818
  %820 = vrot.lane.b32.xlu0 %v789, 1
  %v821 = vpop.permute.xlu0 %820
  %822 = vrot.lane.b32.xlu0 %v777, 1
  %v823 = vpop.permute.xlu0 %822
  %824 = vrot.lane.b32.xlu0 %v778, 1
  %v825 = vpop.permute.xlu0 %824
  %v838 = vsel %vm80, %v779, %v803
  %v839 = vsel %vm80, %v780, %v805
  %v840 = vsel %vm80, %v781, %v807
  %v841 = vsel %vm80, %v782, %v809
  %v842 = vsel %vm80, %v783, %v811
  %v843 = vsel %vm80, %v785, %v813
  %v844 = vsel %vm80, %v786, %v815
  %v845 = vsel %vm80, %v787, %v817
  %v846 = vsel %vm80, %v788, %v819
  %v847 = vsel %vm80, %v789, %v821
  %v848 = vsel %vm80, %v777, %v823
  %v849 = vsel %vm80, %v778, %v825
  %850 = vrot.lane.b32.xlu0 %v779, 127
  %v851 = vpop.permute.xlu0 %850
  %852 = vrot.lane.b32.xlu0 %v780, 127
  %v853 = vpop.permute.xlu0 %852
  %854 = vrot.lane.b32.xlu0 %v781, 127
  %v855 = vpop.permute.xlu0 %854
  %856 = vrot.lane.b32.xlu0 %v782, 127
  %v857 = vpop.permute.xlu0 %856
  %858 = vrot.lane.b32.xlu0 %v783, 127
  %v859 = vpop.permute.xlu0 %858
  %860 = vrot.lane.b32.xlu0 %v785, 127
  %v861 = vpop.permute.xlu0 %860
  %862 = vrot.lane.b32.xlu0 %v786, 127
  %v863 = vpop.permute.xlu0 %862
  %864 = vrot.lane.b32.xlu0 %v787, 127
  %v865 = vpop.permute.xlu0 %864
  %866 = vrot.lane.b32.xlu0 %v788, 127
  %v867 = vpop.permute.xlu0 %866
  %868 = vrot.lane.b32.xlu0 %v789, 127
  %v869 = vpop.permute.xlu0 %868
  %870 = vrot.lane.b32.xlu0 %v777, 127
  %v871 = vpop.permute.xlu0 %870
  %872 = vrot.lane.b32.xlu0 %v778, 127
  %v873 = vpop.permute.xlu0 %872
  %v886 = vsel %vm85, %v851, %v779
  %v887 = vsel %vm85, %v853, %v780
  %v888 = vsel %vm85, %v855, %v781
  %v889 = vsel %vm85, %v857, %v782
  %v890 = vsel %vm85, %v859, %v783
  %v891 = vsel %vm85, %v861, %v785
  %v892 = vsel %vm85, %v863, %v786
  %v893 = vsel %vm85, %v865, %v787
  %v894 = vsel %vm85, %v867, %v788
  %v895 = vsel %vm85, %v869, %v789
  %v896 = vsel %vm85, %v871, %v777
  %v897 = vsel %vm85, %v873, %v778
  %v898 = vsel %vm88, %v779, %v838
  %v899 = vsel %vm88, %v780, %v839
  %v900 = vsel %vm88, %v781, %v840
  %v901 = vsel %vm88, %v782, %v841
  %v902 = vsel %vm88, %v783, %v842
  %v903 = vsel %vm88, %v785, %v843
  %v904 = vsel %vm88, %v786, %v844
  %v905 = vsel %vm88, %v787, %v845
  %v906 = vsel %vm88, %v788, %v846
  %v907 = vsel %vm88, %v789, %v847
  %v908 = vsel %vm88, %v777, %v848
  %v909 = vsel %vm88, %v778, %v849
  %v910 = vsel %vm91, %v779, %v886
  %v911 = vsel %vm91, %v780, %v887
  %v912 = vsel %vm91, %v781, %v888
  %v913 = vsel %vm91, %v782, %v889
  %v914 = vsel %vm91, %v783, %v890
  %v915 = vsel %vm91, %v785, %v891
  %v916 = vsel %vm91, %v786, %v892
  %v917 = vsel %vm91, %v787, %v893
  %v918 = vsel %vm91, %v788, %v894
  %v919 = vsel %vm91, %v789, %v895
  %v920 = vsel %vm91, %v777, %v896
  %v921 = vsel %vm91, %v778, %v897
  %v922 = vld [vmem:[%s12] sm:$0xff]
  %v923 = vld [vmem:[%s12 + $0x8] sm:$0xff]
  %v924 = vld [vmem:[%s12 + $0x10] sm:$0xff]
  %v925 = vld [vmem:[%s12 + $0x18] sm:$0xff]
  %v926 = vld [vmem:[%s12 + $0x20] sm:$0xff]
  %v927 = vld [vmem:[%s12 + $0x28] sm:$0xff]
  %v928 = vld [vmem:[%s12 + $0x30] sm:$0xff]
  %v929 = vld [vmem:[%s12 + $0x38] sm:$0xff]
  %v930 = vld [vmem:[%s12 + $0x40] sm:$0xff]
  %v931 = vld [vmem:[%s12 + $0x48] sm:$0xff]
  %v932 = vld [vmem:[%s12 + $0x50] sm:$0xff]
  %v933 = vld [vmem:[%s12 + $0x58] sm:$0xff]
  %v934 = vld [vmem:[%s12 + $0x60] sm:$0xff]
  %v935 = vld [vmem:[%s12 + $0x68] sm:$0xff]
  %v936 = vld [vmem:[%s12 + $0x70] sm:$0xff]
  %v937 = vld [vmem:[%s12 + $0x78] sm:$0xff]
  %v938 = vld [vmem:[%s12 + $0x80] sm:$0xff]
  %v939 = vld [vmem:[%s12 + $0x88] sm:$0xff]
  %v940 = vld [vmem:[%s12 + $0x90] sm:$0xff]
  %v941 = vld [vmem:[%s12 + $0x98] sm:$0xff]
  %v942 = vld [vmem:[%s12 + $0xa0] sm:$0xff]
  %v943 = vld [vmem:[%s12 + $0xa8] sm:$0xff]
  %v944 = vld [vmem:[%s12 + $0xb0] sm:$0xff]
  %v945 = vld [vmem:[%s12 + $0xb8] sm:$0xff]
  %v946 = vld [vmem:[%s12 + $0xc0] sm:$0xff]
  %v947 = vld [vmem:[%s12 + $0xc8] sm:$0xff]
  %v948 = vld [vmem:[%s12 + $0xd0] sm:$0xff]
  %v949 = vld [vmem:[%s12 + $0xd8] sm:$0xff]
  %v950 = vld [vmem:[%s12 + $0xe0] sm:$0xff]
  %v951 = vld [vmem:[%s12 + $0xe8] sm:$0xff]
  %v952 = vld [vmem:[%s12 + $0xf0] sm:$0xff]
  %v953 = vld [vmem:[%s12 + $0xf8] sm:$0xff]
  %v954 = vld [vmem:[%s12 + $0x100] sm:$0xff]
  %v955 = vld [vmem:[%s12 + $0x108] sm:$0xff]
  %v956 = vld [vmem:[%s12 + $0x110] sm:$0xff]
  %v957 = vld [vmem:[%s12 + $0x118] sm:$0xff]
  %v958 = vld [vmem:[%s13] sm:$0xff]
  %v959 = vld [vmem:[%s13 + $0x8] sm:$0xff]
  %961 = vset.pattern.permute.xlu0 0
  %962 = vperm.xlu0 %961, %v958
  %v963 = vpop.permute.xlu0 %962
  %966 = vset.pattern.permute.xlu0 0
  %967 = vperm.xlu0 %966, %v959
  %v968 = vpop.permute.xlu0 %967
  %970 = vxpose.xlu0.b32.start [1/16] %v922, 128
  %971 = vxpose.xlu0.b32.cont [2/16] %v923, 128
  %972 = vxpose.xlu0.b32.cont [3/16] %v924, 128
  %973 = vxpose.xlu0.b32.cont [4/16] %v925, 128
  %974 = vxpose.xlu0.b32.cont [5/16] %v926, 128
  %975 = vxpose.xlu0.b32.cont [6/16] %v927, 128
  %976 = vxpose.xlu0.b32.cont [7/16] %v928, 128
  %977 = vxpose.xlu0.b32.cont [8/16] %v929, 128
  %978 = vxpose.xlu0.b32.cont [9/16] %v930, 128
  %979 = vxpose.xlu0.b32.cont [10/16] %v931, 128
  %980 = vxpose.xlu0.b32.cont [11/16] %v932, 128
  %981 = vxpose.xlu0.b32.cont [12/16] %v933, 128
  %982 = vxpose.xlu0.b32.cont [13/16] %v934, 128
  %983 = vxpose.xlu0.b32.cont [14/16] %v935, 128
  %984 = vxpose.xlu0.b32.cont [15/16] %v936, 128
  %985 = vxpose.xlu0.b32.end [16/16] %v937, 128
  %v986 = vpop.trf.xlu0
  %v987 = vpop.trf.xlu0
  %v988 = vpop.trf.xlu0
  %v989 = vpop.trf.xlu0
  %v990 = vpop.trf.xlu0
  %v991 = vpop.trf.xlu0
  %v992 = vpop.trf.xlu0
  %v993 = vpop.trf.xlu0
  %v994 = vpop.trf.xlu0
  %v995 = vpop.trf.xlu0
  %v996 = vpop.trf.xlu0
  %v997 = vpop.trf.xlu0
  %v998 = vpop.trf.xlu0
  %v999 = vpop.trf.xlu0
  %v1000 = vpop.trf.xlu0
  %v1001 = vpop.trf.xlu0
  %1002 = vxpose.xlu0.b32.start [1/16] %v938, 128
  %1003 = vxpose.xlu0.b32.cont [2/16] %v939, 128
  %1004 = vxpose.xlu0.b32.cont [3/16] %v940, 128
  %1005 = vxpose.xlu0.b32.cont [4/16] %v941, 128
  %1006 = vxpose.xlu0.b32.cont [5/16] %v942, 128
  %1007 = vxpose.xlu0.b32.cont [6/16] %v943, 128
  %1008 = vxpose.xlu0.b32.cont [7/16] %v944, 128
  %1009 = vxpose.xlu0.b32.cont [8/16] %v945, 128
  %1010 = vxpose.xlu0.b32.cont [9/16] %v946, 128
  %1011 = vxpose.xlu0.b32.cont [10/16] %v947, 128
  %1012 = vxpose.xlu0.b32.cont [11/16] %v948, 128
  %1013 = vxpose.xlu0.b32.cont [12/16] %v949, 128
  %1014 = vxpose.xlu0.b32.cont [13/16] %v950, 128
  %1015 = vxpose.xlu0.b32.cont [14/16] %v951, 128
  %1016 = vxpose.xlu0.b32.cont [15/16] %v952, 128
  %1017 = vxpose.xlu0.b32.end [16/16] %v953, 128
  %v1018 = vpop.trf.xlu0
  %v1019 = vpop.trf.xlu0
  %v1020 = vpop.trf.xlu0
  %v1021 = vpop.trf.xlu0
  %v1022 = vpop.trf.xlu0
  %v1023 = vpop.trf.xlu0
  %v1024 = vpop.trf.xlu0
  %v1025 = vpop.trf.xlu0
  %v1026 = vpop.trf.xlu0
  %v1027 = vpop.trf.xlu0
  %v1028 = vpop.trf.xlu0
  %v1029 = vpop.trf.xlu0
  %v1030 = vpop.trf.xlu0
  %v1031 = vpop.trf.xlu0
  %v1032 = vpop.trf.xlu0
  %v1033 = vpop.trf.xlu0
  %1034 = vxpose.xlu0.b32.start [1/16] %v954, 128
  %1035 = vxpose.xlu0.b32.cont [2/16] %v955, 128
  %1036 = vxpose.xlu0.b32.cont [3/16] %v956, 128
  %1037 = vxpose.xlu0.b32.cont [4/16] %v957, 128
  %1038 = vxpose.xlu0.b32.cont [5/16] 0.0, 128
  %1039 = vxpose.xlu0.b32.cont [6/16] 0.0, 128
  %1040 = vxpose.xlu0.b32.cont [7/16] 0.0, 128
  %1041 = vxpose.xlu0.b32.cont [8/16] 0.0, 128
  %1042 = vxpose.xlu0.b32.cont [9/16] 0.0, 128
  %1043 = vxpose.xlu0.b32.cont [10/16] 0.0, 128
  %1044 = vxpose.xlu0.b32.cont [11/16] 0.0, 128
  %1045 = vxpose.xlu0.b32.cont [12/16] 0.0, 128
  %1046 = vxpose.xlu0.b32.cont [13/16] 0.0, 128
  %1047 = vxpose.xlu0.b32.cont [14/16] 0.0, 128
  %1048 = vxpose.xlu0.b32.cont [15/16] 0.0, 128
  %1049 = vxpose.xlu0.b32.end [16/16] 0.0, 128
  %v1050 = vpop.trf.xlu0
  %v1051 = vpop.trf.xlu0
  %v1052 = vpop.trf.xlu0
  %v1053 = vpop.trf.xlu0
  %v1054 = vpop.trf.xlu0
  %v1055 = vpop.trf.xlu0
  %v1056 = vpop.trf.xlu0
  %v1057 = vpop.trf.xlu0
  %v1058 = vpop.trf.xlu0
  %v1059 = vpop.trf.xlu0
  %v1060 = vpop.trf.xlu0
  %v1061 = vpop.trf.xlu0
  %v1062 = vpop.trf.xlu0
  %v1063 = vpop.trf.xlu0
  %v1064 = vpop.trf.xlu0
  %v1065 = vpop.trf.xlu0
  %vm1066 = vcmask 261120
  %v1068 = vsel %vm1066, %v1050, 0
  %v1071 = vsel %vm1066, %v1051, 0
  %1073 = vmatprep.subr.mxu0 0.0
  %1074 = vmatpush1.msra.mxu0 %v782
  %1075 = vmatprep.subr.mxu0 0.0
  %1076 = vmatpush1.msra.mxu0 %v781
  %1077 = vmatprep.subr.mxu0 0.0
  %1078 = vmatpush1.msra.mxu0 %v780
  %1079 = vmatprep.subr.mxu0 0.0
  %1080 = vmatpush1.msra.mxu0 %v779
  %1081 = vmatprep.subr.mxu0 0.0
  %1082 = vmatpush1.msra.mxu0 %v909
  %1083 = vmatprep.subr.mxu0 0.0
  %1084 = vmatpush1.msra.mxu0 %v908
  %1085 = vmatprep.subr.mxu0 0.0
  %1086 = vmatpush1.msra.mxu0 %v907
  %1087 = vmatprep.subr.mxu0 0.0
  %1088 = vmatpush1.msra.mxu0 %v906
  %1089 = vmatprep.subr.mxu0 0.0
  %1090 = vmatpush1.msra.mxu0 %v905
  %1091 = vmatprep.subr.mxu0 0.0
  %1092 = vmatpush1.msra.mxu0 %v904
  %1093 = vmatprep.subr.mxu0 0.0
  %1094 = vmatpush1.msra.mxu0 %v903
  %1095 = vmatprep.subr.mxu0 0.0
  %1096 = vmatpush1.msra.mxu0 %v902
  %1097 = vmatprep.subr.mxu0 0.0
  %1098 = vmatpush1.msra.mxu0 %v901
  %1099 = vmatprep.subr.mxu0 0.0
  %1100 = vmatpush1.msra.mxu0 %v900
  %1101 = vmatprep.subr.mxu0 0.0
  %1102 = vmatpush1.msra.mxu0 %v899
  %1103 = vmatprep.subr.mxu0 0.0
  %1104 = vmatpush1.msra.mxu0 %v898
  %1105 = vmatprep.subr.mxu0 0.0
  %1106 = vmatpush2.msra.mxu0 %v917
  %1107 = vmatprep.subr.mxu0 0.0
  %1108 = vmatpush2.msra.mxu0 %v916
  %1109 = vmatprep.subr.mxu0 0.0
  %1110 = vmatpush2.msra.mxu0 %v915
  %1111 = vmatprep.subr.mxu0 0.0
  %1112 = vmatpush2.msra.mxu0 %v914
  %1113 = vmatprep.subr.mxu0 0.0
  %1114 = vmatpush2.msra.mxu0 %v913
  %1115 = vmatprep.subr.mxu0 0.0
  %1116 = vmatpush2.msra.mxu0 %v912
  %1117 = vmatprep.subr.mxu0 0.0
  %1118 = vmatpush2.msra.mxu0 %v911
  %1119 = vmatprep.subr.mxu0 0.0
  %1120 = vmatpush2.msra.mxu0 %v910
  %1121 = vmatprep.subr.mxu0 0.0
  %1122 = vmatpush2.msra.mxu0 %v778
  %1123 = vmatprep.subr.mxu0 0.0
  %1124 = vmatpush2.msra.mxu0 %v777
  %1125 = vmatprep.subr.mxu0 0.0
  %1126 = vmatpush2.msra.mxu0 %v789
  %1127 = vmatprep.subr.mxu0 0.0
  %1128 = vmatpush2.msra.mxu0 %v788
  %1129 = vmatprep.subr.mxu0 0.0
  %1130 = vmatpush2.msra.mxu0 %v787
  %1131 = vmatprep.subr.mxu0 0.0
  %1132 = vmatpush2.msra.mxu0 %v786
  %1133 = vmatprep.subr.mxu0 0.0
  %1134 = vmatpush2.msra.mxu0 %v785
  %1135 = vmatprep.subr.mxu0 0.0
  %1136 = vmatpush2.msra.mxu0 %v783
  %1137 = vmatprep.mubr.f32.mxu0 %v1018
  %1138 = vmatmul.mubr.f32.gmra.mxu0 %v986
  %v1139 = vpop.f32.mrf.mxu0
  %v1140 = vadd.f32 %v963, %v1139
  %v1141 = vpop.f32.mrf.mxu0
  %1142 = vmatprep.mubr.f32.mxu0 %v1019
  %1143 = vmatmul.mubr.f32.gmra.mxu0 %v987
  %v1144 = vpop.f32.mrf.mxu0
  %v1145 = vadd.f32 %v968, %v1144
  %v1146 = vpop.f32.mrf.mxu0
  %1147 = vdwg.mxu0
  %1148 = vmatprep.subr.mxu0 0.0
  %1149 = vmatpush1.msra.mxu0 0.0
  %1150 = vmatprep.subr.mxu0 0.0
  %1151 = vmatpush1.msra.mxu0 0.0
  %1152 = vmatprep.subr.mxu0 0.0
  %1153 = vmatpush1.msra.mxu0 0.0
  %1154 = vmatprep.subr.mxu0 0.0
  %1155 = vmatpush1.msra.mxu0 0.0
  %1156 = vmatprep.subr.mxu0 0.0
  %1157 = vmatpush1.msra.mxu0 0.0
  %1158 = vmatprep.subr.mxu0 0.0
  %1159 = vmatpush1.msra.mxu0 0.0
  %1160 = vmatprep.subr.mxu0 0.0
  %1161 = vmatpush1.msra.mxu0 0.0
  %1162 = vmatprep.subr.mxu0 0.0
  %1163 = vmatpush1.msra.mxu0 0.0
  %1164 = vmatprep.subr.mxu0 0.0
  %1165 = vmatpush1.msra.mxu0 0.0
  %1166 = vmatprep.subr.mxu0 0.0
  %1167 = vmatpush1.msra.mxu0 0.0
  %1168 = vmatprep.subr.mxu0 0.0
  %1169 = vmatpush1.msra.mxu0 0.0
  %1170 = vmatprep.subr.mxu0 0.0
  %1171 = vmatpush1.msra.mxu0 0.0
  %1172 = vmatprep.subr.mxu0 0.0
  %1173 = vmatpush1.msra.mxu0 %v921
  %1174 = vmatprep.subr.mxu0 0.0
  %1175 = vmatpush1.msra.mxu0 %v920
  %1176 = vmatprep.subr.mxu0 0.0
  %1177 = vmatpush1.msra.mxu0 %v919
  %1178 = vmatprep.subr.mxu0 0.0
  %1179 = vmatpush1.msra.mxu0 %v918
  %1180 = vmatprep.subr.mxu0 0.0
  %1181 = vmatpush2.msra.mxu0 0.0
  %1182 = vmatprep.subr.mxu0 0.0
  %1183 = vmatpush2.msra.mxu0 0.0
  %1184 = vmatprep.subr.mxu0 0.0
  %1185 = vmatpush2.msra.mxu0 0.0
  %1186 = vmatprep.subr.mxu0 0.0
  %1187 = vmatpush2.msra.mxu0 0.0
  %1188 = vmatprep.subr.mxu0 0.0
  %1189 = vmatpush2.msra.mxu0 0.0
  %1190 = vmatprep.subr.mxu0 0.0
  %1191 = vmatpush2.msra.mxu0 0.0
  %1192 = vmatprep.subr.mxu0 0.0
  %1193 = vmatpush2.msra.mxu0 0.0
  %1194 = vmatprep.subr.mxu0 0.0
  %1195 = vmatpush2.msra.mxu0 0.0
  %1196 = vmatprep.subr.mxu0 0.0
  %1197 = vmatpush2.msra.mxu0 0.0
  %1198 = vmatprep.subr.mxu0 0.0
  %1199 = vmatpush2.msra.mxu0 0.0
  %1200 = vmatprep.subr.mxu0 0.0
  %1201 = vmatpush2.msra.mxu0 0.0
  %1202 = vmatprep.subr.mxu0 0.0
  %1203 = vmatpush2.msra.mxu0 0.0
  %1204 = vmatprep.subr.mxu0 0.0
  %1205 = vmatpush2.msra.mxu0 0.0
  %1206 = vmatprep.subr.mxu0 0.0
  %1207 = vmatpush2.msra.mxu0 0.0
  %1208 = vmatprep.subr.mxu0 0.0
  %1209 = vmatpush2.msra.mxu0 0.0
  %1210 = vmatprep.subr.mxu0 0.0
  %1211 = vmatpush2.msra.mxu0 0.0
  %1212 = vmatprep.mubr.f32.mxu0 0.0
  %1213 = vmatmul.mubr.f32.gmra.mxu0 %v1068
  %v1214 = vpop.f32.mrf.mxu0
  %v1215 = vadd.f32 %v1140, %v1214
  %v1216 = vpop.f32.mrf.mxu0
  %1217 = vmatprep.mubr.f32.mxu0 0.0
  %1218 = vmatmul.mubr.f32.gmra.mxu0 %v1071
  %v1219 = vpop.f32.mrf.mxu0
  %v1220 = vadd.f32 %v1145, %v1219
  %v1221 = vpop.f32.mrf.mxu0
  %1222 = vdwg.mxu0
  %v1223 = vld [vmem:[%s14] sm:$0xff]
  %v1224 = vld [vmem:[%s14 + $0x8] sm:$0xff]
  %v1225 = vsel %vm235, %v1215, 0.0
  %v1226 = vsel %vm235, %v1220, 0.0
  %v1227 = vadd.f32 %v1225, %v1226
  %1228 = vadd.xlane.f32.xlu0 %v1227
  %v1229 = vpop.xlane.xlu0 %1228
  %v1230 = vrot.slane %v1229, 4
  %v1231 = vadd.f32 %v1229, %v1230
  %v1232 = vrot.slane %v1231, 2
  %v1233 = vadd.f32 %v1231, %v1232
  %v1234 = vrot.slane %v1233, 1
  %v1235 = vadd.f32 %v1233, %v1234
  %s1236 = vtos %v1235
  %v1237 = vmul.f32 %v1215, %v1215
  %v1238 = vmul.f32 %v1220, %v1220
  %v1239 = vsel %vm235, %v1237, 0.0
  %v1240 = vsel %vm235, %v1238, 0.0
  %v1241 = vadd.f32 %v1239, %v1240
  %1242 = vadd.xlane.f32.xlu0 %v1241
  %v1243 = vpop.xlane.xlu0 %1242
  %v1244 = vrot.slane %v1243, 4
  %v1245 = vadd.f32 %v1243, %v1244
  %v1246 = vrot.slane %v1245, 2
  %v1247 = vadd.f32 %v1245, %v1246
  %v1248 = vrot.slane %v1247, 1
  %v1249 = vadd.f32 %v1247, %v1248
  %s1250 = vtos %v1249
  %v1251 = vrcp.pop 128.0
  %s1252 = vtos %v1251
  %s1253 = smul.f32 %s1236, %s1252
  %v1254 = vrcp.pop 128.0
  %s1255 = vtos %v1254
  %s1256 = smul.f32 %s1250, %s1255
  %s1257 = smul.f32 %s1253, %s1253
  %s1258 = ssub.f32 %s1256, %s1257
  %v1259 = vstv %s1253
  %s1260 = sadd.f32 %s1258, 1e-05
  %v1261 = vstv %s1260
  %v1262 = vrsqrt.pop %v1261
  %s1263 = vtos %v1262
  %v1264 = vstv %s1263
  %1267 = vrot.lane.b32.xlu0 %v1215, 120
  %v1268 = vpop.permute.xlu0 %1267
  %1269 = vrot.lane.b32.xlu0 %v1220, 120
  %v1270 = vpop.permute.xlu0 %1269
  %v1273 = vsel %vm235, %v1268, 0.0
  %v1274 = vsel %vm235, %v1270, 0.0
  %v1275 = vadd.f32 %v1273, %v1274
  %1276 = vadd.xlane.f32.xlu0 %v1275
  %v1277 = vpop.xlane.xlu0 %1276
  %v1278 = vrot.slane %v1277, 4
  %v1279 = vadd.f32 %v1277, %v1278
  %v1280 = vrot.slane %v1279, 2
  %v1281 = vadd.f32 %v1279, %v1280
  %v1282 = vrot.slane %v1281, 1
  %v1283 = vadd.f32 %v1281, %v1282
  %s1284 = vtos %v1283
  %1287 = vrot.lane.b32.xlu0 %v1237, 120
  %v1288 = vpop.permute.xlu0 %1287
  %1289 = vrot.lane.b32.xlu0 %v1238, 120
  %v1290 = vpop.permute.xlu0 %1289
  %v1293 = vsel %vm235, %v1288, 0.0
  %v1294 = vsel %vm235, %v1290, 0.0
  %v1295 = vadd.f32 %v1293, %v1294
  %1296 = vadd.xlane.f32.xlu0 %v1295
  %v1297 = vpop.xlane.xlu0 %1296
  %v1298 = vrot.slane %v1297, 4
  %v1299 = vadd.f32 %v1297, %v1298
  %v1300 = vrot.slane %v1299, 2
  %v1301 = vadd.f32 %v1299, %v1300
  %v1302 = vrot.slane %v1301, 1
  %v1303 = vadd.f32 %v1301, %v1302
  %s1304 = vtos %v1303
  %v1305 = vrcp.pop 128.0
  %s1306 = vtos %v1305
  %s1307 = smul.f32 %s1284, %s1306
  %v1308 = vrcp.pop 128.0
  %s1309 = vtos %v1308
  %s1310 = smul.f32 %s1304, %s1309
  %s1311 = smul.f32 %s1307, %s1307
  %s1312 = ssub.f32 %s1310, %s1311
  %v1313 = vstv %s1307
  %s1314 = sadd.f32 %s1312, 1e-05
  %v1315 = vstv %s1314
  %v1316 = vrsqrt.pop %v1315
  %s1317 = vtos %v1316
  %v1318 = vstv %s1317
  %v1319 = vsel %vm235, %v1259, %v1313
  %v1320 = vsel %vm235, %v1264, %v1318
  %v1321 = vlaneseq
  %v1322 = vshrl.u32 %v1321, 7
  %v1323 = vsub.s32 0, %v1322
  %v1324 = vrot.slane %v1319, %v1323
  %v1325 = vsub.f32 %v1215, %v1324
  %v1326 = vsub.f32 %v1220, %v1324
  %v1327 = vlaneseq
  %v1328 = vshrl.u32 %v1327, 7
  %v1329 = vsub.s32 0, %v1328
  %v1330 = vrot.slane %v1320, %v1329
  %v1331 = vmul.f32 %v1325, %v1330
  %v1332 = vmul.f32 %v1326, %v1330
  %v1333 = vmul.f32 %v1331, %v1223
  %v1334 = vmul.f32 %v1332, %v1224
  %v1335 = vld [vmem:[%s15] sm:$0xff]
  %v1336 = vld [vmem:[%s15 + $0x8] sm:$0xff]
  %v1337 = vadd.f32 %v1333, %v1335
  %v1338 = vadd.f32 %v1334, %v1336
  %v1339 = vtanh.pop %v1337
  %v1340 = vtanh.pop %v1338
  %1343 = vrot.lane.b32.xlu0 %v1339, 1
  %v1344 = vpop.permute.xlu0 %1343
  %1345 = vrot.lane.b32.xlu0 %v1340, 1
  %v1346 = vpop.permute.xlu0 %1345
  %v1349 = vsel %vm80, %v1339, %v1344
  %v1350 = vsel %vm80, %v1340, %v1346
  %1351 = vrot.lane.b32.xlu0 %v1339, 127
  %v1352 = vpop.permute.xlu0 %1351
  %1353 = vrot.lane.b32.xlu0 %v1340, 127
  %v1354 = vpop.permute.xlu0 %1353
  %v1357 = vsel %vm85, %v1352, %v1339
  %v1358 = vsel %vm85, %v1354, %v1340
  %v1359 = vsel %vm88, %v1339, %v1349
  %v1360 = vsel %vm88, %v1340, %v1350
  %v1361 = vsel %vm91, %v1339, %v1357
  %v1362 = vsel %vm91, %v1340, %v1358
  %v1363 = vld [vmem:[%s16] sm:$0xff]
  %v1364 = vld [vmem:[%s16 + $0x8] sm:$0xff]
  %v1365 = vld [vmem:[%s16 + $0x10] sm:$0xff]
  %v1366 = vld [vmem:[%s16 + $0x18] sm:$0xff]
  %v1367 = vld [vmem:[%s16 + $0x20] sm:$0xff]
  %v1368 = vld [vmem:[%s16 + $0x28] sm:$0xff]
  %v1369 = vld [vmem:[%s17] sm:$0x3]
  %1371 = vset.pattern.permute.xlu0 0
  %1372 = vperm.xlu0 %1371, %v1369
  %v1373 = vpop.permute.xlu0 %1372
  %1375 = vxpose.xlu0.b32.start [1/16] %v1363, 128
  %1376 = vxpose.xlu0.b32.cont [2/16] %v1364, 128
  %1377 = vxpose.xlu0.b32.cont [3/16] %v1365, 128
  %1378 = vxpose.xlu0.b32.cont [4/16] %v1366, 128
  %1379 = vxpose.xlu0.b32.cont [5/16] %v1367, 128
  %1380 = vxpose.xlu0.b32.cont [6/16] %v1368, 128
  %1381 = vxpose.xlu0.b32.cont [7/16] 0.0, 128
  %1382 = vxpose.xlu0.b32.cont [8/16] 0.0, 128
  %1383 = vxpose.xlu0.b32.cont [9/16] 0.0, 128
  %1384 = vxpose.xlu0.b32.cont [10/16] 0.0, 128
  %1385 = vxpose.xlu0.b32.cont [11/16] 0.0, 128
  %1386 = vxpose.xlu0.b32.cont [12/16] 0.0, 128
  %1387 = vxpose.xlu0.b32.cont [13/16] 0.0, 128
  %1388 = vxpose.xlu0.b32.cont [14/16] 0.0, 128
  %1389 = vxpose.xlu0.b32.cont [15/16] 0.0, 128
  %1390 = vxpose.xlu0.b32.end [16/16] 0.0, 128
  %v1391 = vpop.trf.xlu0
  %v1392 = vpop.trf.xlu0
  %v1393 = vpop.trf.xlu0
  %v1394 = vpop.trf.xlu0
  %v1395 = vpop.trf.xlu0
  %v1396 = vpop.trf.xlu0
  %v1397 = vpop.trf.xlu0
  %v1398 = vpop.trf.xlu0
  %v1399 = vpop.trf.xlu0
  %v1400 = vpop.trf.xlu0
  %v1401 = vpop.trf.xlu0
  %v1402 = vpop.trf.xlu0
  %v1403 = vpop.trf.xlu0
  %v1404 = vpop.trf.xlu0
  %v1405 = vpop.trf.xlu0
  %v1406 = vpop.trf.xlu0
  %v1408 = vsel %vm424, %v1391, 0
  %1410 = vmatprep.subr.mxu0 0.0
  %1411 = vmatpush1.msra.mxu0 0.0
  %1412 = vmatprep.subr.mxu0 0.0
  %1413 = vmatpush1.msra.mxu0 0.0
  %1414 = vmatprep.subr.mxu0 0.0
  %1415 = vmatpush1.msra.mxu0 0.0
  %1416 = vmatprep.subr.mxu0 0.0
  %1417 = vmatpush1.msra.mxu0 0.0
  %1418 = vmatprep.subr.mxu0 0.0
  %1419 = vmatpush1.msra.mxu0 0.0
  %1420 = vmatprep.subr.mxu0 0.0
  %1421 = vmatpush1.msra.mxu0 0.0
  %1422 = vmatprep.subr.mxu0 0.0
  %1423 = vmatpush1.msra.mxu0 0.0
  %1424 = vmatprep.subr.mxu0 0.0
  %1425 = vmatpush1.msra.mxu0 0.0
  %1426 = vmatprep.subr.mxu0 0.0
  %1427 = vmatpush1.msra.mxu0 0.0
  %1428 = vmatprep.subr.mxu0 0.0
  %1429 = vmatpush1.msra.mxu0 0.0
  %1430 = vmatprep.subr.mxu0 0.0
  %1431 = vmatpush1.msra.mxu0 %v1362
  %1432 = vmatprep.subr.mxu0 0.0
  %1433 = vmatpush1.msra.mxu0 %v1361
  %1434 = vmatprep.subr.mxu0 0.0
  %1435 = vmatpush1.msra.mxu0 %v1340
  %1436 = vmatprep.subr.mxu0 0.0
  %1437 = vmatpush1.msra.mxu0 %v1339
  %1438 = vmatprep.subr.mxu0 0.0
  %1439 = vmatpush1.msra.mxu0 %v1360
  %1440 = vmatprep.subr.mxu0 0.0
  %1441 = vmatpush1.msra.mxu0 %v1359
  %1442 = vmatprep.subr.mxu0 0.0
  %1443 = vmatpush2.msra.mxu0 0.0
  %1444 = vmatprep.subr.mxu0 0.0
  %1445 = vmatpush2.msra.mxu0 0.0
  %1446 = vmatprep.subr.mxu0 0.0
  %1447 = vmatpush2.msra.mxu0 0.0
  %1448 = vmatprep.subr.mxu0 0.0
  %1449 = vmatpush2.msra.mxu0 0.0
  %1450 = vmatprep.subr.mxu0 0.0
  %1451 = vmatpush2.msra.mxu0 0.0
  %1452 = vmatprep.subr.mxu0 0.0
  %1453 = vmatpush2.msra.mxu0 0.0
  %1454 = vmatprep.subr.mxu0 0.0
  %1455 = vmatpush2.msra.mxu0 0.0
  %1456 = vmatprep.subr.mxu0 0.0
  %1457 = vmatpush2.msra.mxu0 0.0
  %1458 = vmatprep.subr.mxu0 0.0
  %1459 = vmatpush2.msra.mxu0 0.0
  %1460 = vmatprep.subr.mxu0 0.0
  %1461 = vmatpush2.msra.mxu0 0.0
  %1462 = vmatprep.subr.mxu0 0.0
  %1463 = vmatpush2.msra.mxu0 0.0
  %1464 = vmatprep.subr.mxu0 0.0
  %1465 = vmatpush2.msra.mxu0 0.0
  %1466 = vmatprep.subr.mxu0 0.0
  %1467 = vmatpush2.msra.mxu0 0.0
  %1468 = vmatprep.subr.mxu0 0.0
  %1469 = vmatpush2.msra.mxu0 0.0
  %1470 = vmatprep.subr.mxu0 0.0
  %1471 = vmatpush2.msra.mxu0 0.0
  %1472 = vmatprep.subr.mxu0 0.0
  %1473 = vmatpush2.msra.mxu0 0.0
  %1474 = vmatprep.mubr.f32.mxu0 0.0
  %1475 = vmatmul.mubr.f32.gmra.mxu0 %v1408
  %v1476 = vpop.f32.mrf.mxu0
  %v1477 = vadd.f32 %v1373, %v1476
  %v1478 = vpop.f32.mrf.mxu0
  %1479 = vdwg.mxu0
  %vm1480 = vcmask 123904
  %1481 = vst.msk [vmem:[%s18] sm:$0x3] %vm1480, %v1477
  // Predicated region
  $region74: #{_lambda_.3} parent=0 // pred_check
    _
  $region75: #{_lambda_.3} parent=0 // pred_check_branch
    %1483 = sbr.rel (0) target = $region77
  $region76: #{_lambda_.3} parent=0 // pred_region
    _
  $region77: #{_lambda_.3} parent=0 // pred_fallthru
    _
  // Predicated region
  $region78: #{_lambda_.3} parent=0 // pred_check
    _
  $region79: #{_lambda_.3} parent=0 // pred_check_branch
    %1485 = sbr.rel (0) target = $region81
  $region80: #{_lambda_.3} parent=0 // pred_region
    _
  $region81: #{_lambda_.3} parent=0 // pred_fallthru
    _

</llo_original>
